<compile_context>
chip_gen: v7x
topology: tpu7x:2x2x1
jax: 0.10.0
libtpu: 0.0.40
codegen_flags: <defaults>
</compile_context>

<pallas_src>
import functools

import jax
import jax.numpy as jnp
from jax import lax
from jax.experimental import pallas as pl
from jax.experimental.pallas import tpu as pltpu

LANE = 128
COL0 = 7            # column of the left (kx=0) 3x3 tap; bulk store lands at 8


def _round_up(n, m):
    return ((n + m - 1) // m) * m


def _leaky_relu(x, alpha=0.1):
    return jnp.where(x > 0, x, alpha * x)


def _vmem_capacity_bytes():
    cap = 64 * 1024 * 1024          # conservative fallback (v7x per-core VMEM)
    try:
        info = pltpu.get_tpu_info()
        cap = int(getattr(info, "vmem_capacity_bytes", cap)) or cap
    except Exception:
        pass
    return cap


def _pick_tile_h(H, W, c_in_p, c_m_p, c_out_p, n1, out_bytes, budget, B):
    """Largest tile_h whose per-step working set fits the VMEM budget."""
    weights = 2 * 2 * (c_in_p * n1 + c_m_p * c_m_p + 9 * c_m_p * c_out_p)

    def need(th):
        x_blk = 2 * th * W * c_in_p * 2               # bf16 in, double-buffered
        halo = 2 * 2 * W * c_in_p * 2
        out_blk = 2 * th * W * c_out_p * out_bytes    # double-buffered out
        pad = (th + 2) * (W + 16) * c_m_p * 2         # bf16 halo scratch
        interm = th * W * (n1 + c_m_p + c_out_p) * 4  # live f32 temporaries
        return weights + x_blk + halo + out_blk + pad + interm + (2 << 20)

    th_max = 1
    for cand in range(1, min(H, 256) + 1):
        if need(cand) <= budget:
            th_max = cand
    n_tiles = -(-H // th_max)
    if B * n_tiles < 2 and H >= 2:      # keep both megacore TCs busy
        n_tiles = 2
    return -(-H // n_tiles)


def _resblock_kernel(x_ref, xh_ref, w1s_ref, b1s_ref, w2_ref, b2_ref,
                     w3_ref, b3_ref, o_ref, pad_ref, *,
                     tile_h, W, H, c_in_p, c_m_p, c_out_p,
                     res_bool, fuse_skip, mask_rows):
    f32, bf16 = jnp.float32, jnp.bfloat16
    i = pl.program_id(1)                          # spatial tile index

    def stage12(x2d):
        # conv1 (and, when fused, the 1x1 skip conv) then conv2: plain matmuls.
        r = jnp.dot(x2d, w1s_ref[...], preferred_element_type=f32) + b1s_ref[...]
        if fuse_skip:
            r1, skip = _leaky_relu(r[:, :c_m_p]), r[:, c_m_p:]
        else:
            r1, skip = _leaky_relu(r), None
        r2 = _leaky_relu(jnp.dot(r1.astype(bf16), w2_ref[...],
                                 preferred_element_type=f32) + b2_ref[...])
        return r2, skip

    # Zero only the two tap-boundary columns of the halo scratch; every other
    # cell the taps read is fully overwritten below.  (Per-step on purpose --
    # safe under megacore, no program_id-gated init.)
    zero_col = jnp.zeros((tile_h + 2, 1, c_m_p), bf16)
    pad_ref[:, COL0:COL0 + 1, :] = zero_col
    pad_ref[:, COL0 + W + 1:COL0 + W + 2, :] = zero_col

    # Interior rows: conv1(+skip)/conv2, stored sublane-aligned at column 8
    # into rows 1..tile_h of the scratch.
    x_main = x_ref[0].reshape(tile_h * W, c_in_p)
    r2_main, skip = stage12(x_main)
    r2_3d = r2_main.reshape(tile_h, W, c_m_p)
    if mask_rows:       # H was padded up to a tile multiple: zero padded rows
        row = lax.broadcasted_iota(jnp.int32, (tile_h, 1, 1), 0)
        r2_3d = jnp.where(i * tile_h + row < H, r2_3d, 0.0)
    pad_ref[1:tile_h + 1, COL0 + 1:COL0 + 1 + W, :] = r2_3d.astype(bf16)

    # Halo rows (2 per tile): conv1/conv2, zeroed where they fall outside the
    # image (SAME padding), written to rows 0 and tile_h+1 of the scratch.
    xh = xh_ref[0].reshape(2 * W, c_in_p)
    r2_h, _ = stage12(xh)
    rowh = lax.broadcasted_iota(jnp.int32, (2 * W, 1), 0)
    is_top = rowh < W
    keep = jnp.logical_or(jnp.logical_and(is_top, i > 0),
                          jnp.logical_and(jnp.logical_not(is_top),
                                          (i + 1) * tile_h < H))
    r2_h = jnp.where(keep, r2_h, 0.0).astype(bf16).reshape(2, W, c_m_p)
    pad_ref[0:1, COL0 + 1:COL0 + 1 + W, :] = r2_h[0:1]
    pad_ref[tile_h + 1:tile_h + 2, COL0 + 1:COL0 + 1 + W, :] = r2_h[1:2]

    # conv3: 3x3 SAME as 9 tap-streamed accumulating MXU matmuls -- no im2col
    # patch is materialized, accumulation stays in f32 on-chip.
    def tap(k):
        ky, kx = divmod(k, 3)
        t = pad_ref[ky:ky + tile_h, COL0 + kx:COL0 + kx + W, :]
        return t.reshape(tile_h * W, c_m_p)

    acc = jnp.dot(tap(0), w3_ref[0], preferred_element_type=f32)
    for k in range(1, 9):
        acc = acc + jnp.dot(tap(k), w3_ref[k], preferred_element_type=f32)
    y = _leaky_relu(acc + b3_ref[...])

    if res_bool:
        y = y + (skip if fuse_skip else x_main.astype(f32))

    o_ref[0] = y.reshape(tile_h, W, c_out_p).astype(o_ref.dtype)


def resblock_forward(x_nchw, params, *, res_bool, tile_h=None,
                     out_dtype=jnp.float32):
    """x_nchw: (B, Cin, H, W) float32.  Returns (B, Cout, H, W) in out_dtype."""
    w1, b1, w2, b2, w3, b3, wskip, bskip = params
    B, c_in, H, W = x_nchw.shape
    c_m = w1.shape[1]
    c_out = w3.shape[-1]
    fuse_skip = res_bool and (c_in != c_out)

    bf16, f32 = jnp.bfloat16, jnp.float32
    c_in_p, c_m_p, c_out_p = (_round_up(c, LANE) for c in (c_in, c_m, c_out))
    n1 = c_m_p + c_out_p if fuse_skip else c_m_p

    cap = _vmem_capacity_bytes()
    budget = max(32 << 20, min(int(cap * 0.7), 100 << 20))
    out_bytes = jnp.dtype(out_dtype).itemsize
    if tile_h is None:
        tile_h = _pick_tile_h(H, W, c_in_p, c_m_p, c_out_p, n1, out_bytes,
                              budget, B)
    tile_h = max(1, min(tile_h, H))
    n_tiles = -(-H // tile_h)
    H_pad = n_tiles * tile_h
    mask_rows = H_pad != H

    # ----- layout plumbing (outside the kernel) -----
    # NCHW -> NHWC, cast MXU operands to bf16, zero-pad channels to 128 and H
    # up to a tile multiple.
    # TODO(synk): when ResBlocks are stacked, keep activations in padded-NHWC
    # bf16 end-to-end (out_dtype=bf16) and drop these per-call transposes/pads.
    x = jnp.transpose(x_nchw, (0, 2, 3, 1)).astype(bf16)
    x = jnp.pad(x, ((0, 0), (0, H_pad - H), (0, 0), (0, c_in_p - c_in)))

    # One-row top/bottom halos per spatial tile (zero rows at image borders).
    xpad = jnp.pad(x, ((0, 0), (1, 1), (0, 0), (0, 0)))
    top = xpad[:, 0:H_pad:tile_h]                 # original rows i*tile_h - 1
    bot = xpad[:, tile_h + 1:H_pad + 2:tile_h]    # original rows (i+1)*tile_h
    xh = jnp.stack([top, bot], axis=2).reshape(B * n_tiles, 2, W, c_in_p)

    def pad2(m, r, c):
        return jnp.pad(m, ((0, r - m.shape[0]), (0, c - m.shape[1])))

    if fuse_skip:   # pack conv1 + skip conv along N -> one matmul, one x read
        w1s = jnp.concatenate([pad2(w1, c_in, c_m_p),
                               pad2(wskip, c_in, c_out_p)], axis=1)
        w1s = jnp.pad(w1s, ((0, c_in_p - c_in), (0, 0))).astype(bf16)
        b1s = jnp.concatenate([pad2(b1, 1, c_m_p),
                               pad2(bskip, 1, c_out_p)], axis=1).astype(f32)
    else:
        w1s = pad2(w1, c_in_p, c_m_p).astype(bf16)
        b1s = pad2(b1, 1, c_m_p).astype(f32)
    w2p = pad2(w2, c_m_p, c_m_p).astype(bf16)
    b2p = pad2(b2, 1, c_m_p).astype(f32)
    w3p = jnp.pad(w3, ((0, 0), (0, c_m_p - c_m),
                       (0, c_out_p - c_out))).astype(bf16)   # (9, Cm_p, Co_p)
    b3p = pad2(b3, 1, c_out_p).astype(f32)

    # NOTE: constant weight/bias blocks could be single-buffered via
    # pipeline_mode=pl.Buffered(1) to shave ~1 MB of VMEM; omitted to stay on
    # the widely-supported default pipeline.
    in_specs = [
        pl.BlockSpec((1, tile_h, W, c_in_p), lambda b, i: (b, i, 0, 0)),
        pl.BlockSpec((1, 2, W, c_in_p), lambda b, i: (b * n_tiles + i, 0, 0, 0)),
        pl.BlockSpec((c_in_p, n1), lambda b, i: (0, 0)),
        pl.BlockSpec((1, n1), lambda b, i: (0, 0)),
        pl.BlockSpec((c_m_p, c_m_p), lambda b, i: (0, 0)),
        pl.BlockSpec((1, c_m_p), lambda b, i: (0, 0)),
        pl.BlockSpec((9, c_m_p, c_out_p), lambda b, i: (0, 0, 0)),
        pl.BlockSpec((1, c_out_p), lambda b, i: (0, 0)),
    ]

    kernel = functools.partial(
        _resblock_kernel, tile_h=tile_h, W=W, H=H, c_in_p=c_in_p,
        c_m_p=c_m_p, c_out_p=c_out_p, res_bool=res_bool,
        fuse_skip=fuse_skip, mask_rows=mask_rows)

    out = pl.pallas_call(
        kernel,
        out_shape=jax.ShapeDtypeStruct((B, H_pad, W, c_out_p), out_dtype),
        grid_spec=pltpu.PrefetchScalarGridSpec(
            num_scalar_prefetch=0,
            grid=(B, n_tiles),
            in_specs=in_specs,
            out_specs=pl.BlockSpec((1, tile_h, W, c_out_p),
                                   lambda b, i: (b, i, 0, 0)),
            scratch_shapes=[pltpu.VMEM((tile_h + 2, W + 16, c_m_p), bf16)],
        ),
        compiler_params=pltpu.CompilerParams(
            dimension_semantics=("parallel", "parallel"),
            vmem_limit_bytes=budget),
    )(x, xh, w1s, b1s, w2p, b2p, w3p, b3p)

    out = out[:, :H, :, :c_out]                  # drop padded rows / lanes
    return jnp.transpose(out, (0, 3, 1, 2))      # -> NCHW


def make_params(key, c_in, c_m, c_out):
    ks = jax.random.split(key, 8)
    scale = 0.1
    w1 = scale * jax.random.normal(ks[0], (c_in, c_m), jnp.float32)
    b1 = scale * jax.random.normal(ks[1], (1, c_m), jnp.float32)
    w2 = scale * jax.random.normal(ks[2], (c_m, c_m), jnp.float32)
    b2 = scale * jax.random.normal(ks[3], (1, c_m), jnp.float32)
    # w3 stored as (9, c_m, c_out); tap index = ky*3 + kx, ky,kx in 0..2
    w3 = scale * jax.random.normal(ks[4], (9, c_m, c_out), jnp.float32)
    b3 = scale * jax.random.normal(ks[5], (1, c_out), jnp.float32)
    wskip = scale * jax.random.normal(ks[6], (c_in, c_out), jnp.float32)
    bskip = scale * jax.random.normal(ks[7], (1, c_out), jnp.float32)
    return (w1, b1, w2, b2, w3, b3, wskip, bskip)


def reference_forward(x_nchw, params, *, res_bool):
    """Pure-JAX reference with matching bf16-operand / f32-accumulate math."""
    w1, b1, w2, b2, w3, b3, wskip, bskip = params
    c_in, c_m = w1.shape
    c_out = w3.shape[-1]
    bf16, f32 = jnp.bfloat16, jnp.float32

    def lrelu(v):
        return jnp.where(v > 0, v, 0.1 * v)

    x = jnp.transpose(x_nchw, (0, 2, 3, 1)).astype(bf16)
    r = lrelu(jnp.einsum('bhwi,io->bhwo', x, w1.astype(bf16),
                         preferred_element_type=f32) + b1[0])
    r = lrelu(jnp.einsum('bhwi,io->bhwo', r.astype(bf16), w2.astype(bf16),
                         preferred_element_type=f32) + b2[0])
    w3_hwio = w3.reshape(3, 3, c_m, c_out).astype(bf16)
    r = lax.conv_general_dilated(
        r.astype(bf16), w3_hwio, window_strides=(1, 1), padding='SAME',
        dimension_numbers=('NHWC', 'HWIO', 'NHWC'),
        preferred_element_type=f32)
    r = lrelu(r + b3[0])
    if res_bool:
        if c_in != c_out:
            skip = jnp.einsum('bhwi,io->bhwo', x, wskip.astype(bf16),
                              preferred_element_type=f32) + bskip[0]
        else:
            skip = x.astype(f32)
        r = r + skip
    return jnp.transpose(r, (0, 3, 1, 2))


if __name__ == "__main__":
    key = jax.random.PRNGKey(0)
    kx, kp, kx2, kp2, kx3 = jax.random.split(key, 5)

    B, H, W = 2, 16, 16

    # Config 1: channel mismatch -> fused conv1+skip matmul (Cin=4,Cm=8,Cout=6).
    x = jax.random.normal(kx, (B, 4, H, W), jnp.float32)
    params = make_params(kp, 4, 8, 6)
    out = jax.block_until_ready(
        resblock_forward(x, params, res_bool=True, tile_h=8))
    ref = reference_forward(x, params, res_bool=True)
    assert out.shape == (B, 6, H, W)
    assert float(jnp.max(jnp.abs(out - ref))) < 2e-3

    # Config 2: matching channels -> identity skip (no skip weights at all).
    x2 = jax.random.normal(kx2, (B, 4, H, W), jnp.float32)
    params2 = make_params(kp2, 4, 8, 4)
    out2 = jax.block_until_ready(
        resblock_forward(x2, params2, res_bool=True, tile_h=8))
    ref2 = reference_forward(x2, params2, res_bool=True)
    assert float(jnp.max(jnp.abs(out2 - ref2))) < 2e-3

    # Config 3: res_bool=False, tile_h auto-derived from the VMEM budget.
    out3 = jax.block_until_ready(resblock_forward(x, params, res_bool=False))
    ref3 = reference_forward(x, params, res_bool=False)
    assert float(jnp.max(jnp.abs(out3 - ref3))) < 2e-3

    # Config 4: H not divisible by tile_h -> padded rows masked in-kernel.
    x4 = jax.random.normal(kx3, (B, 4, 12, W), jnp.float32)
    out4 = jax.block_until_ready(
        resblock_forward(x4, params, res_bool=True, tile_h=5))
    ref4 = reference_forward(x4, params, res_bool=True)
    assert out4.shape == (B, 6, 12, W)
    assert float(jnp.max(jnp.abs(out4 - ref4))) < 2e-3

    # Config 5: bf16 output path (halves HBM writeback for stacked blocks).
    out5 = jax.block_until_ready(
        resblock_forward(x, params, res_bool=True, tile_h=8,
                         out_dtype=jnp.bfloat16))
    assert float(jnp.max(jnp.abs(out5.astype(jnp.float32) - ref))) < 2e-2

    print("KERNEL_OK")
</pallas_src>

<mosaic_0001>
module attributes {stable_mosaic.version = 11 : i64} {
  func.func @_resblock_kernel(%arg0: i32, %arg1: i32, %arg2: memref<1x8x16x128xbf16, #tpu.memory_space<vmem>>, %arg3: memref<1x2x16x128xbf16, #tpu.memory_space<vmem>>, %arg4: memref<128x256xbf16, #tpu.memory_space<vmem>>, %arg5: memref<1x256xf32, #tpu.memory_space<vmem>>, %arg6: memref<128x128xbf16, #tpu.memory_space<vmem>>, %arg7: memref<1x128xf32, #tpu.memory_space<vmem>>, %arg8: memref<9x128x128xbf16, #tpu.memory_space<vmem>>, %arg9: memref<1x128xf32, #tpu.memory_space<vmem>>, %arg10: memref<1x8x16x128xf32, #tpu.memory_space<vmem>>, %arg11: memref<10x32x128xbf16, #tpu.memory_space<vmem>>) attributes {dimension_semantics = [#tpu.dimension_semantics<parallel>, #tpu.dimension_semantics<parallel>], iteration_bounds = array<i64: 2, 2>, scalar_prefetch = 0 : i64, scratch_operands = 1 : i64, tpu.core_type = #tpu.core_type<tc>, window_params = [{transform_indices = @transform_0, window_bounds = array<i64: 1, 8, 16, 128>}, {transform_indices = @transform_1, window_bounds = array<i64: 1, 2, 16, 128>}, {pipeline_mode = #tpu.pipeline_mode<synchronous>, transform_indices = @transform_2, window_bounds = array<i64: 128, 256>}, {pipeline_mode = #tpu.pipeline_mode<synchronous>, transform_indices = @transform_3, window_bounds = array<i64: 1, 256>}, {pipeline_mode = #tpu.pipeline_mode<synchronous>, transform_indices = @transform_4, window_bounds = array<i64: 128, 128>}, {pipeline_mode = #tpu.pipeline_mode<synchronous>, transform_indices = @transform_5, window_bounds = array<i64: 1, 128>}, {pipeline_mode = #tpu.pipeline_mode<synchronous>, transform_indices = @transform_6, window_bounds = array<i64: 9, 128, 128>}, {pipeline_mode = #tpu.pipeline_mode<synchronous>, transform_indices = @transform_7, window_bounds = array<i64: 1, 128>}, {transform_indices = @transform_8, window_bounds = array<i64: 1, 8, 16, 128>}]} {
    %cst = arith.constant 0.000000e+00 : bf16
    %0 = vector.broadcast %cst : bf16 to vector<10x1x128xbf16>
    %c0 = arith.constant 0 : index
    %c7 = arith.constant 7 : index
    %c0_0 = arith.constant 0 : index
    %1 = vector.load %arg11[%c0, %c7, %c0_0] : memref<10x32x128xbf16, #tpu.memory_space<vmem>>, vector<10x1x128xbf16>
    tpu.vector_store %arg11[%c0, %c7, %c0_0], %0 {strides = array<i32>} : memref<10x32x128xbf16, #tpu.memory_space<vmem>>, vector<10x1x128xbf16>,
    %c0_1 = arith.constant 0 : index
    %c24 = arith.constant 24 : index
    %c0_2 = arith.constant 0 : index
    %2 = vector.load %arg11[%c0_1, %c24, %c0_2] : memref<10x32x128xbf16, #tpu.memory_space<vmem>>, vector<10x1x128xbf16>
    tpu.vector_store %arg11[%c0_1, %c24, %c0_2], %0 {strides = array<i32>} : memref<10x32x128xbf16, #tpu.memory_space<vmem>>, vector<10x1x128xbf16>,
    %c0_3 = arith.constant 0 : index
    %c0_4 = arith.constant 0 : index
    %c0_5 = arith.constant 0 : index
    %c0_6 = arith.constant 0 : index
    %3 = vector.load %arg2[%c0_3, %c0_4, %c0_5, %c0_6] : memref<1x8x16x128xbf16, #tpu.memory_space<vmem>>, vector<1x8x16x128xbf16>
    %4 = vector.shape_cast %3 : vector<1x8x16x128xbf16> to vector<8x16x128xbf16>
    %5 = vector.shape_cast %4 : vector<8x16x128xbf16> to vector<128x128xbf16>
    %c0_7 = arith.constant 0 : index
    %c0_8 = arith.constant 0 : index
    %6 = vector.load %arg4[%c0_7, %c0_8] : memref<128x256xbf16, #tpu.memory_space<vmem>>, vector<128x256xbf16>
    %cst_9 = arith.constant dense<0.000000e+00> : vector<128x256xf32>
    %7 = tpu.matmul %5, %6, %cst_9 {dimension_numbers = #tpu.dot_dimension_numbers<[1], [0], [0], [1], [0, 0, 1, 1], [], []>} : vector<128x128xbf16>, vector<128x256xbf16>, vector<128x256xf32> -> vector<128x256xf32>
    %c0_10 = arith.constant 0 : index
    %c0_11 = arith.constant 0 : index
    %8 = vector.load %arg5[%c0_10, %c0_11] : memref<1x256xf32, #tpu.memory_space<vmem>>, vector<1x256xf32>
    %9 = vector.broadcast %8 : vector<1x256xf32> to vector<128x256xf32>
    %10 = arith.addf %7, %9 : vector<128x256xf32>
    %11 = vector.extract_strided_slice %10 {offsets = [0, 0], sizes = [128, 128], strides = [1, 1]} : vector<128x256xf32> to vector<128x128xf32>
    %cst_12 = arith.constant 0.000000e+00 : f32
    %12 = vector.broadcast %cst_12 : f32 to vector<128x128xf32>
    %13 = arith.cmpf ogt, %11, %12 : vector<128x128xf32>
    %cst_13 = arith.constant 1.000000e-01 : f32
    %14 = vector.broadcast %cst_13 : f32 to vector<128x128xf32>
    %15 = arith.mulf %14, %11 : vector<128x128xf32>
    %16 = arith.select %13, %11, %15 : vector<128x128xi1>, vector<128x128xf32>
    %17 = vector.extract_strided_slice %10 {offsets = [0, 128], sizes = [128, 128], strides = [1, 1]} : vector<128x256xf32> to vector<128x128xf32>
    %18 = arith.truncf %16 : vector<128x128xf32> to vector<128x128xbf16>
    %c0_14 = arith.constant 0 : index
    %c0_15 = arith.constant 0 : index
    %19 = vector.load %arg6[%c0_14, %c0_15] : memref<128x128xbf16, #tpu.memory_space<vmem>>, vector<128x128xbf16>
    %cst_16 = arith.constant dense<0.000000e+00> : vector<128x128xf32>
    %20 = tpu.matmul %18, %19, %cst_16 {dimension_numbers = #tpu.dot_dimension_numbers<[1], [0], [0], [1], [0, 0, 1, 1], [], []>} : vector<128x128xbf16>, vector<128x128xbf16>, vector<128x128xf32> -> vector<128x128xf32>
    %c0_17 = arith.constant 0 : index
    %c0_18 = arith.constant 0 : index
    %21 = vector.load %arg7[%c0_17, %c0_18] : memref<1x128xf32, #tpu.memory_space<vmem>>, vector<1x128xf32>
    %22 = vector.broadcast %21 : vector<1x128xf32> to vector<128x128xf32>
    %23 = arith.addf %20, %22 : vector<128x128xf32>
    %cst_19 = arith.constant 0.000000e+00 : f32
    %24 = vector.broadcast %cst_19 : f32 to vector<128x128xf32>
    %25 = arith.cmpf ogt, %23, %24 : vector<128x128xf32>
    %cst_20 = arith.constant 1.000000e-01 : f32
    %26 = vector.broadcast %cst_20 : f32 to vector<128x128xf32>
    %27 = arith.mulf %26, %23 : vector<128x128xf32>
    %28 = arith.select %25, %23, %27 : vector<128x128xi1>, vector<128x128xf32>
    %29 = vector.shape_cast %28 : vector<128x128xf32> to vector<8x16x128xf32>
    %30 = arith.truncf %29 : vector<8x16x128xf32> to vector<8x16x128xbf16>
    %c1 = arith.constant 1 : index
    %c8 = arith.constant 8 : index
    %c0_21 = arith.constant 0 : index
    %31 = vector.load %arg11[%c1, %c8, %c0_21] : memref<10x32x128xbf16, #tpu.memory_space<vmem>>, vector<8x16x128xbf16>
    tpu.vector_store %arg11[%c1, %c8, %c0_21], %30 {strides = array<i32>} : memref<10x32x128xbf16, #tpu.memory_space<vmem>>, vector<8x16x128xbf16>,
    %c0_22 = arith.constant 0 : index
    %c0_23 = arith.constant 0 : index
    %c0_24 = arith.constant 0 : index
    %c0_25 = arith.constant 0 : index
    %32 = vector.load %arg3[%c0_22, %c0_23, %c0_24, %c0_25] : memref<1x2x16x128xbf16, #tpu.memory_space<vmem>>, vector<1x2x16x128xbf16>
    %33 = vector.shape_cast %32 : vector<1x2x16x128xbf16> to vector<2x16x128xbf16>
    %34 = vector.shape_cast %33 : vector<2x16x128xbf16> to vector<32x128xbf16>
    %c0_26 = arith.constant 0 : index
    %c0_27 = arith.constant 0 : index
    %35 = vector.load %arg4[%c0_26, %c0_27] : memref<128x256xbf16, #tpu.memory_space<vmem>>, vector<128x256xbf16>
    %cst_28 = arith.constant dense<0.000000e+00> : vector<32x256xf32>
    %36 = tpu.matmul %34, %35, %cst_28 {dimension_numbers = #tpu.dot_dimension_numbers<[1], [0], [0], [1], [0, 0, 1, 1], [], []>} : vector<32x128xbf16>, vector<128x256xbf16>, vector<32x256xf32> -> vector<32x256xf32>
    %c0_29 = arith.constant 0 : index
    %c0_30 = arith.constant 0 : index
    %37 = vector.load %arg5[%c0_29, %c0_30] : memref<1x256xf32, #tpu.memory_space<vmem>>, vector<1x256xf32>
    %38 = vector.broadcast %37 : vector<1x256xf32> to vector<32x256xf32>
    %39 = arith.addf %36, %38 : vector<32x256xf32>
    %40 = vector.extract_strided_slice %39 {offsets = [0, 0], sizes = [32, 128], strides = [1, 1]} : vector<32x256xf32> to vector<32x128xf32>
    %cst_31 = arith.constant 0.000000e+00 : f32
    %41 = vector.broadcast %cst_31 : f32 to vector<32x128xf32>
    %42 = arith.cmpf ogt, %40, %41 : vector<32x128xf32>
    %cst_32 = arith.constant 1.000000e-01 : f32
    %43 = vector.broadcast %cst_32 : f32 to vector<32x128xf32>
    %44 = arith.mulf %43, %40 : vector<32x128xf32>
    %45 = arith.select %42, %40, %44 : vector<32x128xi1>, vector<32x128xf32>
    %46 = arith.truncf %45 : vector<32x128xf32> to vector<32x128xbf16>
    %c0_33 = arith.constant 0 : index
    %c0_34 = arith.constant 0 : index
    %47 = vector.load %arg6[%c0_33, %c0_34] : memref<128x128xbf16, #tpu.memory_space<vmem>>, vector<128x128xbf16>
    %cst_35 = arith.constant dense<0.000000e+00> : vector<32x128xf32>
    %48 = tpu.matmul %46, %47, %cst_35 {dimension_numbers = #tpu.dot_dimension_numbers<[1], [0], [0], [1], [0, 0, 1, 1], [], []>} : vector<32x128xbf16>, vector<128x128xbf16>, vector<32x128xf32> -> vector<32x128xf32>
    %c0_36 = arith.constant 0 : index
    %c0_37 = arith.constant 0 : index
    %49 = vector.load %arg7[%c0_36, %c0_37] : memref<1x128xf32, #tpu.memory_space<vmem>>, vector<1x128xf32>
    %50 = vector.broadcast %49 : vector<1x128xf32> to vector<32x128xf32>
    %51 = arith.addf %48, %50 : vector<32x128xf32>
    %cst_38 = arith.constant 0.000000e+00 : f32
    %52 = vector.broadcast %cst_38 : f32 to vector<32x128xf32>
    %53 = arith.cmpf ogt, %51, %52 : vector<32x128xf32>
    %cst_39 = arith.constant 1.000000e-01 : f32
    %54 = vector.broadcast %cst_39 : f32 to vector<32x128xf32>
    %55 = arith.mulf %54, %51 : vector<32x128xf32>
    %56 = arith.select %53, %51, %55 : vector<32x128xi1>, vector<32x128xf32>
    %57 = tpu.iota {dimensions = array<i32: 0>} : vector<32x1xi32>
    %c16_i32 = arith.constant 16 : i32
    %58 = vector.broadcast %c16_i32 : i32 to vector<32x1xi32>
    %59 = arith.cmpi slt, %57, %58 : vector<32x1xi32>
    %c0_i32 = arith.constant 0 : i32
    %60 = arith.cmpi sgt, %arg1, %c0_i32 : i32
    %61 = vector.broadcast %60 : i1 to vector<32x1xi1>
    %62 = arith.andi %59, %61 : vector<32x1xi1>
    %cst_40 = arith.constant dense<true> : vector<32x1xi1>
    %63 = arith.xori %59, %cst_40 : vector<32x1xi1>
    %c1_i32 = arith.constant 1 : i32
    %64 = arith.addi %arg1, %c1_i32 : i32
    %c8_i32 = arith.constant 8 : i32
    %65 = arith.muli %64, %c8_i32 : i32
    %c16_i32_41 = arith.constant 16 : i32
    %66 = arith.cmpi slt, %65, %c16_i32_41 : i32
    %67 = vector.broadcast %66 : i1 to vector<32x1xi1>
    %68 = arith.andi %63, %67 : vector<32x1xi1>
    %69 = arith.ori %62, %68 : vector<32x1xi1>
    %cst_42 = arith.constant 0.000000e+00 : f32
    %70 = vector.shape_cast %69 : vector<32x1xi1> to vector<32x1xi1>
    %71 = vector.broadcast %70 : vector<32x1xi1> to vector<32x128xi1>
    %72 = vector.broadcast %cst_42 : f32 to vector<32x128xf32>
    %73 = arith.select %71, %56, %72 : vector<32x128xi1>, vector<32x128xf32>
    %74 = arith.truncf %73 : vector<32x128xf32> to vector<32x128xbf16>
    %75 = vector.shape_cast %74 : vector<32x128xbf16> to vector<2x16x128xbf16>
    %76 = vector.extract_strided_slice %75 {offsets = [0, 0, 0], sizes = [1, 16, 128], strides = [1, 1, 1]} : vector<2x16x128xbf16> to vector<1x16x128xbf16>
    %c0_43 = arith.constant 0 : index
    %c8_44 = arith.constant 8 : index
    %c0_45 = arith.constant 0 : index
    %77 = vector.load %arg11[%c0_43, %c8_44, %c0_45] : memref<10x32x128xbf16, #tpu.memory_space<vmem>>, vector<1x16x128xbf16>
    tpu.vector_store %arg11[%c0_43, %c8_44, %c0_45], %76 {strides = array<i32>} : memref<10x32x128xbf16, #tpu.memory_space<vmem>>, vector<1x16x128xbf16>,
    %78 = vector.extract_strided_slice %75 {offsets = [1, 0, 0], sizes = [1, 16, 128], strides = [1, 1, 1]} : vector<2x16x128xbf16> to vector<1x16x128xbf16>
    %c9 = arith.constant 9 : index
    %c8_46 = arith.constant 8 : index
    %c0_47 = arith.constant 0 : index
    %79 = vector.load %arg11[%c9, %c8_46, %c0_47] : memref<10x32x128xbf16, #tpu.memory_space<vmem>>, vector<1x16x128xbf16>
    tpu.vector_store %arg11[%c9, %c8_46, %c0_47], %78 {strides = array<i32>} : memref<10x32x128xbf16, #tpu.memory_space<vmem>>, vector<1x16x128xbf16>,
    %c0_48 = arith.constant 0 : index
    %c7_49 = arith.constant 7 : index
    %c0_50 = arith.constant 0 : index
    %80 = vector.load %arg11[%c0_48, %c7_49, %c0_50] : memref<10x32x128xbf16, #tpu.memory_space<vmem>>, vector<8x16x128xbf16>
    %81 = vector.shape_cast %80 : vector<8x16x128xbf16> to vector<128x128xbf16>
    %c0_51 = arith.constant 0 : index
    %c0_52 = arith.constant 0 : index
    %c0_53 = arith.constant 0 : index
    %82 = vector.load %arg8[%c0_51, %c0_52, %c0_53] : memref<9x128x128xbf16, #tpu.memory_space<vmem>>, vector<1x128x128xbf16>
    %83 = vector.shape_cast %82 : vector<1x128x128xbf16> to vector<128x128xbf16>
    %cst_54 = arith.constant dense<0.000000e+00> : vector<128x128xf32>
    %84 = tpu.matmul %81, %83, %cst_54 {dimension_numbers = #tpu.dot_dimension_numbers<[1], [0], [0], [1], [0, 0, 1, 1], [], []>} : vector<128x128xbf16>, vector<128x128xbf16>, vector<128x128xf32> -> vector<128x128xf32>
    %c0_55 = arith.constant 0 : index
    %c8_56 = arith.constant 8 : index
    %c0_57 = arith.constant 0 : index
    %85 = vector.load %arg11[%c0_55, %c8_56, %c0_57] : memref<10x32x128xbf16, #tpu.memory_space<vmem>>, vector<8x16x128xbf16>
    %86 = vector.shape_cast %85 : vector<8x16x128xbf16> to vector<128x128xbf16>
    %c1_58 = arith.constant 1 : index
    %c0_59 = arith.constant 0 : index
    %c0_60 = arith.constant 0 : index
    %87 = vector.load %arg8[%c1_58, %c0_59, %c0_60] : memref<9x128x128xbf16, #tpu.memory_space<vmem>>, vector<1x128x128xbf16>
    %88 = vector.shape_cast %87 : vector<1x128x128xbf16> to vector<128x128xbf16>
    %cst_61 = arith.constant dense<0.000000e+00> : vector<128x128xf32>
    %89 = tpu.matmul %86, %88, %cst_61 {dimension_numbers = #tpu.dot_dimension_numbers<[1], [0], [0], [1], [0, 0, 1, 1], [], []>} : vector<128x128xbf16>, vector<128x128xbf16>, vector<128x128xf32> -> vector<128x128xf32>
    %90 = arith.addf %84, %89 : vector<128x128xf32>
    %c0_62 = arith.constant 0 : index
    %c9_63 = arith.constant 9 : index
    %c0_64 = arith.constant 0 : index
    %91 = vector.load %arg11[%c0_62, %c9_63, %c0_64] : memref<10x32x128xbf16, #tpu.memory_space<vmem>>, vector<8x16x128xbf16>
    %92 = vector.shape_cast %91 : vector<8x16x128xbf16> to vector<128x128xbf16>
    %c2 = arith.constant 2 : index
    %c0_65 = arith.constant 0 : index
    %c0_66 = arith.constant 0 : index
    %93 = vector.load %arg8[%c2, %c0_65, %c0_66] : memref<9x128x128xbf16, #tpu.memory_space<vmem>>, vector<1x128x128xbf16>
    %94 = vector.shape_cast %93 : vector<1x128x128xbf16> to vector<128x128xbf16>
    %cst_67 = arith.constant dense<0.000000e+00> : vector<128x128xf32>
    %95 = tpu.matmul %92, %94, %cst_67 {dimension_numbers = #tpu.dot_dimension_numbers<[1], [0], [0], [1], [0, 0, 1, 1], [], []>} : vector<128x128xbf16>, vector<128x128xbf16>, vector<128x128xf32> -> vector<128x128xf32>
    %96 = arith.addf %90, %95 : vector<128x128xf32>
    %c1_68 = arith.constant 1 : index
    %c7_69 = arith.constant 7 : index
    %c0_70 = arith.constant 0 : index
    %97 = vector.load %arg11[%c1_68, %c7_69, %c0_70] : memref<10x32x128xbf16, #tpu.memory_space<vmem>>, vector<8x16x128xbf16>
    %98 = vector.shape_cast %97 : vector<8x16x128xbf16> to vector<128x128xbf16>
    %c3 = arith.constant 3 : index
    %c0_71 = arith.constant 0 : index
    %c0_72 = arith.constant 0 : index
    %99 = vector.load %arg8[%c3, %c0_71, %c0_72] : memref<9x128x128xbf16, #tpu.memory_space<vmem>>, vector<1x128x128xbf16>
    %100 = vector.shape_cast %99 : vector<1x128x128xbf16> to vector<128x128xbf16>
    %cst_73 = arith.constant dense<0.000000e+00> : vector<128x128xf32>
    %101 = tpu.matmul %98, %100, %cst_73 {dimension_numbers = #tpu.dot_dimension_numbers<[1], [0], [0], [1], [0, 0, 1, 1], [], []>} : vector<128x128xbf16>, vector<128x128xbf16>, vector<128x128xf32> -> vector<128x128xf32>
    %102 = arith.addf %96, %101 : vector<128x128xf32>
    %c1_74 = arith.constant 1 : index
    %c8_75 = arith.constant 8 : index
    %c0_76 = arith.constant 0 : index
    %103 = vector.load %arg11[%c1_74, %c8_75, %c0_76] : memref<10x32x128xbf16, #tpu.memory_space<vmem>>, vector<8x16x128xbf16>
    %104 = vector.shape_cast %103 : vector<8x16x128xbf16> to vector<128x128xbf16>
    %c4 = arith.constant 4 : index
    %c0_77 = arith.constant 0 : index
    %c0_78 = arith.constant 0 : index
    %105 = vector.load %arg8[%c4, %c0_77, %c0_78] : memref<9x128x128xbf16, #tpu.memory_space<vmem>>, vector<1x128x128xbf16>
    %106 = vector.shape_cast %105 : vector<1x128x128xbf16> to vector<128x128xbf16>
    %cst_79 = arith.constant dense<0.000000e+00> : vector<128x128xf32>
    %107 = tpu.matmul %104, %106, %cst_79 {dimension_numbers = #tpu.dot_dimension_numbers<[1], [0], [0], [1], [0, 0, 1, 1], [], []>} : vector<128x128xbf16>, vector<128x128xbf16>, vector<128x128xf32> -> vector<128x128xf32>
    %108 = arith.addf %102, %107 : vector<128x128xf32>
    %c1_80 = arith.constant 1 : index
    %c9_81 = arith.constant 9 : index
    %c0_82 = arith.constant 0 : index
    %109 = vector.load %arg11[%c1_80, %c9_81, %c0_82] : memref<10x32x128xbf16, #tpu.memory_space<vmem>>, vector<8x16x128xbf16>
    %110 = vector.shape_cast %109 : vector<8x16x128xbf16> to vector<128x128xbf16>
    %c5 = arith.constant 5 : index
    %c0_83 = arith.constant 0 : index
    %c0_84 = arith.constant 0 : index
    %111 = vector.load %arg8[%c5, %c0_83, %c0_84] : memref<9x128x128xbf16, #tpu.memory_space<vmem>>, vector<1x128x128xbf16>
    %112 = vector.shape_cast %111 : vector<1x128x128xbf16> to vector<128x128xbf16>
    %cst_85 = arith.constant dense<0.000000e+00> : vector<128x128xf32>
    %113 = tpu.matmul %110, %112, %cst_85 {dimension_numbers = #tpu.dot_dimension_numbers<[1], [0], [0], [1], [0, 0, 1, 1], [], []>} : vector<128x128xbf16>, vector<128x128xbf16>, vector<128x128xf32> -> vector<128x128xf32>
    %114 = arith.addf %108, %113 : vector<128x128xf32>
    %c2_86 = arith.constant 2 : index
    %c7_87 = arith.constant 7 : index
    %c0_88 = arith.constant 0 : index
    %115 = vector.load %arg11[%c2_86, %c7_87, %c0_88] : memref<10x32x128xbf16, #tpu.memory_space<vmem>>, vector<8x16x128xbf16>
    %116 = vector.shape_cast %115 : vector<8x16x128xbf16> to vector<128x128xbf16>
    %c6 = arith.constant 6 : index
    %c0_89 = arith.constant 0 : index
    %c0_90 = arith.constant 0 : index
    %117 = vector.load %arg8[%c6, %c0_89, %c0_90] : memref<9x128x128xbf16, #tpu.memory_space<vmem>>, vector<1x128x128xbf16>
    %118 = vector.shape_cast %117 : vector<1x128x128xbf16> to vector<128x128xbf16>
    %cst_91 = arith.constant dense<0.000000e+00> : vector<128x128xf32>
    %119 = tpu.matmul %116, %118, %cst_91 {dimension_numbers = #tpu.dot_dimension_numbers<[1], [0], [0], [1], [0, 0, 1, 1], [], []>} : vector<128x128xbf16>, vector<128x128xbf16>, vector<128x128xf32> -> vector<128x128xf32>
    %120 = arith.addf %114, %119 : vector<128x128xf32>
    %c2_92 = arith.constant 2 : index
    %c8_93 = arith.constant 8 : index
    %c0_94 = arith.constant 0 : index
    %121 = vector.load %arg11[%c2_92, %c8_93, %c0_94] : memref<10x32x128xbf16, #tpu.memory_space<vmem>>, vector<8x16x128xbf16>
    %122 = vector.shape_cast %121 : vector<8x16x128xbf16> to vector<128x128xbf16>
    %c7_95 = arith.constant 7 : index
    %c0_96 = arith.constant 0 : index
    %c0_97 = arith.constant 0 : index
    %123 = vector.load %arg8[%c7_95, %c0_96, %c0_97] : memref<9x128x128xbf16, #tpu.memory_space<vmem>>, vector<1x128x128xbf16>
    %124 = vector.shape_cast %123 : vector<1x128x128xbf16> to vector<128x128xbf16>
    %cst_98 = arith.constant dense<0.000000e+00> : vector<128x128xf32>
    %125 = tpu.matmul %122, %124, %cst_98 {dimension_numbers = #tpu.dot_dimension_numbers<[1], [0], [0], [1], [0, 0, 1, 1], [], []>} : vector<128x128xbf16>, vector<128x128xbf16>, vector<128x128xf32> -> vector<128x128xf32>
    %126 = arith.addf %120, %125 : vector<128x128xf32>
    %c2_99 = arith.constant 2 : index
    %c9_100 = arith.constant 9 : index
    %c0_101 = arith.constant 0 : index
    %127 = vector.load %arg11[%c2_99, %c9_100, %c0_101] : memref<10x32x128xbf16, #tpu.memory_space<vmem>>, vector<8x16x128xbf16>
    %128 = vector.shape_cast %127 : vector<8x16x128xbf16> to vector<128x128xbf16>
    %c8_102 = arith.constant 8 : index
    %c0_103 = arith.constant 0 : index
    %c0_104 = arith.constant 0 : index
    %129 = vector.load %arg8[%c8_102, %c0_103, %c0_104] : memref<9x128x128xbf16, #tpu.memory_space<vmem>>, vector<1x128x128xbf16>
    %130 = vector.shape_cast %129 : vector<1x128x128xbf16> to vector<128x128xbf16>
    %cst_105 = arith.constant dense<0.000000e+00> : vector<128x128xf32>
    %131 = tpu.matmul %128, %130, %cst_105 {dimension_numbers = #tpu.dot_dimension_numbers<[1], [0], [0], [1], [0, 0, 1, 1], [], []>} : vector<128x128xbf16>, vector<128x128xbf16>, vector<128x128xf32> -> vector<128x128xf32>
    %132 = arith.addf %126, %131 : vector<128x128xf32>
    %c0_106 = arith.constant 0 : index
    %c0_107 = arith.constant 0 : index
    %133 = vector.load %arg9[%c0_106, %c0_107] : memref<1x128xf32, #tpu.memory_space<vmem>>, vector<1x128xf32>
    %134 = vector.broadcast %133 : vector<1x128xf32> to vector<128x128xf32>
    %135 = arith.addf %132, %134 : vector<128x128xf32>
    %cst_108 = arith.constant 0.000000e+00 : f32
    %136 = vector.broadcast %cst_108 : f32 to vector<128x128xf32>
    %137 = arith.cmpf ogt, %135, %136 : vector<128x128xf32>
    %cst_109 = arith.constant 1.000000e-01 : f32
    %138 = vector.broadcast %cst_109 : f32 to vector<128x128xf32>
    %139 = arith.mulf %138, %135 : vector<128x128xf32>
    %140 = arith.select %137, %135, %139 : vector<128x128xi1>, vector<128x128xf32>
    %141 = arith.addf %140, %17 : vector<128x128xf32>
    %142 = vector.shape_cast %141 : vector<128x128xf32> to vector<8x16x128xf32>
    %c0_110 = arith.constant 0 : index
    %c0_111 = arith.constant 0 : index
    %c0_112 = arith.constant 0 : index
    %c0_113 = arith.constant 0 : index
    %143 = vector.load %arg10[%c0_110, %c0_111, %c0_112, %c0_113] : memref<1x8x16x128xf32, #tpu.memory_space<vmem>>, vector<1x8x16x128xf32>
    %144 = vector.shape_cast %143 : vector<1x8x16x128xf32> to vector<8x16x128xf32>
    %145 = vector.shape_cast %142 : vector<8x16x128xf32> to vector<1x8x16x128xf32>
    tpu.vector_store %arg10[%c0_110, %c0_111, %c0_112, %c0_113], %145 {strides = array<i32>} : memref<1x8x16x128xf32, #tpu.memory_space<vmem>>, vector<1x8x16x128xf32>,
    return
  }
  func.func @transform_0(%arg0: i32, %arg1: i32) -> (i32, i32, i32, i32) {
    %c0_i32 = arith.constant 0 : i32
    %c0_i32_0 = arith.constant 0 : i32
    %c0_i32_1 = arith.constant 0 : i32
    return %arg0, %arg1, %c0_i32, %c0_i32_0 : i32, i32, i32, i32
  }
  func.func @transform_1(%arg0: i32, %arg1: i32) -> (i32, i32, i32, i32) {
    %c2_i32 = arith.constant 2 : i32
    %0 = arith.muli %arg0, %c2_i32 : i32
    %1 = arith.addi %0, %arg1 : i32
    %c0_i32 = arith.constant 0 : i32
    %c0_i32_0 = arith.constant 0 : i32
    %c0_i32_1 = arith.constant 0 : i32
    %c0_i32_2 = arith.constant 0 : i32
    return %1, %c0_i32, %c0_i32_0, %c0_i32_1 : i32, i32, i32, i32
  }
  func.func @transform_2(%arg0: i32, %arg1: i32) -> (i32, i32) {
    %c0_i32 = arith.constant 0 : i32
    %c0_i32_0 = arith.constant 0 : i32
    %c0_i32_1 = arith.constant 0 : i32
    return %c0_i32, %c0_i32_0 : i32, i32
  }
  func.func @transform_3(%arg0: i32, %arg1: i32) -> (i32, i32) {
    %c0_i32 = arith.constant 0 : i32
    %c0_i32_0 = arith.constant 0 : i32
    %c0_i32_1 = arith.constant 0 : i32
    return %c0_i32, %c0_i32_0 : i32, i32
  }
  func.func @transform_4(%arg0: i32, %arg1: i32) -> (i32, i32) {
    %c0_i32 = arith.constant 0 : i32
    %c0_i32_0 = arith.constant 0 : i32
    %c0_i32_1 = arith.constant 0 : i32
    return %c0_i32, %c0_i32_0 : i32, i32
  }
  func.func @transform_5(%arg0: i32, %arg1: i32) -> (i32, i32) {
    %c0_i32 = arith.constant 0 : i32
    %c0_i32_0 = arith.constant 0 : i32
    %c0_i32_1 = arith.constant 0 : i32
    return %c0_i32, %c0_i32_0 : i32, i32
  }
  func.func @transform_6(%arg0: i32, %arg1: i32) -> (i32, i32, i32) {
    %c0_i32 = arith.constant 0 : i32
    %c0_i32_0 = arith.constant 0 : i32
    %c0_i32_1 = arith.constant 0 : i32
    %c0_i32_2 = arith.constant 0 : i32
    return %c0_i32, %c0_i32_0, %c0_i32_1 : i32, i32, i32
  }
  func.func @transform_7(%arg0: i32, %arg1: i32) -> (i32, i32) {
    %c0_i32 = arith.constant 0 : i32
    %c0_i32_0 = arith.constant 0 : i32
    %c0_i32_1 = arith.constant 0 : i32
    return %c0_i32, %c0_i32_0 : i32, i32
  }
  func.func @transform_8(%arg0: i32, %arg1: i32) -> (i32, i32, i32, i32) {
    %c0_i32 = arith.constant 0 : i32
    %c0_i32_0 = arith.constant 0 : i32
    %c0_i32_1 = arith.constant 0 : i32
    return %arg0, %arg1, %c0_i32, %c0_i32_0 : i32, i32, i32, i32
  }
}

</mosaic_0001>

<llo_original>
// kernel: tpu_custom_call.1
$region0: #{tpu_custom_call.1}
  #allocation0 [shape = 'u32[]', space=smem, size = 0x4, offset = 0x4, fixed_abs, tag = 'smem constant byte address 0x4 - core index']
  #allocation1 [shape = 'u32[144,128]{1,0:T(1,128)}', space=vmem, size = 0x12000, scoped, tag = 'internal scratch']
  #allocation2 [shape = 'bf16[10,32,128]{2,1,0:T(16,128)(2,1)}', space=vmem, size = 0x14000, scoped, tag = 'scratch operand']
  %s0 = inlined_call_operand.hbm [shape: bf16[2,16,16,128], index: 0, kind: input, shape index: {}]
  %s1 = inlined_call_operand.hbm [shape: bf16[4,2,16,128], index: 1, kind: input, shape index: {}]
  %s2 = inlined_call_operand.hbm [shape: bf16[128,256], index: 2, kind: input, shape index: {}]
  %s3 = inlined_call_operand.vmem [shape: f32[1,256], index: 3, kind: input, shape index: {}]
  %s4 = inlined_call_operand.hbm [shape: bf16[128,128], index: 4, kind: input, shape index: {}]
  %s5 = inlined_call_operand.vmem [shape: f32[1,128], index: 5, kind: input, shape index: {}]
  %s6 = inlined_call_operand.hbm [shape: bf16[9,128,128], index: 6, kind: input, shape index: {}]
  %s7 = inlined_call_operand.vmem [shape: f32[1,128], index: 7, kind: input, shape index: {}]
  %s8 = inlined_call_operand.hbm [shape: f32[2,16,16,128], index: 8, kind: output, shape index: {}]
  %s9 = sld [smem:[#allocation0]]
  $region85: #{tpu_custom_call.1} parent=0
    _
  %s11 = ssub.s32 1, %s9
  %s12 = scalar_select 0, %s11, %s9
  $region1: #{tpu_custom_call.1} parent=0
    #allocation3 [shape = 'u8[65536]{0}', space=vmem, size = 0x10000, scoped, tag = 'input window, operand 0']
    #allocation4 [shape = 's32[2]{0}', space=sflag, size = 0x8, scoped, tag = 'scoped memory for tpu_custom_call.1']
    #allocation5 [shape = 's32[2]{0}', space=sflag, size = 0x8, scoped, tag = 'scoped memory for tpu_custom_call.1']
    #allocation6 [shape = 'u8[16384]{0}', space=vmem, size = 0x4000, scoped, tag = 'input window, operand 1']
    #allocation7 [shape = 's32[2]{0}', space=sflag, size = 0x8, scoped, tag = 'scoped memory for tpu_custom_call.1']
    #allocation8 [shape = 'u8[65536]{0}', space=vmem, size = 0x10000, scoped, tag = 'input window, operand 2, single buffered']
    #allocation9 [shape = 'u8[32768]{0}', space=vmem, size = 0x8000, scoped, tag = 'input window, operand 4, single buffered']
    #allocation10 [shape = 's32[1]{0}', space=sflag, size = 0x4, scoped, tag = 'scoped memory for tpu_custom_call.1']
    #allocation11 [shape = 'u8[294912]{0}', space=vmem, size = 0x48000, scoped, tag = 'input window, operand 6, single buffered']
    #allocation12 [shape = 'u8[131072]{0}', space=vmem, size = 0x20000, scoped, tag = 'output window, operand 0']
    %13 = vsyncpa [#allocation4], 0
    %s14 = scalar_lea.sflag [#allocation4], 1
    %15 = vsyncpa %s14, 0
    %16 = vsyncpa [#allocation7], 0
    %s17 = scalar_lea.sflag [#allocation7], 1
    %18 = vsyncpa %s17, 0
    %19 = vsyncpa [#allocation10], 0
    %20 = vsyncpa [#allocation5], 0
    %s21 = scalar_lea.sflag [#allocation5], 1
    %22 = vsyncpa %s21, 0
    loop: start=0, step=1, limit=6
    $region2: #{tpu_custom_call.1} parent=1 // loop_pre_header
      _
    $region3: #{tpu_custom_call.1} parent=1 // loop_header
      %s24 = sphi 0, %s28
      %p25 = scmp.ge.s32.totalorder %s24, 6
      %s31 = sphi 0, %s43
      %s32 = sphi 0, %s39
      %s33 = sphi 0, %s31
      %s34 = sphi 0, %s32
      %s35 = sphi 0, %s33
      %s36 = sphi 0, %s34
      %s48 = sphi 0, %s50
      %s51 = sphi 0, %s48
      %s52 = sphi 0, %s51
      %s68 = sphi 0, %s52
      %s78 = sphi 0, %s80
      %s81 = sphi 0, %s78
      %s82 = sphi 0, %s81
      %s98 = sphi 0, %s82
      %s102 = sphi 0, %s102
      %s104 = sphi 0, %s102
      %s105 = sphi 0, %s104
      %s119 = sphi 0, %s105
      %s123 = sphi 0, %s123
      %s125 = sphi 0, %s123
      %s126 = sphi 0, %s125
      %s140 = sphi 0, %s126
      %s144 = sphi 0, %s144
      %s146 = sphi 0, %s144
      %s147 = sphi 0, %s146
      %s161 = sphi 0, %s147
      %s165 = sphi 0, %s165
      %s167 = sphi 0, %s165
      %s168 = sphi 0, %s167
      %s182 = sphi 0, %s168
      %s186 = sphi 0, %s186
      %s188 = sphi 0, %s186
      %s189 = sphi 0, %s188
      %s203 = sphi 0, %s189
      %s207 = sphi 0, %s207
      %s209 = sphi 0, %s207
      %s210 = sphi 0, %s209
      %s224 = sphi 0, %s210
      %s232 = sphi 0, %s234
      %s235 = sphi 0, %s232
      %s236 = sphi 0, %s235
      %s252 = sphi 0, %s236
    $region4: #{tpu_custom_call.1} parent=1 // loop_header_branch
      %27 = sbr.rel (%p25) target = $region8
    $region5: #{tpu_custom_call.1} parent=1 // loop_body
      %s29 = ssub.s32 %s24, 1
      %s30 = ssub.s32 %s24, 2
      %s37 = sadd.s32 1, %s32
      %p38 = scmp.ge.s32.totalorder %s37, 2
      %s39 = scalar_select %p38, 0, %s37
      %s40 = sadd.s32 1, %s31
      %s41 = scalar_select %p38, %s40, %s31
      %p42 = scmp.ge.s32.totalorder %s41, 2
      %s43 = scalar_select %p42, 0, %s41
      %s44 = ssub.s32 %s31, %s43
      %s45 = ssub.s32 %s32, %s39
      %s46 = sor.u32 %s44, %s45
      %p47 = scmp.eq.s32.totalorder %s46, 0
      %s49 = sadd.s32 %s48, 1
      %s50 = scalar_select %p47, %s48, %s49
      %p53 = pneg %p47
      %p54 = scmp.eq.s32.totalorder %s24, 3
      %p55 = por %p53, %p54
      %p56 = scmp.ne.s32.totalorder %s48, %s51
      %p57 = scmp.eq.s32.totalorder %s24, 0
      %p58 = por %p56, %p57
      %p59 = scmp.ne.s32.totalorder %s48, %s51
      %p60 = scmp.eq.s32.totalorder %s29, 3
      %p61 = por %p59, %p60
      %p62 = scmp.ne.s32.totalorder %s51, %s52
      %p63 = scmp.eq.s32.totalorder %s29, 0
      %p64 = por %p62, %p63
      %p65 = scmp.ne.s32.totalorder %s51, %s52
      %p66 = scmp.eq.s32.totalorder %s30, 3
      %p67 = por %p65, %p66
      %p69 = scmp.ne.s32.totalorder %s52, %s68
      %p70 = scmp.eq.s32.totalorder %s30, 0
      %p71 = por %p69, %p70
      %s72 = smul.u32 %s31, 2
      %s73 = sadd.s32 %s72, %s32
      %s74 = smul.u32 %s43, 2
      %s75 = sadd.s32 %s74, %s39
      %s76 = ssub.s32 %s73, %s75
      %p77 = scmp.eq.s32.totalorder %s76, 0
      %s79 = sadd.s32 %s78, 1
      %s80 = scalar_select %p77, %s78, %s79
      %p83 = pneg %p77
      %p84 = scmp.eq.s32.totalorder %s24, 3
      %p85 = por %p83, %p84
      %p86 = scmp.ne.s32.totalorder %s78, %s81
      %p87 = scmp.eq.s32.totalorder %s24, 0
      %p88 = por %p86, %p87
      %p89 = scmp.ne.s32.totalorder %s78, %s81
      %p90 = scmp.eq.s32.totalorder %s29, 3
      %p91 = por %p89, %p90
      %p92 = scmp.ne.s32.totalorder %s81, %s82
      %p93 = scmp.eq.s32.totalorder %s29, 0
      %p94 = por %p92, %p93
      %p95 = scmp.ne.s32.totalorder %s81, %s82
      %p96 = scmp.eq.s32.totalorder %s30, 3
      %p97 = por %p95, %p96
      %p99 = scmp.ne.s32.totalorder %s82, %s98
      %p100 = scmp.eq.s32.totalorder %s30, 0
      %p101 = por %p99, %p100
      %s103 = sadd.s32 %s102, 1
      %p106 = scmp.eq.s32.totalorder %s24, 3
      %p107 = scmp.ne.s32.totalorder %s102, %s104
      %p108 = scmp.eq.s32.totalorder %s24, 0
      %p109 = por %p107, %p108
      %p110 = scmp.ne.s32.totalorder %s102, %s104
      %p111 = scmp.eq.s32.totalorder %s29, 3
      %p112 = por %p110, %p111
      %p113 = scmp.ne.s32.totalorder %s104, %s105
      %p114 = scmp.eq.s32.totalorder %s29, 0
      %p115 = por %p113, %p114
      %p116 = scmp.ne.s32.totalorder %s104, %s105
      %p117 = scmp.eq.s32.totalorder %s30, 3
      %p118 = por %p116, %p117
      %p120 = scmp.ne.s32.totalorder %s105, %s119
      %p121 = scmp.eq.s32.totalorder %s30, 0
      %p122 = por %p120, %p121
      %s124 = sadd.s32 %s123, 1
      %p127 = scmp.eq.s32.totalorder %s24, 3
      %p128 = scmp.ne.s32.totalorder %s123, %s125
      %p129 = scmp.eq.s32.totalorder %s24, 0
      %p130 = por %p128, %p129
      %p131 = scmp.ne.s32.totalorder %s123, %s125
      %p132 = scmp.eq.s32.totalorder %s29, 3
      %p133 = por %p131, %p132
      %p134 = scmp.ne.s32.totalorder %s125, %s126
      %p135 = scmp.eq.s32.totalorder %s29, 0
      %p136 = por %p134, %p135
      %p137 = scmp.ne.s32.totalorder %s125, %s126
      %p138 = scmp.eq.s32.totalorder %s30, 3
      %p139 = por %p137, %p138
      %p141 = scmp.ne.s32.totalorder %s126, %s140
      %p142 = scmp.eq.s32.totalorder %s30, 0
      %p143 = por %p141, %p142
      %s145 = sadd.s32 %s144, 1
      %p148 = scmp.eq.s32.totalorder %s24, 3
      %p149 = scmp.ne.s32.totalorder %s144, %s146
      %p150 = scmp.eq.s32.totalorder %s24, 0
      %p151 = por %p149, %p150
      %p152 = scmp.ne.s32.totalorder %s144, %s146
      %p153 = scmp.eq.s32.totalorder %s29, 3
      %p154 = por %p152, %p153
      %p155 = scmp.ne.s32.totalorder %s146, %s147
      %p156 = scmp.eq.s32.totalorder %s29, 0
      %p157 = por %p155, %p156
      %p158 = scmp.ne.s32.totalorder %s146, %s147
      %p159 = scmp.eq.s32.totalorder %s30, 3
      %p160 = por %p158, %p159
      %p162 = scmp.ne.s32.totalorder %s147, %s161
      %p163 = scmp.eq.s32.totalorder %s30, 0
      %p164 = por %p162, %p163
      %s166 = sadd.s32 %s165, 1
      %p169 = scmp.eq.s32.totalorder %s24, 3
      %p170 = scmp.ne.s32.totalorder %s165, %s167
      %p171 = scmp.eq.s32.totalorder %s24, 0
      %p172 = por %p170, %p171
      %p173 = scmp.ne.s32.totalorder %s165, %s167
      %p174 = scmp.eq.s32.totalorder %s29, 3
      %p175 = por %p173, %p174
      %p176 = scmp.ne.s32.totalorder %s167, %s168
      %p177 = scmp.eq.s32.totalorder %s29, 0
      %p178 = por %p176, %p177
      %p179 = scmp.ne.s32.totalorder %s167, %s168
      %p180 = scmp.eq.s32.totalorder %s30, 3
      %p181 = por %p179, %p180
      %p183 = scmp.ne.s32.totalorder %s168, %s182
      %p184 = scmp.eq.s32.totalorder %s30, 0
      %p185 = por %p183, %p184
      %s187 = sadd.s32 %s186, 1
      %p190 = scmp.eq.s32.totalorder %s24, 3
      %p191 = scmp.ne.s32.totalorder %s186, %s188
      %p192 = scmp.eq.s32.totalorder %s24, 0
      %p193 = por %p191, %p192
      %p194 = scmp.ne.s32.totalorder %s186, %s188
      %p195 = scmp.eq.s32.totalorder %s29, 3
      %p196 = por %p194, %p195
      %p197 = scmp.ne.s32.totalorder %s188, %s189
      %p198 = scmp.eq.s32.totalorder %s29, 0
      %p199 = por %p197, %p198
      %p200 = scmp.ne.s32.totalorder %s188, %s189
      %p201 = scmp.eq.s32.totalorder %s30, 3
      %p202 = por %p200, %p201
      %p204 = scmp.ne.s32.totalorder %s189, %s203
      %p205 = scmp.eq.s32.totalorder %s30, 0
      %p206 = por %p204, %p205
      %s208 = sadd.s32 %s207, 1
      %p211 = scmp.eq.s32.totalorder %s24, 3
      %p212 = scmp.ne.s32.totalorder %s207, %s209
      %p213 = scmp.eq.s32.totalorder %s24, 0
      %p214 = por %p212, %p213
      %p215 = scmp.ne.s32.totalorder %s207, %s209
      %p216 = scmp.eq.s32.totalorder %s29, 3
      %p217 = por %p215, %p216
      %p218 = scmp.ne.s32.totalorder %s209, %s210
      %p219 = scmp.eq.s32.totalorder %s29, 0
      %p220 = por %p218, %p219
      %p221 = scmp.ne.s32.totalorder %s209, %s210
      %p222 = scmp.eq.s32.totalorder %s30, 3
      %p223 = por %p221, %p222
      %p225 = scmp.ne.s32.totalorder %s210, %s224
      %p226 = scmp.eq.s32.totalorder %s30, 0
      %p227 = por %p225, %p226
      %s228 = ssub.s32 %s31, %s43
      %s229 = ssub.s32 %s32, %s39
      %s230 = sor.u32 %s228, %s229
      %p231 = scmp.eq.s32.totalorder %s230, 0
      %s233 = sadd.s32 %s232, 1
      %s234 = scalar_select %p231, %s232, %s233
      %p237 = pneg %p231
      %p238 = scmp.eq.s32.totalorder %s24, 3
      %p239 = por %p237, %p238
      %p240 = scmp.ne.s32.totalorder %s232, %s235
      %p241 = scmp.eq.s32.totalorder %s24, 0
      %p242 = por %p240, %p241
      %p243 = scmp.ne.s32.totalorder %s232, %s235
      %p244 = scmp.eq.s32.totalorder %s29, 3
      %p245 = por %p243, %p244
      %p246 = scmp.ne.s32.totalorder %s235, %s236
      %p247 = scmp.eq.s32.totalorder %s29, 0
      %p248 = por %p246, %p247
      %p249 = scmp.ne.s32.totalorder %s235, %s236
      %p250 = scmp.eq.s32.totalorder %s30, 3
      %p251 = por %p249, %p250
      %p253 = scmp.ne.s32.totalorder %s236, %s252
      %p254 = scmp.eq.s32.totalorder %s30, 0
      %p255 = por %p253, %p254
      %p256 = scmp.le.s32.totalorder 1, %s24
      %p257 = scmp.lt.s32.totalorder %s24, 5
      %p258 = pnand %p256, %p257
      %p259 = pneg %p258
      // Predicated region
      $region9: #{tpu_custom_call.1} parent=5 // pred_check
        _
      $region10: #{tpu_custom_call.1} parent=5 // pred_check_branch
        %261 = sbr.rel (%p258) target = $region12
      $region11: #{tpu_custom_call.1} parent=5 // pred_region
        %s262 = ssub.s32 %s24, 1
        // Predicated region
        $region13: #{tpu_custom_call.1} parent=11 // pred_check
          %p263 = pneg %p115
        $region14: #{tpu_custom_call.1} parent=11 // pred_check_branch
          %265 = sbr.rel (%p263) target = $region16
        $region15: #{tpu_custom_call.1} parent=11 // pred_region
          %s267 = ssub.s32 2048, 2048
          %268 = vsyncadd [#allocation7], %s267
          %s269 = sshll.u32 [#allocation8], 4
          %s270 = int_to_ptr.vmem [resolvable:$true] %s269
          %275 = dma.hbm_to_vmem [thread:$0]  %s2, 2048, %s270, [#allocation7], 128, 128, 8
        $region16: #{tpu_custom_call.1} parent=11 // pred_fallthru
          _
        // Predicated region
        $region17: #{tpu_custom_call.1} parent=11 // pred_check
          %p276 = pneg %p136
        $region18: #{tpu_custom_call.1} parent=11 // pred_check_branch
          %278 = sbr.rel (%p276) target = $region20
        $region19: #{tpu_custom_call.1} parent=11 // pred_region
          _
        $region20: #{tpu_custom_call.1} parent=11 // pred_fallthru
          _
        // Predicated region
        $region21: #{tpu_custom_call.1} parent=11 // pred_check
          %p279 = pneg %p157
        $region22: #{tpu_custom_call.1} parent=11 // pred_check_branch
          %281 = sbr.rel (%p279) target = $region24
        $region23: #{tpu_custom_call.1} parent=11 // pred_region
          %s283 = ssub.s32 1024, 1024
          %284 = vsyncadd [#allocation10], %s283
          %s285 = sshll.u32 [#allocation9], 4
          %s286 = int_to_ptr.vmem [resolvable:$true] %s285
          %291 = dma.hbm_to_vmem [thread:$0]  %s4, 1024, %s286, [#allocation10], 64, 64, 4
        $region24: #{tpu_custom_call.1} parent=11 // pred_fallthru
          _
        // Predicated region
        $region25: #{tpu_custom_call.1} parent=11 // pred_check
          %p292 = pneg %p178
        $region26: #{tpu_custom_call.1} parent=11 // pred_check_branch
          %294 = sbr.rel (%p292) target = $region28
        $region27: #{tpu_custom_call.1} parent=11 // pred_region
          _
        $region28: #{tpu_custom_call.1} parent=11 // pred_fallthru
          _
        // Predicated region
        $region29: #{tpu_custom_call.1} parent=11 // pred_check
          %p295 = pneg %p199
        $region30: #{tpu_custom_call.1} parent=11 // pred_check_branch
          %297 = sbr.rel (%p295) target = $region32
        $region31: #{tpu_custom_call.1} parent=11 // pred_region
          %s299 = ssub.s32 9216, 9216
          %300 = vsyncadd [#allocation10], %s299
          %s301 = sshll.u32 [#allocation11], 4
          %s302 = int_to_ptr.vmem [resolvable:$true] %s301
          %307 = dma.hbm_to_vmem [thread:$0]  %s6, 9216, %s302, [#allocation10], 64, 64, 4
        $region32: #{tpu_custom_call.1} parent=11 // pred_fallthru
          _
        // Predicated region
        $region33: #{tpu_custom_call.1} parent=11 // pred_check
          %p308 = pneg %p220
        $region34: #{tpu_custom_call.1} parent=11 // pred_check_branch
          %310 = sbr.rel (%p308) target = $region36
        $region35: #{tpu_custom_call.1} parent=11 // pred_region
          _
        $region36: #{tpu_custom_call.1} parent=11 // pred_fallthru
          _
      $region12: #{tpu_custom_call.1} parent=5 // pred_fallthru
        _
      %p311 = scmp.lt.s32.totalorder %s24, 4
      // Predicated region
      $region37: #{tpu_custom_call.1} parent=5 // pred_check
        %p312 = pneg %p311
      $region38: #{tpu_custom_call.1} parent=5 // pred_check_branch
        %314 = sbr.rel (%p312) target = $region40
      $region39: #{tpu_custom_call.1} parent=5 // pred_region
        // Predicated region
        $region41: #{tpu_custom_call.1} parent=39 // pred_check
          %p315 = pneg %p58
        $region42: #{tpu_custom_call.1} parent=39 // pred_check_branch
          %317 = sbr.rel (%p315) target = $region44
        $region43: #{tpu_custom_call.1} parent=39 // pred_region
          %s318 = sand.u32 %s48, 1
          %s319 = scalar_lea.sflag [#allocation4], %s318
          %s320 = sand.u32 %s48, 1
          %s321 = smul.addr %s320, 64
          %s322 = scalar_lea.vmem [#allocation3], %s321
          %s323 = smul.u32 8, %s32
          %s325 = ssub.s32 1024, 1024
          %326 = vsyncadd %s319, %s325
          %s327 = smul.addr %s323, 2
          %s328 = smul.addr %s31, 32
          %s329 = sadd.s32 %s327, %s328
          %s330 = smul.addr %s329, 64
          %s331 = scalar_lea.hbm %s0, %s330
          %s332 = sshll.u32 %s322, 4
          %s333 = int_to_ptr.vmem [resolvable:$true] %s332
          %338 = dma.hbm_to_vmem [thread:$0]  %s331, 1024, %s333, %s319, 64, 64, 4
        $region44: #{tpu_custom_call.1} parent=39 // pred_fallthru
          _
        // Predicated region
        $region45: #{tpu_custom_call.1} parent=39 // pred_check
          %p339 = pneg %p88
        $region46: #{tpu_custom_call.1} parent=39 // pred_check_branch
          %341 = sbr.rel (%p339) target = $region48
        $region47: #{tpu_custom_call.1} parent=39 // pred_region
          %s342 = sand.u32 %s24, 1
          %s343 = scalar_lea.sflag [#allocation7], %s342
          %s344 = sand.u32 %s78, 1
          %s345 = smul.addr %s344, 16
          %s346 = scalar_lea.vmem [#allocation6], %s345
          %s347 = smul.u32 %s31, 2
          %s348 = sadd.s32 %s347, %s32
          %s350 = ssub.s32 256, 256
          %351 = vsyncadd %s343, %s350
          %s352 = smul.addr %s348, 4
          %s353 = smul.addr %s352, 64
          %s354 = scalar_lea.hbm %s1, %s353
          %s355 = sshll.u32 %s346, 4
          %s356 = int_to_ptr.vmem [resolvable:$true] %s355
          %361 = dma.hbm_to_vmem [thread:$0]  %s354, 256, %s356, %s343, 64, 64, 4
        $region48: #{tpu_custom_call.1} parent=39 // pred_fallthru
          _
      $region40: #{tpu_custom_call.1} parent=5 // pred_fallthru
        _
      %p362 = scmp.le.s32.totalorder 1, %s24
      %p363 = scmp.lt.s32.totalorder %s24, 5
      %p364 = pnand %p362, %p363
      %p365 = pneg %p364
      // Predicated region
      $region49: #{tpu_custom_call.1} parent=5 // pred_check
        _
      $region50: #{tpu_custom_call.1} parent=5 // pred_check_branch
        %367 = sbr.rel (%p364) target = $region52
      $region51: #{tpu_custom_call.1} parent=5 // pred_region
        %s368 = ssub.s32 %s24, 1
        %s369 = sand.u32 %s51, 1
        %s370 = scalar_lea.sflag [#allocation4], %s369
        %s371 = sand.u32 %s51, 1
        %s372 = smul.addr %s371, 64
        %s373 = scalar_lea.vmem [#allocation3], %s372
        // Predicated region
        $region53: #{tpu_custom_call.1} parent=51 // pred_check
          %p374 = pneg %p64
        $region54: #{tpu_custom_call.1} parent=51 // pred_check_branch
          %376 = sbr.rel (%p374) target = $region56
        $region55: #{tpu_custom_call.1} parent=51 // pred_region
          %377 = dma.done %s370, 1024
        $region56: #{tpu_custom_call.1} parent=51 // pred_fallthru
          _
        %s378 = sand.u32 %s29, 1
        %s379 = scalar_lea.sflag [#allocation7], %s378
        %s380 = sand.u32 %s81, 1
        %s381 = smul.addr %s380, 16
        %s382 = scalar_lea.vmem [#allocation6], %s381
        // Predicated region
        $region57: #{tpu_custom_call.1} parent=51 // pred_check
          %p383 = pneg %p94
        $region58: #{tpu_custom_call.1} parent=51 // pred_check_branch
          %385 = sbr.rel (%p383) target = $region60
        $region59: #{tpu_custom_call.1} parent=51 // pred_region
          %386 = dma.done %s379, 256
        $region60: #{tpu_custom_call.1} parent=51 // pred_fallthru
          _
        // Predicated region
        $region61: #{tpu_custom_call.1} parent=51 // pred_check
          %p387 = pneg %p115
        $region62: #{tpu_custom_call.1} parent=51 // pred_check_branch
          %389 = sbr.rel (%p387) target = $region64
        $region63: #{tpu_custom_call.1} parent=51 // pred_region
          %390 = dma.done [#allocation7], 2048
        $region64: #{tpu_custom_call.1} parent=51 // pred_fallthru
          _
        // Predicated region
        $region65: #{tpu_custom_call.1} parent=51 // pred_check
          %p391 = pneg %p157
        $region66: #{tpu_custom_call.1} parent=51 // pred_check_branch
          %393 = sbr.rel (%p391) target = $region68
        $region67: #{tpu_custom_call.1} parent=51 // pred_region
          %394 = dma.done [#allocation10], 1024
        $region68: #{tpu_custom_call.1} parent=51 // pred_fallthru
          _
        // Predicated region
        $region69: #{tpu_custom_call.1} parent=51 // pred_check
          %p395 = pneg %p199
        $region70: #{tpu_custom_call.1} parent=51 // pred_check_branch
          %397 = sbr.rel (%p395) target = $region72
        $region71: #{tpu_custom_call.1} parent=51 // pred_region
          %398 = dma.done [#allocation10], 9216
        $region72: #{tpu_custom_call.1} parent=51 // pred_fallthru
          _
        %s399 = sand.u32 %s51, 1
        %s400 = scalar_lea.sflag [#allocation4], %s399
        %s401 = sand.u32 %s51, 1
        %s402 = smul.addr %s401, 64
        %s403 = scalar_lea.vmem [#allocation3], %s402
        %p404 = pneg %p64
        %p405 = pneg %p61
        %s406 = sand.u32 %s29, 1
        %s407 = scalar_lea.sflag [#allocation7], %s406
        %s408 = sand.u32 %s81, 1
        %s409 = smul.addr %s408, 16
        %s410 = scalar_lea.vmem [#allocation6], %s409
        %p411 = pneg %p94
        %p412 = pneg %p91
        %p413 = pneg %p115
        %p414 = pneg %p112
        %p415 = pneg %p136
        %p416 = pneg %p133
        %p417 = pneg %p157
        %p418 = pneg %p154
        %p419 = pneg %p178
        %p420 = pneg %p175
        %p421 = pneg %p199
        %p422 = pneg %p196
        %p423 = pneg %p220
        %p424 = pneg %p217
        %p425 = pneg %p248
        %p426 = pneg %p245
        %s427 = sand.u32 %s235, 1
        %s428 = scalar_lea.sflag [#allocation5], %s427
        %s429 = sand.u32 %s235, 1
        %s430 = smul.addr %s429, 128
        %s431 = scalar_lea.vmem [#allocation12], %s430
        %s432 = smul.u32 8, %s34
        %s433 = smul.u32 %s33, 2
        %s434 = sadd.s32 %s433, %s34
        %s435 = smul.u32 8, %s34
        %vm437 = vcmask 1043459
        %vm438 = vsmask.f32 7950
        %vm439 = vmand %vm437, %vm438
        %v440 = vld [vmem:[#allocation2] sm:$0x8]
        %v441 = vsel %vm439, 0, %v440
        %442 = vst [vmem:[#allocation2] sm:$0x8] %v441
        %v443 = vld [vmem:[#allocation2 + $0x10] sm:$0x8]
        %v444 = vsel %vm439, 0, %v443
        %445 = vst [vmem:[#allocation2 + $0x10] sm:$0x8] %v444
        %v446 = vld [vmem:[#allocation2 + $0x20] sm:$0x8]
        %v447 = vsel %vm439, 0, %v446
        %448 = vst [vmem:[#allocation2 + $0x20] sm:$0x8] %v447
        %v449 = vld [vmem:[#allocation2 + $0x30] sm:$0x8]
        %v450 = vsel %vm439, 0, %v449
        %451 = vst [vmem:[#allocation2 + $0x30] sm:$0x8] %v450
        %v452 = vld [vmem:[#allocation2 + $0x40] sm:$0x8]
        %v453 = vsel %vm439, 0, %v452
        %454 = vst [vmem:[#allocation2 + $0x40] sm:$0x8] %v453
        %v455 = vld [vmem:[#allocation2 + $0x50] sm:$0x8]
        %v456 = vsel %vm439, 0, %v455
        %457 = vst [vmem:[#allocation2 + $0x50] sm:$0x8] %v456
        %v458 = vld [vmem:[#allocation2 + $0x60] sm:$0x8]
        %v459 = vsel %vm439, 0, %v458
        %460 = vst [vmem:[#allocation2 + $0x60] sm:$0x8] %v459
        %v461 = vld [vmem:[#allocation2 + $0x70] sm:$0x8]
        %v462 = vsel %vm439, 0, %v461
        %463 = vst [vmem:[#allocation2 + $0x70] sm:$0x8] %v462
        %v464 = vld [vmem:[#allocation2 + $0x80] sm:$0x8]
        %v465 = vsel %vm439, 0, %v464
        %466 = vst [vmem:[#allocation2 + $0x80] sm:$0x8] %v465
        %v467 = vld [vmem:[#allocation2 + $0x90] sm:$0x8]
        %v468 = vsel %vm439, 0, %v467
        %469 = vst [vmem:[#allocation2 + $0x90] sm:$0x8] %v468
        %vm470 = vcmask 1044484
        %vm471 = vsmask.f32 4352
        %vm472 = vmand %vm470, %vm471
        %v473 = vld [vmem:[#allocation2 + $0x8] sm:$0x10]
        %v474 = vsel %vm472, 0, %v473
        %475 = vst [vmem:[#allocation2 + $0x8] sm:$0x10] %v474
        %v476 = vld [vmem:[#allocation2 + $0x18] sm:$0x10]
        %v477 = vsel %vm472, 0, %v476
        %478 = vst [vmem:[#allocation2 + $0x18] sm:$0x10] %v477
        %v479 = vld [vmem:[#allocation2 + $0x28] sm:$0x10]
        %v480 = vsel %vm472, 0, %v479
        %481 = vst [vmem:[#allocation2 + $0x28] sm:$0x10] %v480
        %v482 = vld [vmem:[#allocation2 + $0x38] sm:$0x10]
        %v483 = vsel %vm472, 0, %v482
        %484 = vst [vmem:[#allocation2 + $0x38] sm:$0x10] %v483
        %v485 = vld [vmem:[#allocation2 + $0x48] sm:$0x10]
        %v486 = vsel %vm472, 0, %v485
        %487 = vst [vmem:[#allocation2 + $0x48] sm:$0x10] %v486
        %v488 = vld [vmem:[#allocation2 + $0x58] sm:$0x10]
        %v489 = vsel %vm472, 0, %v488
        %490 = vst [vmem:[#allocation2 + $0x58] sm:$0x10] %v489
        %v491 = vld [vmem:[#allocation2 + $0x68] sm:$0x10]
        %v492 = vsel %vm472, 0, %v491
        %493 = vst [vmem:[#allocation2 + $0x68] sm:$0x10] %v492
        %v494 = vld [vmem:[#allocation2 + $0x78] sm:$0x10]
        %v495 = vsel %vm472, 0, %v494
        %496 = vst [vmem:[#allocation2 + $0x78] sm:$0x10] %v495
        %v497 = vld [vmem:[#allocation2 + $0x88] sm:$0x10]
        %v498 = vsel %vm472, 0, %v497
        %499 = vst [vmem:[#allocation2 + $0x88] sm:$0x10] %v498
        %v500 = vld [vmem:[#allocation2 + $0x98] sm:$0x10]
        %v501 = vsel %vm472, 0, %v500
        %502 = vst [vmem:[#allocation2 + $0x98] sm:$0x10] %v501
        %v503 = vld [vmem:[%s373] sm:$0xf]
        %v504 = vld [vmem:[%s373 + $0x4] sm:$0xf]
        %v505 = vld [vmem:[%s373 + $0x8] sm:$0xf]
        %v506 = vld [vmem:[%s373 + $0xc] sm:$0xf]
        %v507 = vld [vmem:[%s373 + $0x10] sm:$0xf]
        %v508 = vld [vmem:[%s373 + $0x14] sm:$0xf]
        %v509 = vld [vmem:[%s373 + $0x18] sm:$0xf]
        %v510 = vld [vmem:[%s373 + $0x1c] sm:$0xf]
        %v511 = vld [vmem:[%s373 + $0x20] sm:$0xf]
        %v512 = vld [vmem:[%s373 + $0x24] sm:$0xf]
        %v513 = vld [vmem:[%s373 + $0x28] sm:$0xf]
        %v514 = vld [vmem:[%s373 + $0x2c] sm:$0xf]
        %v515 = vld [vmem:[%s373 + $0x30] sm:$0xf]
        %v516 = vld [vmem:[%s373 + $0x34] sm:$0xf]
        %v517 = vld [vmem:[%s373 + $0x38] sm:$0xf]
        %v518 = vld [vmem:[%s373 + $0x3c] sm:$0xf]
        %v519 = vld [vmem:[#allocation8] sm:$0xff]
        %v520 = vld [vmem:[#allocation8 + $0x8] sm:$0xff]
        %v521 = vld [vmem:[#allocation8 + $0x10] sm:$0xff]
        %v522 = vld [vmem:[#allocation8 + $0x18] sm:$0xff]
        %v523 = vld [vmem:[#allocation8 + $0x20] sm:$0xff]
        %v524 = vld [vmem:[#allocation8 + $0x28] sm:$0xff]
        %v525 = vld [vmem:[#allocation8 + $0x30] sm:$0xff]
        %v526 = vld [vmem:[#allocation8 + $0x38] sm:$0xff]
        %v527 = vld [vmem:[#allocation8 + $0x40] sm:$0xff]
        %v528 = vld [vmem:[#allocation8 + $0x48] sm:$0xff]
        %v529 = vld [vmem:[#allocation8 + $0x50] sm:$0xff]
        %v530 = vld [vmem:[#allocation8 + $0x58] sm:$0xff]
        %v531 = vld [vmem:[#allocation8 + $0x60] sm:$0xff]
        %v532 = vld [vmem:[#allocation8 + $0x68] sm:$0xff]
        %v533 = vld [vmem:[#allocation8 + $0x70] sm:$0xff]
        %v534 = vld [vmem:[#allocation8 + $0x78] sm:$0xff]
        %v535 = vld [vmem:[%s3] sm:$0x3]
        %v537 = vlaneseq
        %v538 = vshrl.u32 %v537, 7
        %v539 = vsub.s32 0, %v538
        %v540 = vrot.slane %v535, %v539
        %v541 = vlaneseq
        %v542 = vshrl.u32 %v541, 7
        %v543 = vsub.s32 1, %v542
        %v544 = vrot.slane %v535, %v543
        %v563 = vunpack.c.l.b16 %v503
        %v564 = vunpack.c.l.b16 %v504
        %v565 = vunpack.c.l.b16 %v505
        %v566 = vunpack.c.l.b16 %v506
        %v567 = vunpack.c.l.b16 %v507
        %v568 = vunpack.c.l.b16 %v508
        %v569 = vunpack.c.l.b16 %v509
        %v570 = vunpack.c.l.b16 %v510
        %v571 = vunpack.c.l.b16 %v511
        %v572 = vunpack.c.l.b16 %v512
        %v573 = vunpack.c.l.b16 %v513
        %v574 = vunpack.c.l.b16 %v514
        %v575 = vunpack.c.l.b16 %v515
        %v576 = vunpack.c.l.b16 %v516
        %v577 = vunpack.c.l.b16 %v517
        %v578 = vunpack.c.l.b16 %v518
        %v579 = vpack.c.b16 %v564, %v563
        %v580 = vpack.c.b16 %v566, %v565
        %v581 = vpack.c.b16 %v568, %v567
        %v582 = vpack.c.b16 %v570, %v569
        %v583 = vpack.c.b16 %v572, %v571
        %v584 = vpack.c.b16 %v574, %v573
        %v585 = vpack.c.b16 %v576, %v575
        %v586 = vpack.c.b16 %v578, %v577
        %v611 = vunpack.c.l.b16 %v519
        %v612 = vunpack.c.h.b16 %v519
        %v613 = vunpack.c.l.b16 %v520
        %v614 = vunpack.c.h.b16 %v520
        %v615 = vunpack.c.l.b16 %v521
        %v616 = vunpack.c.h.b16 %v521
        %v617 = vunpack.c.l.b16 %v522
        %v618 = vunpack.c.h.b16 %v522
        %v619 = vunpack.c.l.b16 %v523
        %v620 = vunpack.c.h.b16 %v523
        %v621 = vunpack.c.l.b16 %v524
        %v622 = vunpack.c.h.b16 %v524
        %v623 = vunpack.c.l.b16 %v525
        %v624 = vunpack.c.h.b16 %v525
        %v625 = vunpack.c.l.b16 %v526
        %v626 = vunpack.c.h.b16 %v526
        %v627 = vunpack.c.l.b16 %v527
        %v628 = vunpack.c.h.b16 %v527
        %v629 = vunpack.c.l.b16 %v528
        %v630 = vunpack.c.h.b16 %v528
        %v631 = vunpack.c.l.b16 %v529
        %v632 = vunpack.c.h.b16 %v529
        %v633 = vunpack.c.l.b16 %v530
        %v634 = vunpack.c.h.b16 %v530
        %v635 = vunpack.c.l.b16 %v531
        %v636 = vunpack.c.h.b16 %v531
        %v637 = vunpack.c.l.b16 %v532
        %v638 = vunpack.c.h.b16 %v532
        %v639 = vunpack.c.l.b16 %v533
        %v640 = vunpack.c.h.b16 %v533
        %v641 = vunpack.c.l.b16 %v534
        %v642 = vunpack.c.h.b16 %v534
        %v643 = vpack.c.b16 %v613, %v611
        %v644 = vpack.c.b16 %v614, %v612
        %v645 = vpack.c.b16 %v617, %v615
        %v646 = vpack.c.b16 %v618, %v616
        %v647 = vpack.c.b16 %v621, %v619
        %v648 = vpack.c.b16 %v622, %v620
        %v649 = vpack.c.b16 %v625, %v623
        %v650 = vpack.c.b16 %v626, %v624
        %v651 = vpack.c.b16 %v629, %v627
        %v652 = vpack.c.b16 %v630, %v628
        %v653 = vpack.c.b16 %v633, %v631
        %v654 = vpack.c.b16 %v634, %v632
        %v655 = vpack.c.b16 %v637, %v635
        %v656 = vpack.c.b16 %v638, %v636
        %v657 = vpack.c.b16 %v641, %v639
        %v658 = vpack.c.b16 %v642, %v640
        %675 = vmatprep.subr.bf16.mxu0 %v644
        %676 = vmatpush1.bf16.msra.mxu0 %v643
        %677 = vmatprep.subr.bf16.mxu0 %v646
        %678 = vmatpush1.bf16.msra.mxu0 %v645
        %679 = vmatprep.subr.bf16.mxu0 %v648
        %680 = vmatpush1.bf16.msra.mxu0 %v647
        %681 = vmatprep.subr.bf16.mxu0 %v650
        %682 = vmatpush1.bf16.msra.mxu0 %v649
        %683 = vmatprep.subr.bf16.mxu0 %v652
        %684 = vmatpush1.bf16.msra.mxu0 %v651
        %685 = vmatprep.subr.bf16.mxu0 %v654
        %686 = vmatpush1.bf16.msra.mxu0 %v653
        %687 = vmatprep.subr.bf16.mxu0 %v656
        %688 = vmatpush1.bf16.msra.mxu0 %v655
        %689 = vmatprep.subr.bf16.mxu0 %v658
        %690 = vmatpush1.bf16.msra.mxu0 %v657
        %691 = vmatprep.subr.bf16.mxu0 0
        %692 = vmatpush1.bf16.msra.mxu0 0
        %693 = vmatprep.subr.bf16.mxu0 0
        %694 = vmatpush1.bf16.msra.mxu0 0
        %695 = vmatprep.subr.bf16.mxu0 0
        %696 = vmatpush1.bf16.msra.mxu0 0
        %697 = vmatprep.subr.bf16.mxu0 0
        %698 = vmatpush1.bf16.msra.mxu0 0
        %699 = vmatprep.subr.bf16.mxu0 0
        %700 = vmatpush1.bf16.msra.mxu0 0
        %701 = vmatprep.subr.bf16.mxu0 0
        %702 = vmatpush1.bf16.msra.mxu0 0
        %703 = vmatprep.subr.bf16.mxu0 0
        %704 = vmatpush1.bf16.msra.mxu0 0
        %705 = vmatprep.subr.bf16.mxu0 0
        %706 = vmatpush1.bf16.msra.mxu0 0
        %707 = vmatprep.mubr.bf16.mxu0 0
        %708 = vmatmul.mubr.bf16.gmra.mrb[0].mxu0 %v579
        %v709 = vpop.f32.mrb[0].mxu0
        %v710 = vadd.f32 %v540, %v709
        %v711 = vpop.f32.mrb[0].mxu0
        %v712 = vadd.f32 %v544, %v711
        %v713 = vpop.f32.mrb[0].mxu0
        %v714 = vadd.f32 %v540, %v713
        %v715 = vpop.f32.mrb[0].mxu0
        %v716 = vadd.f32 %v544, %v715
        %717 = vmatprep.mubr.bf16.mxu0 0
        %718 = vmatmul.mubr.bf16.gmra.mrb[0].mxu0 %v580
        %v719 = vpop.f32.mrb[0].mxu0
        %v720 = vadd.f32 %v540, %v719
        %v721 = vpop.f32.mrb[0].mxu0
        %v722 = vadd.f32 %v544, %v721
        %v723 = vpop.f32.mrb[0].mxu0
        %v724 = vadd.f32 %v540, %v723
        %v725 = vpop.f32.mrb[0].mxu0
        %v726 = vadd.f32 %v544, %v725
        %727 = vmatprep.mubr.bf16.mxu0 0
        %728 = vmatmul.mubr.bf16.gmra.mrb[0].mxu0 %v581
        %v729 = vpop.f32.mrb[0].mxu0
        %v730 = vadd.f32 %v540, %v729
        %v731 = vpop.f32.mrb[0].mxu0
        %v732 = vadd.f32 %v544, %v731
        %v733 = vpop.f32.mrb[0].mxu0
        %v734 = vadd.f32 %v540, %v733
        %v735 = vpop.f32.mrb[0].mxu0
        %v736 = vadd.f32 %v544, %v735
        %737 = vmatprep.mubr.bf16.mxu0 0
        %738 = vmatmul.mubr.bf16.gmra.mrb[0].mxu0 %v582
        %v739 = vpop.f32.mrb[0].mxu0
        %v740 = vadd.f32 %v540, %v739
        %v741 = vpop.f32.mrb[0].mxu0
        %v742 = vadd.f32 %v544, %v741
        %v743 = vpop.f32.mrb[0].mxu0
        %v744 = vadd.f32 %v540, %v743
        %v745 = vpop.f32.mrb[0].mxu0
        %v746 = vadd.f32 %v544, %v745
        %747 = vmatprep.mubr.bf16.mxu0 0
        %748 = vmatmul.mubr.bf16.gmra.mrb[0].mxu0 %v583
        %v749 = vpop.f32.mrb[0].mxu0
        %v750 = vadd.f32 %v540, %v749
        %v751 = vpop.f32.mrb[0].mxu0
        %v752 = vadd.f32 %v544, %v751
        %v753 = vpop.f32.mrb[0].mxu0
        %v754 = vadd.f32 %v540, %v753
        %v755 = vpop.f32.mrb[0].mxu0
        %v756 = vadd.f32 %v544, %v755
        %757 = vmatprep.mubr.bf16.mxu0 0
        %758 = vmatmul.mubr.bf16.gmra.mrb[0].mxu0 %v584
        %v759 = vpop.f32.mrb[0].mxu0
        %v760 = vadd.f32 %v540, %v759
        %v761 = vpop.f32.mrb[0].mxu0
        %v762 = vadd.f32 %v544, %v761
        %v763 = vpop.f32.mrb[0].mxu0
        %v764 = vadd.f32 %v540, %v763
        %v765 = vpop.f32.mrb[0].mxu0
        %v766 = vadd.f32 %v544, %v765
        %767 = vmatprep.mubr.bf16.mxu0 0
        %768 = vmatmul.mubr.bf16.gmra.mrb[0].mxu0 %v585
        %v769 = vpop.f32.mrb[0].mxu0
        %v770 = vadd.f32 %v540, %v769
        %v771 = vpop.f32.mrb[0].mxu0
        %v772 = vadd.f32 %v544, %v771
        %v773 = vpop.f32.mrb[0].mxu0
        %v774 = vadd.f32 %v540, %v773
        %v775 = vpop.f32.mrb[0].mxu0
        %v776 = vadd.f32 %v544, %v775
        %777 = vmatprep.mubr.bf16.mxu0 0
        %778 = vmatmul.mubr.bf16.gmra.mrb[0].mxu0 %v586
        %v779 = vpop.f32.mrb[0].mxu0
        %v780 = vadd.f32 %v540, %v779
        %v781 = vpop.f32.mrb[0].mxu0
        %v782 = vadd.f32 %v544, %v781
        %v783 = vpop.f32.mrb[0].mxu0
        %v784 = vadd.f32 %v540, %v783
        %v785 = vpop.f32.mrb[0].mxu0
        %v786 = vadd.f32 %v544, %v785
        %787 = vdwg.mxu0
        %vm788 = vcmp.gt.f32.partialorder %v710, 0.0
        %vm789 = vcmp.gt.f32.partialorder %v714, 0.0
        %vm790 = vcmp.gt.f32.partialorder %v720, 0.0
        %vm791 = vcmp.gt.f32.partialorder %v724, 0.0
        %vm792 = vcmp.gt.f32.partialorder %v730, 0.0
        %vm793 = vcmp.gt.f32.partialorder %v734, 0.0
        %vm794 = vcmp.gt.f32.partialorder %v740, 0.0
        %vm795 = vcmp.gt.f32.partialorder %v744, 0.0
        %vm796 = vcmp.gt.f32.partialorder %v750, 0.0
        %vm797 = vcmp.gt.f32.partialorder %v754, 0.0
        %vm798 = vcmp.gt.f32.partialorder %v760, 0.0
        %vm799 = vcmp.gt.f32.partialorder %v764, 0.0
        %vm800 = vcmp.gt.f32.partialorder %v770, 0.0
        %vm801 = vcmp.gt.f32.partialorder %v774, 0.0
        %vm802 = vcmp.gt.f32.partialorder %v780, 0.0
        %vm803 = vcmp.gt.f32.partialorder %v784, 0.0
        %v804 = vmul.f32 %v710, 0.1
        %v805 = vmul.f32 %v714, 0.1
        %v806 = vmul.f32 %v720, 0.1
        %v807 = vmul.f32 %v724, 0.1
        %v808 = vmul.f32 %v730, 0.1
        %v809 = vmul.f32 %v734, 0.1
        %v810 = vmul.f32 %v740, 0.1
        %v811 = vmul.f32 %v744, 0.1
        %v812 = vmul.f32 %v750, 0.1
        %v813 = vmul.f32 %v754, 0.1
        %v814 = vmul.f32 %v760, 0.1
        %v815 = vmul.f32 %v764, 0.1
        %v816 = vmul.f32 %v770, 0.1
        %v817 = vmul.f32 %v774, 0.1
        %v818 = vmul.f32 %v780, 0.1
        %v819 = vmul.f32 %v784, 0.1
        %v820 = vsel %vm788, %v710, %v804
        %v821 = vsel %vm789, %v714, %v805
        %v822 = vsel %vm790, %v720, %v806
        %v823 = vsel %vm791, %v724, %v807
        %v824 = vsel %vm792, %v730, %v808
        %v825 = vsel %vm793, %v734, %v809
        %v826 = vsel %vm794, %v740, %v810
        %v827 = vsel %vm795, %v744, %v811
        %v828 = vsel %vm796, %v750, %v812
        %v829 = vsel %vm797, %v754, %v813
        %v830 = vsel %vm798, %v760, %v814
        %v831 = vsel %vm799, %v764, %v815
        %v832 = vsel %vm800, %v770, %v816
        %v833 = vsel %vm801, %v774, %v817
        %v834 = vsel %vm802, %v780, %v818
        %v835 = vsel %vm803, %v784, %v819
        %v836 = vpack.c.bf16 %v821, %v820
        %v837 = vpack.c.bf16 %v823, %v822
        %v838 = vpack.c.bf16 %v825, %v824
        %v839 = vpack.c.bf16 %v827, %v826
        %v840 = vpack.c.bf16 %v829, %v828
        %v841 = vpack.c.bf16 %v831, %v830
        %v842 = vpack.c.bf16 %v833, %v832
        %v843 = vpack.c.bf16 %v835, %v834
        %v844 = vld [vmem:[#allocation9] sm:$0xf]
        %v845 = vld [vmem:[#allocation9 + $0x4] sm:$0xf]
        %v846 = vld [vmem:[#allocation9 + $0x8] sm:$0xf]
        %v847 = vld [vmem:[#allocation9 + $0xc] sm:$0xf]
        %v848 = vld [vmem:[#allocation9 + $0x10] sm:$0xf]
        %v849 = vld [vmem:[#allocation9 + $0x14] sm:$0xf]
        %v850 = vld [vmem:[#allocation9 + $0x18] sm:$0xf]
        %v851 = vld [vmem:[#allocation9 + $0x1c] sm:$0xf]
        %v852 = vld [vmem:[#allocation9 + $0x20] sm:$0xf]
        %v853 = vld [vmem:[#allocation9 + $0x24] sm:$0xf]
        %v854 = vld [vmem:[#allocation9 + $0x28] sm:$0xf]
        %v855 = vld [vmem:[#allocation9 + $0x2c] sm:$0xf]
        %v856 = vld [vmem:[#allocation9 + $0x30] sm:$0xf]
        %v857 = vld [vmem:[#allocation9 + $0x34] sm:$0xf]
        %v858 = vld [vmem:[#allocation9 + $0x38] sm:$0xf]
        %v859 = vld [vmem:[#allocation9 + $0x3c] sm:$0xf]
        %v860 = vld [vmem:[%s5] sm:$0x1]
        %v862 = vlaneseq
        %v863 = vshrl.u32 %v862, 7
        %v864 = vsub.s32 0, %v863
        %v865 = vrot.slane %v860, %v864
        %v883 = vunpack.c.l.b16 %v844
        %v884 = vunpack.c.l.b16 %v845
        %v885 = vunpack.c.l.b16 %v846
        %v886 = vunpack.c.l.b16 %v847
        %v887 = vunpack.c.l.b16 %v848
        %v888 = vunpack.c.l.b16 %v849
        %v889 = vunpack.c.l.b16 %v850
        %v890 = vunpack.c.l.b16 %v851
        %v891 = vunpack.c.l.b16 %v852
        %v892 = vunpack.c.l.b16 %v853
        %v893 = vunpack.c.l.b16 %v854
        %v894 = vunpack.c.l.b16 %v855
        %v895 = vunpack.c.l.b16 %v856
        %v896 = vunpack.c.l.b16 %v857
        %v897 = vunpack.c.l.b16 %v858
        %v898 = vunpack.c.l.b16 %v859
        %v899 = vpack.c.b16 %v884, %v883
        %v900 = vpack.c.b16 %v886, %v885
        %v901 = vpack.c.b16 %v888, %v887
        %v902 = vpack.c.b16 %v890, %v889
        %v903 = vpack.c.b16 %v892, %v891
        %v904 = vpack.c.b16 %v894, %v893
        %v905 = vpack.c.b16 %v896, %v895
        %v906 = vpack.c.b16 %v898, %v897
        %915 = vmatprep.subr.bf16.mxu0 0
        %916 = vmatpush1.bf16.msra.mxu0 %v899
        %917 = vmatprep.subr.bf16.mxu0 0
        %918 = vmatpush1.bf16.msra.mxu0 %v900
        %919 = vmatprep.subr.bf16.mxu0 0
        %920 = vmatpush1.bf16.msra.mxu0 %v901
        %921 = vmatprep.subr.bf16.mxu0 0
        %922 = vmatpush1.bf16.msra.mxu0 %v902
        %923 = vmatprep.subr.bf16.mxu0 0
        %924 = vmatpush1.bf16.msra.mxu0 %v903
        %925 = vmatprep.subr.bf16.mxu0 0
        %926 = vmatpush1.bf16.msra.mxu0 %v904
        %927 = vmatprep.subr.bf16.mxu0 0
        %928 = vmatpush1.bf16.msra.mxu0 %v905
        %929 = vmatprep.subr.bf16.mxu0 0
        %930 = vmatpush1.bf16.msra.mxu0 %v906
        %931 = vmatprep.subr.bf16.mxu0 0
        %932 = vmatpush1.bf16.msra.mxu0 0
        %933 = vmatprep.subr.bf16.mxu0 0
        %934 = vmatpush1.bf16.msra.mxu0 0
        %935 = vmatprep.subr.bf16.mxu0 0
        %936 = vmatpush1.bf16.msra.mxu0 0
        %937 = vmatprep.subr.bf16.mxu0 0
        %938 = vmatpush1.bf16.msra.mxu0 0
        %939 = vmatprep.subr.bf16.mxu0 0
        %940 = vmatpush1.bf16.msra.mxu0 0
        %941 = vmatprep.subr.bf16.mxu0 0
        %942 = vmatpush1.bf16.msra.mxu0 0
        %943 = vmatprep.subr.bf16.mxu0 0
        %944 = vmatpush1.bf16.msra.mxu0 0
        %945 = vmatprep.subr.bf16.mxu0 0
        %946 = vmatpush1.bf16.msra.mxu0 0
        %947 = vmatprep.mubr.bf16.mxu0 0
        %948 = vmatmul.mubr.bf16.gmra.mrb[0].mxu0 %v836
        %v949 = vpop.f32.mrb[0].mxu0
        %v950 = vadd.f32 %v865, %v949
        %v951 = vpop.f32.mrb[0].mxu0
        %v952 = vpop.f32.mrb[0].mxu0
        %v953 = vadd.f32 %v865, %v952
        %v954 = vpop.f32.mrb[0].mxu0
        %955 = vmatprep.mubr.bf16.mxu0 0
        %956 = vmatmul.mubr.bf16.gmra.mrb[0].mxu0 %v837
        %v957 = vpop.f32.mrb[0].mxu0
        %v958 = vadd.f32 %v865, %v957
        %v959 = vpop.f32.mrb[0].mxu0
        %v960 = vpop.f32.mrb[0].mxu0
        %v961 = vadd.f32 %v865, %v960
        %v962 = vpop.f32.mrb[0].mxu0
        %963 = vmatprep.mubr.bf16.mxu0 0
        %964 = vmatmul.mubr.bf16.gmra.mrb[0].mxu0 %v838
        %v965 = vpop.f32.mrb[0].mxu0
        %v966 = vadd.f32 %v865, %v965
        %v967 = vpop.f32.mrb[0].mxu0
        %v968 = vpop.f32.mrb[0].mxu0
        %v969 = vadd.f32 %v865, %v968
        %v970 = vpop.f32.mrb[0].mxu0
        %971 = vmatprep.mubr.bf16.mxu0 0
        %972 = vmatmul.mubr.bf16.gmra.mrb[0].mxu0 %v839
        %v973 = vpop.f32.mrb[0].mxu0
        %v974 = vadd.f32 %v865, %v973
        %v975 = vpop.f32.mrb[0].mxu0
        %v976 = vpop.f32.mrb[0].mxu0
        %v977 = vadd.f32 %v865, %v976
        %v978 = vpop.f32.mrb[0].mxu0
        %979 = vmatprep.mubr.bf16.mxu0 0
        %980 = vmatmul.mubr.bf16.gmra.mrb[0].mxu0 %v840
        %v981 = vpop.f32.mrb[0].mxu0
        %v982 = vadd.f32 %v865, %v981
        %v983 = vpop.f32.mrb[0].mxu0
        %v984 = vpop.f32.mrb[0].mxu0
        %v985 = vadd.f32 %v865, %v984
        %v986 = vpop.f32.mrb[0].mxu0
        %987 = vmatprep.mubr.bf16.mxu0 0
        %988 = vmatmul.mubr.bf16.gmra.mrb[0].mxu0 %v841
        %v989 = vpop.f32.mrb[0].mxu0
        %v990 = vadd.f32 %v865, %v989
        %v991 = vpop.f32.mrb[0].mxu0
        %v992 = vpop.f32.mrb[0].mxu0
        %v993 = vadd.f32 %v865, %v992
        %v994 = vpop.f32.mrb[0].mxu0
        %995 = vmatprep.mubr.bf16.mxu0 0
        %996 = vmatmul.mubr.bf16.gmra.mrb[0].mxu0 %v842
        %v997 = vpop.f32.mrb[0].mxu0
        %v998 = vadd.f32 %v865, %v997
        %v999 = vpop.f32.mrb[0].mxu0
        %v1000 = vpop.f32.mrb[0].mxu0
        %v1001 = vadd.f32 %v865, %v1000
        %v1002 = vpop.f32.mrb[0].mxu0
        %1003 = vmatprep.mubr.bf16.mxu0 0
        %1004 = vmatmul.mubr.bf16.gmra.mrb[0].mxu0 %v843
        %v1005 = vpop.f32.mrb[0].mxu0
        %v1006 = vadd.f32 %v865, %v1005
        %v1007 = vpop.f32.mrb[0].mxu0
        %v1008 = vpop.f32.mrb[0].mxu0
        %v1009 = vadd.f32 %v865, %v1008
        %v1010 = vpop.f32.mrb[0].mxu0
        %1011 = vdwg.mxu0
        %vm1012 = vcmp.gt.f32.partialorder %v950, 0.0
        %vm1013 = vcmp.gt.f32.partialorder %v953, 0.0
        %vm1014 = vcmp.gt.f32.partialorder %v958, 0.0
        %vm1015 = vcmp.gt.f32.partialorder %v961, 0.0
        %vm1016 = vcmp.gt.f32.partialorder %v966, 0.0
        %vm1017 = vcmp.gt.f32.partialorder %v969, 0.0
        %vm1018 = vcmp.gt.f32.partialorder %v974, 0.0
        %vm1019 = vcmp.gt.f32.partialorder %v977, 0.0
        %vm1020 = vcmp.gt.f32.partialorder %v982, 0.0
        %vm1021 = vcmp.gt.f32.partialorder %v985, 0.0
        %vm1022 = vcmp.gt.f32.partialorder %v990, 0.0
        %vm1023 = vcmp.gt.f32.partialorder %v993, 0.0
        %vm1024 = vcmp.gt.f32.partialorder %v998, 0.0
        %vm1025 = vcmp.gt.f32.partialorder %v1001, 0.0
        %vm1026 = vcmp.gt.f32.partialorder %v1006, 0.0
        %vm1027 = vcmp.gt.f32.partialorder %v1009, 0.0
        %v1028 = vmul.f32 %v950, 0.1
        %v1029 = vmul.f32 %v953, 0.1
        %v1030 = vmul.f32 %v958, 0.1
        %v1031 = vmul.f32 %v961, 0.1
        %v1032 = vmul.f32 %v966, 0.1
        %v1033 = vmul.f32 %v969, 0.1
        %v1034 = vmul.f32 %v974, 0.1
        %v1035 = vmul.f32 %v977, 0.1
        %v1036 = vmul.f32 %v982, 0.1
        %v1037 = vmul.f32 %v985, 0.1
        %v1038 = vmul.f32 %v990, 0.1
        %v1039 = vmul.f32 %v993, 0.1
        %v1040 = vmul.f32 %v998, 0.1
        %v1041 = vmul.f32 %v1001, 0.1
        %v1042 = vmul.f32 %v1006, 0.1
        %v1043 = vmul.f32 %v1009, 0.1
        %v1044 = vsel %vm1012, %v950, %v1028
        %v1045 = vsel %vm1013, %v953, %v1029
        %v1046 = vsel %vm1014, %v958, %v1030
        %v1047 = vsel %vm1015, %v961, %v1031
        %v1048 = vsel %vm1016, %v966, %v1032
        %v1049 = vsel %vm1017, %v969, %v1033
        %v1050 = vsel %vm1018, %v974, %v1034
        %v1051 = vsel %vm1019, %v977, %v1035
        %v1052 = vsel %vm1020, %v982, %v1036
        %v1053 = vsel %vm1021, %v985, %v1037
        %v1054 = vsel %vm1022, %v990, %v1038
        %v1055 = vsel %vm1023, %v993, %v1039
        %v1056 = vsel %vm1024, %v998, %v1040
        %v1057 = vsel %vm1025, %v1001, %v1041
        %v1058 = vsel %vm1026, %v1006, %v1042
        %v1059 = vsel %vm1027, %v1009, %v1043
        %v1060 = vpack.c.bf16 %v1045, %v1044
        %v1061 = vpack.c.bf16 %v1047, %v1046
        %v1062 = vpack.c.bf16 %v1049, %v1048
        %v1063 = vpack.c.bf16 %v1051, %v1050
        %v1064 = vpack.c.bf16 %v1053, %v1052
        %v1065 = vpack.c.bf16 %v1055, %v1054
        %v1066 = vpack.c.bf16 %v1057, %v1056
        %v1067 = vpack.c.bf16 %v1059, %v1058
        %v1076 = vrot.slane %v1060, 4
        %v1077 = vrot.slane %v1061, 4
        %v1078 = vrot.slane %v1062, 4
        %v1079 = vrot.slane %v1063, 4
        %v1080 = vrot.slane %v1064, 4
        %v1081 = vrot.slane %v1065, 4
        %v1082 = vrot.slane %v1066, 4
        %v1083 = vrot.slane %v1067, 4
        %s1092 = scalar_lea.vmem [#allocation2], 16
        %1093 = vst [vmem:[%s1092] sm:$0xf0] %v1076
        %1094 = vst [vmem:[%s1092 + $0x8] sm:$0xf] %v1076
        %1095 = vst [vmem:[%s1092 + $0x10] sm:$0xf0] %v1077
        %1096 = vst [vmem:[%s1092 + $0x18] sm:$0xf] %v1077
        %1097 = vst [vmem:[%s1092 + $0x20] sm:$0xf0] %v1078
        %1098 = vst [vmem:[%s1092 + $0x28] sm:$0xf] %v1078
        %1099 = vst [vmem:[%s1092 + $0x30] sm:$0xf0] %v1079
        %1100 = vst [vmem:[%s1092 + $0x38] sm:$0xf] %v1079
        %1101 = vst [vmem:[%s1092 + $0x40] sm:$0xf0] %v1080
        %1102 = vst [vmem:[%s1092 + $0x48] sm:$0xf] %v1080
        %1103 = vst [vmem:[%s1092 + $0x50] sm:$0xf0] %v1081
        %1104 = vst [vmem:[%s1092 + $0x58] sm:$0xf] %v1081
        %1105 = vst [vmem:[%s1092 + $0x60] sm:$0xf0] %v1082
        %1106 = vst [vmem:[%s1092 + $0x68] sm:$0xf] %v1082
        %1107 = vst [vmem:[%s1092 + $0x70] sm:$0xf0] %v1083
        %1108 = vst [vmem:[%s1092 + $0x78] sm:$0xf] %v1083
        %v1109 = vld [vmem:[%s382] sm:$0xf]
        %v1110 = vld [vmem:[%s382 + $0x4] sm:$0xf]
        %v1111 = vld [vmem:[%s382 + $0x8] sm:$0xf]
        %v1112 = vld [vmem:[%s382 + $0xc] sm:$0xf]
        %v1113 = vld [vmem:[#allocation8] sm:$0xff]
        %v1114 = vld [vmem:[#allocation8 + $0x8] sm:$0xff]
        %v1115 = vld [vmem:[#allocation8 + $0x10] sm:$0xff]
        %v1116 = vld [vmem:[#allocation8 + $0x18] sm:$0xff]
        %v1117 = vld [vmem:[#allocation8 + $0x20] sm:$0xff]
        %v1118 = vld [vmem:[#allocation8 + $0x28] sm:$0xff]
        %v1119 = vld [vmem:[#allocation8 + $0x30] sm:$0xff]
        %v1120 = vld [vmem:[#allocation8 + $0x38] sm:$0xff]
        %v1121 = vld [vmem:[#allocation8 + $0x40] sm:$0xff]
        %v1122 = vld [vmem:[#allocation8 + $0x48] sm:$0xff]
        %v1123 = vld [vmem:[#allocation8 + $0x50] sm:$0xff]
        %v1124 = vld [vmem:[#allocation8 + $0x58] sm:$0xff]
        %v1125 = vld [vmem:[#allocation8 + $0x60] sm:$0xff]
        %v1126 = vld [vmem:[#allocation8 + $0x68] sm:$0xff]
        %v1127 = vld [vmem:[#allocation8 + $0x70] sm:$0xff]
        %v1128 = vld [vmem:[#allocation8 + $0x78] sm:$0xff]
        %v1129 = vld [vmem:[%s3] sm:$0x3]
        %v1131 = vlaneseq
        %v1132 = vshrl.u32 %v1131, 7
        %v1133 = vsub.s32 0, %v1132
        %v1134 = vrot.slane %v1129, %v1133
        %v1140 = vunpack.c.l.b16 %v1109
        %v1141 = vunpack.c.l.b16 %v1110
        %v1142 = vunpack.c.l.b16 %v1111
        %v1143 = vunpack.c.l.b16 %v1112
        %v1144 = vpack.c.b16 %v1141, %v1140
        %v1145 = vpack.c.b16 %v1143, %v1142
        %v1164 = vunpack.c.l.b16 %v1113
        %v1165 = vunpack.c.h.b16 %v1113
        %v1166 = vunpack.c.l.b16 %v1114
        %v1167 = vunpack.c.h.b16 %v1114
        %v1168 = vunpack.c.l.b16 %v1115
        %v1169 = vunpack.c.h.b16 %v1115
        %v1170 = vunpack.c.l.b16 %v1116
        %v1171 = vunpack.c.h.b16 %v1116
        %v1172 = vunpack.c.l.b16 %v1117
        %v1173 = vunpack.c.h.b16 %v1117
        %v1174 = vunpack.c.l.b16 %v1118
        %v1175 = vunpack.c.h.b16 %v1118
        %v1176 = vunpack.c.l.b16 %v1119
        %v1177 = vunpack.c.h.b16 %v1119
        %v1178 = vunpack.c.l.b16 %v1120
        %v1179 = vunpack.c.h.b16 %v1120
        %v1180 = vunpack.c.l.b16 %v1121
        %v1181 = vunpack.c.h.b16 %v1121
        %v1182 = vunpack.c.l.b16 %v1122
        %v1183 = vunpack.c.h.b16 %v1122
        %v1184 = vunpack.c.l.b16 %v1123
        %v1185 = vunpack.c.h.b16 %v1123
        %v1186 = vunpack.c.l.b16 %v1124
        %v1187 = vunpack.c.h.b16 %v1124
        %v1188 = vunpack.c.l.b16 %v1125
        %v1189 = vunpack.c.h.b16 %v1125
        %v1190 = vunpack.c.l.b16 %v1126
        %v1191 = vunpack.c.h.b16 %v1126
        %v1192 = vunpack.c.l.b16 %v1127
        %v1193 = vunpack.c.h.b16 %v1127
        %v1194 = vunpack.c.l.b16 %v1128
        %v1195 = vunpack.c.h.b16 %v1128
        %v1196 = vpack.c.b16 %v1166, %v1164
        %v1197 = vpack.c.b16 %v1167, %v1165
        %v1198 = vpack.c.b16 %v1170, %v1168
        %v1199 = vpack.c.b16 %v1171, %v1169
        %v1200 = vpack.c.b16 %v1174, %v1172
        %v1201 = vpack.c.b16 %v1175, %v1173
        %v1202 = vpack.c.b16 %v1178, %v1176
        %v1203 = vpack.c.b16 %v1179, %v1177
        %v1204 = vpack.c.b16 %v1182, %v1180
        %v1205 = vpack.c.b16 %v1183, %v1181
        %v1206 = vpack.c.b16 %v1186, %v1184
        %v1207 = vpack.c.b16 %v1187, %v1185
        %v1208 = vpack.c.b16 %v1190, %v1188
        %v1209 = vpack.c.b16 %v1191, %v1189
        %v1210 = vpack.c.b16 %v1194, %v1192
        %v1211 = vpack.c.b16 %v1195, %v1193
        %1228 = vmatprep.subr.bf16.mxu0 %v1197
        %1229 = vmatpush1.bf16.msra.mxu0 %v1196
        %1230 = vmatprep.subr.bf16.mxu0 %v1199
        %1231 = vmatpush1.bf16.msra.mxu0 %v1198
        %1232 = vmatprep.subr.bf16.mxu0 %v1201
        %1233 = vmatpush1.bf16.msra.mxu0 %v1200
        %1234 = vmatprep.subr.bf16.mxu0 %v1203
        %1235 = vmatpush1.bf16.msra.mxu0 %v1202
        %1236 = vmatprep.subr.bf16.mxu0 %v1205
        %1237 = vmatpush1.bf16.msra.mxu0 %v1204
        %1238 = vmatprep.subr.bf16.mxu0 %v1207
        %1239 = vmatpush1.bf16.msra.mxu0 %v1206
        %1240 = vmatprep.subr.bf16.mxu0 %v1209
        %1241 = vmatpush1.bf16.msra.mxu0 %v1208
        %1242 = vmatprep.subr.bf16.mxu0 %v1211
        %1243 = vmatpush1.bf16.msra.mxu0 %v1210
        %1244 = vmatprep.subr.bf16.mxu0 0
        %1245 = vmatpush1.bf16.msra.mxu0 0
        %1246 = vmatprep.subr.bf16.mxu0 0
        %1247 = vmatpush1.bf16.msra.mxu0 0
        %1248 = vmatprep.subr.bf16.mxu0 0
        %1249 = vmatpush1.bf16.msra.mxu0 0
        %1250 = vmatprep.subr.bf16.mxu0 0
        %1251 = vmatpush1.bf16.msra.mxu0 0
        %1252 = vmatprep.subr.bf16.mxu0 0
        %1253 = vmatpush1.bf16.msra.mxu0 0
        %1254 = vmatprep.subr.bf16.mxu0 0
        %1255 = vmatpush1.bf16.msra.mxu0 0
        %1256 = vmatprep.subr.bf16.mxu0 0
        %1257 = vmatpush1.bf16.msra.mxu0 0
        %1258 = vmatprep.subr.bf16.mxu0 0
        %1259 = vmatpush1.bf16.msra.mxu0 0
        %1260 = vmatprep.mubr.bf16.mxu0 0
        %1261 = vmatmul.mubr.bf16.gmra.mrb[0].mxu0 %v1144
        %v1262 = vpop.f32.mrb[0].mxu0
        %v1263 = vadd.f32 %v1134, %v1262
        %v1264 = vpop.f32.mrb[0].mxu0
        %v1265 = vpop.f32.mrb[0].mxu0
        %v1266 = vadd.f32 %v1134, %v1265
        %v1267 = vpop.f32.mrb[0].mxu0
        %1268 = vmatprep.mubr.bf16.mxu0 0
        %1269 = vmatmul.mubr.bf16.gmra.mrb[0].mxu0 %v1145
        %v1270 = vpop.f32.mrb[0].mxu0
        %v1271 = vadd.f32 %v1134, %v1270
        %v1272 = vpop.f32.mrb[0].mxu0
        %v1273 = vpop.f32.mrb[0].mxu0
        %v1274 = vadd.f32 %v1134, %v1273
        %v1275 = vpop.f32.mrb[0].mxu0
        %1276 = vdwg.mxu0
        %vm1277 = vcmp.gt.f32.partialorder %v1263, 0.0
        %vm1278 = vcmp.gt.f32.partialorder %v1266, 0.0
        %vm1279 = vcmp.gt.f32.partialorder %v1271, 0.0
        %vm1280 = vcmp.gt.f32.partialorder %v1274, 0.0
        %v1281 = vmul.f32 %v1263, 0.1
        %v1282 = vmul.f32 %v1266, 0.1
        %v1283 = vmul.f32 %v1271, 0.1
        %v1284 = vmul.f32 %v1274, 0.1
        %v1285 = vsel %vm1277, %v1263, %v1281
        %v1286 = vsel %vm1278, %v1266, %v1282
        %v1287 = vsel %vm1279, %v1271, %v1283
        %v1288 = vsel %vm1280, %v1274, %v1284
        %v1289 = vpack.c.bf16 %v1286, %v1285
        %v1290 = vpack.c.bf16 %v1288, %v1287
        %v1291 = vld [vmem:[#allocation9] sm:$0xf]
        %v1292 = vld [vmem:[#allocation9 + $0x4] sm:$0xf]
        %v1293 = vld [vmem:[#allocation9 + $0x8] sm:$0xf]
        %v1294 = vld [vmem:[#allocation9 + $0xc] sm:$0xf]
        %v1295 = vld [vmem:[#allocation9 + $0x10] sm:$0xf]
        %v1296 = vld [vmem:[#allocation9 + $0x14] sm:$0xf]
        %v1297 = vld [vmem:[#allocation9 + $0x18] sm:$0xf]
        %v1298 = vld [vmem:[#allocation9 + $0x1c] sm:$0xf]
        %v1299 = vld [vmem:[#allocation9 + $0x20] sm:$0xf]
        %v1300 = vld [vmem:[#allocation9 + $0x24] sm:$0xf]
        %v1301 = vld [vmem:[#allocation9 + $0x28] sm:$0xf]
        %v1302 = vld [vmem:[#allocation9 + $0x2c] sm:$0xf]
        %v1303 = vld [vmem:[#allocation9 + $0x30] sm:$0xf]
        %v1304 = vld [vmem:[#allocation9 + $0x34] sm:$0xf]
        %v1305 = vld [vmem:[#allocation9 + $0x38] sm:$0xf]
        %v1306 = vld [vmem:[#allocation9 + $0x3c] sm:$0xf]
        %v1307 = vld [vmem:[%s5] sm:$0x1]
        %v1309 = vlaneseq
        %v1310 = vshrl.u32 %v1309, 7
        %v1311 = vsub.s32 0, %v1310
        %v1312 = vrot.slane %v1307, %v1311
        %v1330 = vunpack.c.l.b16 %v1291
        %v1331 = vunpack.c.l.b16 %v1292
        %v1332 = vunpack.c.l.b16 %v1293
        %v1333 = vunpack.c.l.b16 %v1294
        %v1334 = vunpack.c.l.b16 %v1295
        %v1335 = vunpack.c.l.b16 %v1296
        %v1336 = vunpack.c.l.b16 %v1297
        %v1337 = vunpack.c.l.b16 %v1298
        %v1338 = vunpack.c.l.b16 %v1299
        %v1339 = vunpack.c.l.b16 %v1300
        %v1340 = vunpack.c.l.b16 %v1301
        %v1341 = vunpack.c.l.b16 %v1302
        %v1342 = vunpack.c.l.b16 %v1303
        %v1343 = vunpack.c.l.b16 %v1304
        %v1344 = vunpack.c.l.b16 %v1305
        %v1345 = vunpack.c.l.b16 %v1306
        %v1346 = vpack.c.b16 %v1331, %v1330
        %v1347 = vpack.c.b16 %v1333, %v1332
        %v1348 = vpack.c.b16 %v1335, %v1334
        %v1349 = vpack.c.b16 %v1337, %v1336
        %v1350 = vpack.c.b16 %v1339, %v1338
        %v1351 = vpack.c.b16 %v1341, %v1340
        %v1352 = vpack.c.b16 %v1343, %v1342
        %v1353 = vpack.c.b16 %v1345, %v1344
        %1362 = vmatprep.subr.bf16.mxu0 0
        %1363 = vmatpush1.bf16.msra.mxu0 %v1346
        %1364 = vmatprep.subr.bf16.mxu0 0
        %1365 = vmatpush1.bf16.msra.mxu0 %v1347
        %1366 = vmatprep.subr.bf16.mxu0 0
        %1367 = vmatpush1.bf16.msra.mxu0 %v1348
        %1368 = vmatprep.subr.bf16.mxu0 0
        %1369 = vmatpush1.bf16.msra.mxu0 %v1349
        %1370 = vmatprep.subr.bf16.mxu0 0
        %1371 = vmatpush1.bf16.msra.mxu0 %v1350
        %1372 = vmatprep.subr.bf16.mxu0 0
        %1373 = vmatpush1.bf16.msra.mxu0 %v1351
        %1374 = vmatprep.subr.bf16.mxu0 0
        %1375 = vmatpush1.bf16.msra.mxu0 %v1352
        %1376 = vmatprep.subr.bf16.mxu0 0
        %1377 = vmatpush1.bf16.msra.mxu0 %v1353
        %1378 = vmatprep.subr.bf16.mxu0 0
        %1379 = vmatpush1.bf16.msra.mxu0 0
        %1380 = vmatprep.subr.bf16.mxu0 0
        %1381 = vmatpush1.bf16.msra.mxu0 0
        %1382 = vmatprep.subr.bf16.mxu0 0
        %1383 = vmatpush1.bf16.msra.mxu0 0
        %1384 = vmatprep.subr.bf16.mxu0 0
        %1385 = vmatpush1.bf16.msra.mxu0 0
        %1386 = vmatprep.subr.bf16.mxu0 0
        %1387 = vmatpush1.bf16.msra.mxu0 0
        %1388 = vmatprep.subr.bf16.mxu0 0
        %1389 = vmatpush1.bf16.msra.mxu0 0
        %1390 = vmatprep.subr.bf16.mxu0 0
        %1391 = vmatpush1.bf16.msra.mxu0 0
        %1392 = vmatprep.subr.bf16.mxu0 0
        %1393 = vmatpush1.bf16.msra.mxu0 0
        %1394 = vmatprep.mubr.bf16.mxu0 0
        %1395 = vmatmul.mubr.bf16.gmra.mrb[0].mxu0 %v1289
        %v1396 = vpop.f32.mrb[0].mxu0
        %v1397 = vadd.f32 %v1312, %v1396
        %v1398 = vpop.f32.mrb[0].mxu0
        %v1399 = vpop.f32.mrb[0].mxu0
        %v1400 = vadd.f32 %v1312, %v1399
        %v1401 = vpop.f32.mrb[0].mxu0
        %1402 = vmatprep.mubr.bf16.mxu0 0
        %1403 = vmatmul.mubr.bf16.gmra.mrb[0].mxu0 %v1290
        %v1404 = vpop.f32.mrb[0].mxu0
        %v1405 = vadd.f32 %v1312, %v1404
        %v1406 = vpop.f32.mrb[0].mxu0
        %v1407 = vpop.f32.mrb[0].mxu0
        %v1408 = vadd.f32 %v1312, %v1407
        %v1409 = vpop.f32.mrb[0].mxu0
        %1410 = vdwg.mxu0
        %vm1411 = vcmp.gt.f32.partialorder %v1397, 0.0
        %vm1412 = vcmp.gt.f32.partialorder %v1400, 0.0
        %vm1413 = vcmp.gt.f32.partialorder %v1405, 0.0
        %vm1414 = vcmp.gt.f32.partialorder %v1408, 0.0
        %v1415 = vmul.f32 %v1397, 0.1
        %v1416 = vmul.f32 %v1400, 0.1
        %v1417 = vmul.f32 %v1405, 0.1
        %v1418 = vmul.f32 %v1408, 0.1
        %v1419 = vsel %vm1411, %v1397, %v1415
        %v1420 = vsel %vm1412, %v1400, %v1416
        %v1421 = vsel %vm1413, %v1405, %v1417
        %v1422 = vsel %vm1414, %v1408, %v1418
        %v1423 = vlaneseq
        %v1424 = vshrl.u32 %v1423, 7
        %v1425 = vadd.s32 %v1424, 8
        %v1426 = vadd.s32 %v1424, 16
        %v1427 = vadd.s32 %v1424, 24
        %vm1428 = vcmp.lt.s32.totalorder %v1424, 16
        %vm1429 = vcmp.lt.s32.totalorder %v1425, 16
        %vm1430 = vcmp.lt.s32.totalorder %v1426, 16
        %vm1431 = vcmp.lt.s32.totalorder %v1427, 16
        %p1432 = scmp.gt.s32.totalorder %s34, 0
        %s1433 = scalar_select %p1432, 1, 0
        %v1434 = vstv %s1433
        %vm1435 = vcmp.eq.s32.totalorder %v1434, 1
        %vm1436 = vmand %vm1428, %vm1435
        %vm1437 = vmand %vm1429, %vm1435
        %vm1438 = vmand %vm1430, %vm1435
        %vm1439 = vmand %vm1431, %vm1435
        %vm1440 = vmxor %vm1428, 1
        %vm1441 = vmxor %vm1429, 1
        %vm1442 = vmxor %vm1430, 1
        %vm1443 = vmxor %vm1431, 1
        %s1444 = sadd.s32 %s34, 1
        %s1445 = smul.u32 %s1444, 8
        %p1446 = scmp.lt.s32.totalorder %s1445, 16
        %s1447 = scalar_select %p1446, 1, 0
        %v1448 = vstv %s1447
        %vm1449 = vcmp.eq.s32.totalorder %v1448, 1
        %vm1450 = vmand %vm1440, %vm1449
        %vm1451 = vmand %vm1441, %vm1449
        %vm1452 = vmand %vm1442, %vm1449
        %vm1453 = vmand %vm1443, %vm1449
        %vm1454 = vmor %vm1436, %vm1450
        %vm1455 = vmor %vm1437, %vm1451
        %vm1456 = vmor %vm1438, %vm1452
        %vm1457 = vmor %vm1439, %vm1453
        %v1458 = vsel %vm1454, 1, 0
        %v1459 = vsel %vm1455, 1, 0
        %v1460 = vsel %vm1456, 1, 0
        %v1461 = vsel %vm1457, 1, 0
        %vm1462 = vcmp.eq.s32.totalorder %v1458, 1
        %vm1463 = vcmp.eq.s32.totalorder %v1459, 1
        %vm1464 = vcmp.eq.s32.totalorder %v1460, 1
        %vm1465 = vcmp.eq.s32.totalorder %v1461, 1
        %v1466 = vsel %vm1462, %v1419, 0.0
        %v1467 = vsel %vm1463, %v1420, 0.0
        %v1468 = vsel %vm1464, %v1421, 0.0
        %v1469 = vsel %vm1465, %v1422, 0.0
        %v1470 = vpack.c.bf16 %v1467, %v1466
        %v1471 = vpack.c.bf16 %v1469, %v1468
        %v1473 = vrot.slane %v1470, 4
        %1475 = vst [vmem:[#allocation2] sm:$0xf0] %v1473
        %1476 = vst [vmem:[#allocation2 + $0x8] sm:$0xf] %v1473
        %v1478 = vrot.slane %v1471, 4
        %s1480 = scalar_lea.vmem [#allocation2], 144
        %1481 = vst [vmem:[%s1480] sm:$0xf0] %v1478
        %1482 = vst [vmem:[%s1480 + $0x8] sm:$0xf] %v1478
        %v1483 = vld [vmem:[#allocation2] sm:$0xf8]
        %v1484 = vld [vmem:[#allocation2 + $0x8] sm:$0xf]
        %v1485 = vld [vmem:[#allocation2 + $0x10] sm:$0xf8]
        %v1486 = vld [vmem:[#allocation2 + $0x18] sm:$0xf]
        %v1487 = vld [vmem:[#allocation2 + $0x20] sm:$0xf8]
        %v1488 = vld [vmem:[#allocation2 + $0x28] sm:$0xf]
        %v1489 = vld [vmem:[#allocation2 + $0x30] sm:$0xf8]
        %v1490 = vld [vmem:[#allocation2 + $0x38] sm:$0xf]
        %v1491 = vld [vmem:[#allocation2 + $0x40] sm:$0xf8]
        %v1492 = vld [vmem:[#allocation2 + $0x48] sm:$0xf]
        %v1493 = vld [vmem:[#allocation2 + $0x50] sm:$0xf8]
        %v1494 = vld [vmem:[#allocation2 + $0x58] sm:$0xf]
        %v1495 = vld [vmem:[#allocation2 + $0x60] sm:$0xf8]
        %v1496 = vld [vmem:[#allocation2 + $0x68] sm:$0xf]
        %v1497 = vld [vmem:[#allocation2 + $0x70] sm:$0xf8]
        %v1498 = vld [vmem:[#allocation2 + $0x78] sm:$0xf]
        %v1500 = vshrl.u32 %v1483, 16
        %v1502 = vrot.slane %v1500, 3
        %v1503 = vshll.u32 %v1483, 16
        %v1505 = vrot.slane %v1503, 4
        %v1506 = vor.u32 %v1502, %v1505
        %v1508 = vshrl.u32 %v1484, 16
        %v1510 = vrot.slane %v1508, 3
        %v1511 = vshll.u32 %v1484, 16
        %v1513 = vrot.slane %v1511, 4
        %v1514 = vor.u32 %v1510, %v1513
        %v1515 = vsel %vm471, %v1506, %v1514
        %v1517 = vshrl.u32 %v1485, 16
        %v1519 = vrot.slane %v1517, 3
        %v1520 = vshll.u32 %v1485, 16
        %v1522 = vrot.slane %v1520, 4
        %v1523 = vor.u32 %v1519, %v1522
        %v1525 = vshrl.u32 %v1486, 16
        %v1527 = vrot.slane %v1525, 3
        %v1528 = vshll.u32 %v1486, 16
        %v1530 = vrot.slane %v1528, 4
        %v1531 = vor.u32 %v1527, %v1530
        %v1532 = vsel %vm471, %v1523, %v1531
        %v1534 = vshrl.u32 %v1487, 16
        %v1536 = vrot.slane %v1534, 3
        %v1537 = vshll.u32 %v1487, 16
        %v1539 = vrot.slane %v1537, 4
        %v1540 = vor.u32 %v1536, %v1539
        %v1542 = vshrl.u32 %v1488, 16
        %v1544 = vrot.slane %v1542, 3
        %v1545 = vshll.u32 %v1488, 16
        %v1547 = vrot.slane %v1545, 4
        %v1548 = vor.u32 %v1544, %v1547
        %v1549 = vsel %vm471, %v1540, %v1548
        %v1551 = vshrl.u32 %v1489, 16
        %v1553 = vrot.slane %v1551, 3
        %v1554 = vshll.u32 %v1489, 16
        %v1556 = vrot.slane %v1554, 4
        %v1557 = vor.u32 %v1553, %v1556
        %v1559 = vshrl.u32 %v1490, 16
        %v1561 = vrot.slane %v1559, 3
        %v1562 = vshll.u32 %v1490, 16
        %v1564 = vrot.slane %v1562, 4
        %v1565 = vor.u32 %v1561, %v1564
        %v1566 = vsel %vm471, %v1557, %v1565
        %v1568 = vshrl.u32 %v1491, 16
        %v1570 = vrot.slane %v1568, 3
        %v1571 = vshll.u32 %v1491, 16
        %v1573 = vrot.slane %v1571, 4
        %v1574 = vor.u32 %v1570, %v1573
        %v1576 = vshrl.u32 %v1492, 16
        %v1578 = vrot.slane %v1576, 3
        %v1579 = vshll.u32 %v1492, 16
        %v1581 = vrot.slane %v1579, 4
        %v1582 = vor.u32 %v1578, %v1581
        %v1583 = vsel %vm471, %v1574, %v1582
        %v1585 = vshrl.u32 %v1493, 16
        %v1587 = vrot.slane %v1585, 3
        %v1588 = vshll.u32 %v1493, 16
        %v1590 = vrot.slane %v1588, 4
        %v1591 = vor.u32 %v1587, %v1590
        %v1593 = vshrl.u32 %v1494, 16
        %v1595 = vrot.slane %v1593, 3
        %v1596 = vshll.u32 %v1494, 16
        %v1598 = vrot.slane %v1596, 4
        %v1599 = vor.u32 %v1595, %v1598
        %v1600 = vsel %vm471, %v1591, %v1599
        %v1602 = vshrl.u32 %v1495, 16
        %v1604 = vrot.slane %v1602, 3
        %v1605 = vshll.u32 %v1495, 16
        %v1607 = vrot.slane %v1605, 4
        %v1608 = vor.u32 %v1604, %v1607
        %v1610 = vshrl.u32 %v1496, 16
        %v1612 = vrot.slane %v1610, 3
        %v1613 = vshll.u32 %v1496, 16
        %v1615 = vrot.slane %v1613, 4
        %v1616 = vor.u32 %v1612, %v1615
        %v1617 = vsel %vm471, %v1608, %v1616
        %v1619 = vshrl.u32 %v1497, 16
        %v1621 = vrot.slane %v1619, 3
        %v1622 = vshll.u32 %v1497, 16
        %v1624 = vrot.slane %v1622, 4
        %v1625 = vor.u32 %v1621, %v1624
        %v1627 = vshrl.u32 %v1498, 16
        %v1629 = vrot.slane %v1627, 3
        %v1630 = vshll.u32 %v1498, 16
        %v1632 = vrot.slane %v1630, 4
        %v1633 = vor.u32 %v1629, %v1632
        %v1634 = vsel %vm471, %v1625, %v1633
        %v1643 = vld [vmem:[#allocation11] sm:$0xf]
        %v1644 = vld [vmem:[#allocation11 + $0x4] sm:$0xf]
        %v1645 = vld [vmem:[#allocation11 + $0x8] sm:$0xf]
        %v1646 = vld [vmem:[#allocation11 + $0xc] sm:$0xf]
        %v1647 = vld [vmem:[#allocation11 + $0x10] sm:$0xf]
        %v1648 = vld [vmem:[#allocation11 + $0x14] sm:$0xf]
        %v1649 = vld [vmem:[#allocation11 + $0x18] sm:$0xf]
        %v1650 = vld [vmem:[#allocation11 + $0x1c] sm:$0xf]
        %v1651 = vld [vmem:[#allocation11 + $0x20] sm:$0xf]
        %v1652 = vld [vmem:[#allocation11 + $0x24] sm:$0xf]
        %v1653 = vld [vmem:[#allocation11 + $0x28] sm:$0xf]
        %v1654 = vld [vmem:[#allocation11 + $0x2c] sm:$0xf]
        %v1655 = vld [vmem:[#allocation11 + $0x30] sm:$0xf]
        %v1656 = vld [vmem:[#allocation11 + $0x34] sm:$0xf]
        %v1657 = vld [vmem:[#allocation11 + $0x38] sm:$0xf]
        %v1658 = vld [vmem:[#allocation11 + $0x3c] sm:$0xf]
        %v1659 = vld [vmem:[#allocation2] sm:$0xf0]
        %v1660 = vld [vmem:[#allocation2 + $0x10] sm:$0xf0]
        %v1661 = vld [vmem:[#allocation2 + $0x20] sm:$0xf0]
        %v1662 = vld [vmem:[#allocation2 + $0x30] sm:$0xf0]
        %v1663 = vld [vmem:[#allocation2 + $0x40] sm:$0xf0]
        %v1664 = vld [vmem:[#allocation2 + $0x50] sm:$0xf0]
        %v1665 = vld [vmem:[#allocation2 + $0x60] sm:$0xf0]
        %v1666 = vld [vmem:[#allocation2 + $0x70] sm:$0xf0]
        %vm1683 = vcmask 1043456
        %v1684 = vrot.slane %v1659, 4
        %v1685 = vrot.slane %v1484, 4
        %v1686 = vsel %vm1683, %v1684, %v1685
        %v1687 = vrot.slane %v1660, 4
        %v1688 = vrot.slane %v1486, 4
        %v1689 = vsel %vm1683, %v1687, %v1688
        %v1690 = vrot.slane %v1661, 4
        %v1691 = vrot.slane %v1488, 4
        %v1692 = vsel %vm1683, %v1690, %v1691
        %v1693 = vrot.slane %v1662, 4
        %v1694 = vrot.slane %v1490, 4
        %v1695 = vsel %vm1683, %v1693, %v1694
        %v1696 = vrot.slane %v1663, 4
        %v1697 = vrot.slane %v1492, 4
        %v1698 = vsel %vm1683, %v1696, %v1697
        %v1699 = vrot.slane %v1664, 4
        %v1700 = vrot.slane %v1494, 4
        %v1701 = vsel %vm1683, %v1699, %v1700
        %v1702 = vrot.slane %v1665, 4
        %v1703 = vrot.slane %v1496, 4
        %v1704 = vsel %vm1683, %v1702, %v1703
        %v1705 = vrot.slane %v1666, 4
        %v1706 = vrot.slane %v1498, 4
        %v1707 = vsel %vm1683, %v1705, %v1706
        %s1716 = scalar_lea.vmem [#allocation11], 64
        %v1717 = vld [vmem:[%s1716] sm:$0xf]
        %v1718 = vld [vmem:[%s1716 + $0x4] sm:$0xf]
        %v1719 = vld [vmem:[%s1716 + $0x8] sm:$0xf]
        %v1720 = vld [vmem:[%s1716 + $0xc] sm:$0xf]
        %v1721 = vld [vmem:[%s1716 + $0x10] sm:$0xf]
        %v1722 = vld [vmem:[%s1716 + $0x14] sm:$0xf]
        %v1723 = vld [vmem:[%s1716 + $0x18] sm:$0xf]
        %v1724 = vld [vmem:[%s1716 + $0x1c] sm:$0xf]
        %v1725 = vld [vmem:[%s1716 + $0x20] sm:$0xf]
        %v1726 = vld [vmem:[%s1716 + $0x24] sm:$0xf]
        %v1727 = vld [vmem:[%s1716 + $0x28] sm:$0xf]
        %v1728 = vld [vmem:[%s1716 + $0x2c] sm:$0xf]
        %v1729 = vld [vmem:[%s1716 + $0x30] sm:$0xf]
        %v1730 = vld [vmem:[%s1716 + $0x34] sm:$0xf]
        %v1731 = vld [vmem:[%s1716 + $0x38] sm:$0xf]
        %v1732 = vld [vmem:[%s1716 + $0x3c] sm:$0xf]
        %v1749 = vunpack.c.l.b16 %v1717
        %v1750 = vunpack.c.l.b16 %v1718
        %v1751 = vunpack.c.l.b16 %v1719
        %v1752 = vunpack.c.l.b16 %v1720
        %v1753 = vunpack.c.l.b16 %v1721
        %v1754 = vunpack.c.l.b16 %v1722
        %v1755 = vunpack.c.l.b16 %v1723
        %v1756 = vunpack.c.l.b16 %v1724
        %v1757 = vunpack.c.l.b16 %v1725
        %v1758 = vunpack.c.l.b16 %v1726
        %v1759 = vunpack.c.l.b16 %v1727
        %v1760 = vunpack.c.l.b16 %v1728
        %v1761 = vunpack.c.l.b16 %v1729
        %v1762 = vunpack.c.l.b16 %v1730
        %v1763 = vunpack.c.l.b16 %v1731
        %v1764 = vunpack.c.l.b16 %v1732
        %v1765 = vpack.c.b16 %v1750, %v1749
        %v1766 = vpack.c.b16 %v1752, %v1751
        %v1767 = vpack.c.b16 %v1754, %v1753
        %v1768 = vpack.c.b16 %v1756, %v1755
        %v1769 = vpack.c.b16 %v1758, %v1757
        %v1770 = vpack.c.b16 %v1760, %v1759
        %v1771 = vpack.c.b16 %v1762, %v1761
        %v1772 = vpack.c.b16 %v1764, %v1763
        %1781 = vmatprep.subr.bf16.mxu0 0
        %1782 = vmatpush1.bf16.msra.mxu0 %v1765
        %1783 = vmatprep.subr.bf16.mxu0 0
        %1784 = vmatpush1.bf16.msra.mxu0 %v1766
        %1785 = vmatprep.subr.bf16.mxu0 0
        %1786 = vmatpush1.bf16.msra.mxu0 %v1767
        %1787 = vmatprep.subr.bf16.mxu0 0
        %1788 = vmatpush1.bf16.msra.mxu0 %v1768
        %1789 = vmatprep.subr.bf16.mxu0 0
        %1790 = vmatpush1.bf16.msra.mxu0 %v1769
        %1791 = vmatprep.subr.bf16.mxu0 0
        %1792 = vmatpush1.bf16.msra.mxu0 %v1770
        %1793 = vmatprep.subr.bf16.mxu0 0
        %1794 = vmatpush1.bf16.msra.mxu0 %v1771
        %1795 = vmatprep.subr.bf16.mxu0 0
        %1796 = vmatpush1.bf16.msra.mxu0 %v1772
        %1797 = vmatprep.subr.bf16.mxu0 0
        %1798 = vmatpush1.bf16.msra.mxu0 0
        %1799 = vmatprep.subr.bf16.mxu0 0
        %1800 = vmatpush1.bf16.msra.mxu0 0
        %1801 = vmatprep.subr.bf16.mxu0 0
        %1802 = vmatpush1.bf16.msra.mxu0 0
        %1803 = vmatprep.subr.bf16.mxu0 0
        %1804 = vmatpush1.bf16.msra.mxu0 0
        %1805 = vmatprep.subr.bf16.mxu0 0
        %1806 = vmatpush1.bf16.msra.mxu0 0
        %1807 = vmatprep.subr.bf16.mxu0 0
        %1808 = vmatpush1.bf16.msra.mxu0 0
        %1809 = vmatprep.subr.bf16.mxu0 0
        %1810 = vmatpush1.bf16.msra.mxu0 0
        %1811 = vmatprep.subr.bf16.mxu0 0
        %1812 = vmatpush1.bf16.msra.mxu0 0
        %1813 = vmatprep.mubr.bf16.mxu0 0
        %1814 = vmatmul.mubr.bf16.gmra.mrb[0].mxu0 %v1686
        %v1815 = vpop.f32.mrb[0].mxu0
        %v1816 = vadd.f32 0.0, %v1815
        %v1817 = vpop.f32.mrb[0].mxu0
        %v1818 = vpop.f32.mrb[0].mxu0
        %v1819 = vadd.f32 0.0, %v1818
        %v1820 = vpop.f32.mrb[0].mxu0
        %1821 = vmatprep.mubr.bf16.mxu0 0
        %1822 = vmatmul.mubr.bf16.gmra.mrb[0].mxu0 %v1689
        %v1823 = vpop.f32.mrb[0].mxu0
        %v1824 = vadd.f32 0.0, %v1823
        %v1825 = vpop.f32.mrb[0].mxu0
        %v1826 = vpop.f32.mrb[0].mxu0
        %v1827 = vadd.f32 0.0, %v1826
        %v1828 = vpop.f32.mrb[0].mxu0
        %1829 = vmatprep.mubr.bf16.mxu0 0
        %1830 = vmatmul.mubr.bf16.gmra.mrb[0].mxu0 %v1692
        %v1831 = vpop.f32.mrb[0].mxu0
        %v1832 = vadd.f32 0.0, %v1831
        %v1833 = vpop.f32.mrb[0].mxu0
        %v1834 = vpop.f32.mrb[0].mxu0
        %v1835 = vadd.f32 0.0, %v1834
        %v1836 = vpop.f32.mrb[0].mxu0
        %1837 = vmatprep.mubr.bf16.mxu0 0
        %1838 = vmatmul.mubr.bf16.gmra.mrb[0].mxu0 %v1695
        %v1839 = vpop.f32.mrb[0].mxu0
        %v1840 = vadd.f32 0.0, %v1839
        %v1841 = vpop.f32.mrb[0].mxu0
        %v1842 = vpop.f32.mrb[0].mxu0
        %v1843 = vadd.f32 0.0, %v1842
        %v1844 = vpop.f32.mrb[0].mxu0
        %1845 = vmatprep.mubr.bf16.mxu0 0
        %1846 = vmatmul.mubr.bf16.gmra.mrb[0].mxu0 %v1698
        %v1847 = vpop.f32.mrb[0].mxu0
        %v1848 = vadd.f32 0.0, %v1847
        %v1849 = vpop.f32.mrb[0].mxu0
        %v1850 = vpop.f32.mrb[0].mxu0
        %v1851 = vadd.f32 0.0, %v1850
        %v1852 = vpop.f32.mrb[0].mxu0
        %1853 = vmatprep.mubr.bf16.mxu0 0
        %1854 = vmatmul.mubr.bf16.gmra.mrb[0].mxu0 %v1701
        %v1855 = vpop.f32.mrb[0].mxu0
        %v1856 = vadd.f32 0.0, %v1855
        %v1857 = vpop.f32.mrb[0].mxu0
        %v1858 = vpop.f32.mrb[0].mxu0
        %v1859 = vadd.f32 0.0, %v1858
        %v1860 = vpop.f32.mrb[0].mxu0
        %1861 = vmatprep.mubr.bf16.mxu0 0
        %1862 = vmatmul.mubr.bf16.gmra.mrb[0].mxu0 %v1704
        %v1863 = vpop.f32.mrb[0].mxu0
        %v1864 = vadd.f32 0.0, %v1863
        %v1865 = vpop.f32.mrb[0].mxu0
        %v1866 = vpop.f32.mrb[0].mxu0
        %v1867 = vadd.f32 0.0, %v1866
        %v1868 = vpop.f32.mrb[0].mxu0
        %1869 = vmatprep.mubr.bf16.mxu0 0
        %1870 = vmatmul.mubr.bf16.gmra.mrb[0].mxu0 %v1707
        %v1871 = vpop.f32.mrb[0].mxu0
        %v1872 = vadd.f32 0.0, %v1871
        %v1873 = vpop.f32.mrb[0].mxu0
        %v1874 = vpop.f32.mrb[0].mxu0
        %v1875 = vadd.f32 0.0, %v1874
        %v1876 = vpop.f32.mrb[0].mxu0
        %1877 = vdwg.mxu0
        %v1894 = vunpack.c.l.b16 %v1643
        %v1895 = vunpack.c.l.b16 %v1644
        %v1896 = vunpack.c.l.b16 %v1645
        %v1897 = vunpack.c.l.b16 %v1646
        %v1898 = vunpack.c.l.b16 %v1647
        %v1899 = vunpack.c.l.b16 %v1648
        %v1900 = vunpack.c.l.b16 %v1649
        %v1901 = vunpack.c.l.b16 %v1650
        %v1902 = vunpack.c.l.b16 %v1651
        %v1903 = vunpack.c.l.b16 %v1652
        %v1904 = vunpack.c.l.b16 %v1653
        %v1905 = vunpack.c.l.b16 %v1654
        %v1906 = vunpack.c.l.b16 %v1655
        %v1907 = vunpack.c.l.b16 %v1656
        %v1908 = vunpack.c.l.b16 %v1657
        %v1909 = vunpack.c.l.b16 %v1658
        %v1910 = vpack.c.b16 %v1895, %v1894
        %v1911 = vpack.c.b16 %v1897, %v1896
        %v1912 = vpack.c.b16 %v1899, %v1898
        %v1913 = vpack.c.b16 %v1901, %v1900
        %v1914 = vpack.c.b16 %v1903, %v1902
        %v1915 = vpack.c.b16 %v1905, %v1904
        %v1916 = vpack.c.b16 %v1907, %v1906
        %v1917 = vpack.c.b16 %v1909, %v1908
        %1926 = vmatprep.subr.bf16.mxu0 0
        %1927 = vmatpush1.bf16.msra.mxu0 %v1910
        %1928 = vmatprep.subr.bf16.mxu0 0
        %1929 = vmatpush1.bf16.msra.mxu0 %v1911
        %1930 = vmatprep.subr.bf16.mxu0 0
        %1931 = vmatpush1.bf16.msra.mxu0 %v1912
        %1932 = vmatprep.subr.bf16.mxu0 0
        %1933 = vmatpush1.bf16.msra.mxu0 %v1913
        %1934 = vmatprep.subr.bf16.mxu0 0
        %1935 = vmatpush1.bf16.msra.mxu0 %v1914
        %1936 = vmatprep.subr.bf16.mxu0 0
        %1937 = vmatpush1.bf16.msra.mxu0 %v1915
        %1938 = vmatprep.subr.bf16.mxu0 0
        %1939 = vmatpush1.bf16.msra.mxu0 %v1916
        %1940 = vmatprep.subr.bf16.mxu0 0
        %1941 = vmatpush1.bf16.msra.mxu0 %v1917
        %1942 = vmatprep.subr.bf16.mxu0 0
        %1943 = vmatpush1.bf16.msra.mxu0 0
        %1944 = vmatprep.subr.bf16.mxu0 0
        %1945 = vmatpush1.bf16.msra.mxu0 0
        %1946 = vmatprep.subr.bf16.mxu0 0
        %1947 = vmatpush1.bf16.msra.mxu0 0
        %1948 = vmatprep.subr.bf16.mxu0 0
        %1949 = vmatpush1.bf16.msra.mxu0 0
        %1950 = vmatprep.subr.bf16.mxu0 0
        %1951 = vmatpush1.bf16.msra.mxu0 0
        %1952 = vmatprep.subr.bf16.mxu0 0
        %1953 = vmatpush1.bf16.msra.mxu0 0
        %1954 = vmatprep.subr.bf16.mxu0 0
        %1955 = vmatpush1.bf16.msra.mxu0 0
        %1956 = vmatprep.subr.bf16.mxu0 0
        %1957 = vmatpush1.bf16.msra.mxu0 0
        %1958 = vmatprep.mubr.bf16.mxu0 0
        %1959 = vmatmul.mubr.bf16.gmra.mrb[0].mxu0 %v1515
        %v1960 = vpop.f32.mrb[0].mxu0
        %v1961 = vadd.f32 %v1816, %v1960
        %v1962 = vpop.f32.mrb[0].mxu0
        %v1963 = vpop.f32.mrb[0].mxu0
        %v1964 = vadd.f32 %v1819, %v1963
        %v1965 = vpop.f32.mrb[0].mxu0
        %1966 = vmatprep.mubr.bf16.mxu0 0
        %1967 = vmatmul.mubr.bf16.gmra.mrb[0].mxu0 %v1532
        %v1968 = vpop.f32.mrb[0].mxu0
        %v1969 = vadd.f32 %v1824, %v1968
        %v1970 = vpop.f32.mrb[0].mxu0
        %v1971 = vpop.f32.mrb[0].mxu0
        %v1972 = vadd.f32 %v1827, %v1971
        %v1973 = vpop.f32.mrb[0].mxu0
        %1974 = vmatprep.mubr.bf16.mxu0 0
        %1975 = vmatmul.mubr.bf16.gmra.mrb[0].mxu0 %v1549
        %v1976 = vpop.f32.mrb[0].mxu0
        %v1977 = vadd.f32 %v1832, %v1976
        %v1978 = vpop.f32.mrb[0].mxu0
        %v1979 = vpop.f32.mrb[0].mxu0
        %v1980 = vadd.f32 %v1835, %v1979
        %v1981 = vpop.f32.mrb[0].mxu0
        %1982 = vmatprep.mubr.bf16.mxu0 0
        %1983 = vmatmul.mubr.bf16.gmra.mrb[0].mxu0 %v1566
        %v1984 = vpop.f32.mrb[0].mxu0
        %v1985 = vadd.f32 %v1840, %v1984
        %v1986 = vpop.f32.mrb[0].mxu0
        %v1987 = vpop.f32.mrb[0].mxu0
        %v1988 = vadd.f32 %v1843, %v1987
        %v1989 = vpop.f32.mrb[0].mxu0
        %1990 = vmatprep.mubr.bf16.mxu0 0
        %1991 = vmatmul.mubr.bf16.gmra.mrb[0].mxu0 %v1583
        %v1992 = vpop.f32.mrb[0].mxu0
        %v1993 = vadd.f32 %v1848, %v1992
        %v1994 = vpop.f32.mrb[0].mxu0
        %v1995 = vpop.f32.mrb[0].mxu0
        %v1996 = vadd.f32 %v1851, %v1995
        %v1997 = vpop.f32.mrb[0].mxu0
        %1998 = vmatprep.mubr.bf16.mxu0 0
        %1999 = vmatmul.mubr.bf16.gmra.mrb[0].mxu0 %v1600
        %v2000 = vpop.f32.mrb[0].mxu0
        %v2001 = vadd.f32 %v1856, %v2000
        %v2002 = vpop.f32.mrb[0].mxu0
        %v2003 = vpop.f32.mrb[0].mxu0
        %v2004 = vadd.f32 %v1859, %v2003
        %v2005 = vpop.f32.mrb[0].mxu0
        %2006 = vmatprep.mubr.bf16.mxu0 0
        %2007 = vmatmul.mubr.bf16.gmra.mrb[0].mxu0 %v1617
        %v2008 = vpop.f32.mrb[0].mxu0
        %v2009 = vadd.f32 %v1864, %v2008
        %v2010 = vpop.f32.mrb[0].mxu0
        %v2011 = vpop.f32.mrb[0].mxu0
        %v2012 = vadd.f32 %v1867, %v2011
        %v2013 = vpop.f32.mrb[0].mxu0
        %2014 = vmatprep.mubr.bf16.mxu0 0
        %2015 = vmatmul.mubr.bf16.gmra.mrb[0].mxu0 %v1634
        %v2016 = vpop.f32.mrb[0].mxu0
        %v2017 = vadd.f32 %v1872, %v2016
        %v2018 = vpop.f32.mrb[0].mxu0
        %v2019 = vpop.f32.mrb[0].mxu0
        %v2020 = vadd.f32 %v1875, %v2019
        %v2021 = vpop.f32.mrb[0].mxu0
        %2022 = vdwg.mxu0
        %v2023 = vld [vmem:[#allocation2 + $0x8] sm:$0x1f]
        %v2024 = vld [vmem:[#allocation2 + $0x18] sm:$0x1f]
        %v2025 = vld [vmem:[#allocation2 + $0x28] sm:$0x1f]
        %v2026 = vld [vmem:[#allocation2 + $0x38] sm:$0x1f]
        %v2027 = vld [vmem:[#allocation2 + $0x48] sm:$0x1f]
        %v2028 = vld [vmem:[#allocation2 + $0x58] sm:$0x1f]
        %v2029 = vld [vmem:[#allocation2 + $0x68] sm:$0x1f]
        %v2030 = vld [vmem:[#allocation2 + $0x78] sm:$0x1f]
        %vm2031 = vsmask.f32 3328
        %v2033 = vshrl.u32 %v1659, 16
        %v2035 = vrot.slane %v2033, 4
        %v2036 = vshll.u32 %v1659, 16
        %v2038 = vrot.slane %v2036, 5
        %v2039 = vor.u32 %v2035, %v2038
        %v2041 = vshrl.u32 %v2023, 16
        %v2043 = vrot.slane %v2041, 4
        %v2044 = vshll.u32 %v2023, 16
        %v2046 = vrot.slane %v2044, 5
        %v2047 = vor.u32 %v2043, %v2046
        %v2048 = vsel %vm2031, %v2039, %v2047
        %v2050 = vshrl.u32 %v1660, 16
        %v2052 = vrot.slane %v2050, 4
        %v2053 = vshll.u32 %v1660, 16
        %v2055 = vrot.slane %v2053, 5
        %v2056 = vor.u32 %v2052, %v2055
        %v2058 = vshrl.u32 %v2024, 16
        %v2060 = vrot.slane %v2058, 4
        %v2061 = vshll.u32 %v2024, 16
        %v2063 = vrot.slane %v2061, 5
        %v2064 = vor.u32 %v2060, %v2063
        %v2065 = vsel %vm2031, %v2056, %v2064
        %v2067 = vshrl.u32 %v1661, 16
        %v2069 = vrot.slane %v2067, 4
        %v2070 = vshll.u32 %v1661, 16
        %v2072 = vrot.slane %v2070, 5
        %v2073 = vor.u32 %v2069, %v2072
        %v2075 = vshrl.u32 %v2025, 16
        %v2077 = vrot.slane %v2075, 4
        %v2078 = vshll.u32 %v2025, 16
        %v2080 = vrot.slane %v2078, 5
        %v2081 = vor.u32 %v2077, %v2080
        %v2082 = vsel %vm2031, %v2073, %v2081
        %v2084 = vshrl.u32 %v1662, 16
        %v2086 = vrot.slane %v2084, 4
        %v2087 = vshll.u32 %v1662, 16
        %v2089 = vrot.slane %v2087, 5
        %v2090 = vor.u32 %v2086, %v2089
        %v2092 = vshrl.u32 %v2026, 16
        %v2094 = vrot.slane %v2092, 4
        %v2095 = vshll.u32 %v2026, 16
        %v2097 = vrot.slane %v2095, 5
        %v2098 = vor.u32 %v2094, %v2097
        %v2099 = vsel %vm2031, %v2090, %v2098
        %v2101 = vshrl.u32 %v1663, 16
        %v2103 = vrot.slane %v2101, 4
        %v2104 = vshll.u32 %v1663, 16
        %v2106 = vrot.slane %v2104, 5
        %v2107 = vor.u32 %v2103, %v2106
        %v2109 = vshrl.u32 %v2027, 16
        %v2111 = vrot.slane %v2109, 4
        %v2112 = vshll.u32 %v2027, 16
        %v2114 = vrot.slane %v2112, 5
        %v2115 = vor.u32 %v2111, %v2114
        %v2116 = vsel %vm2031, %v2107, %v2115
        %v2118 = vshrl.u32 %v1664, 16
        %v2120 = vrot.slane %v2118, 4
        %v2121 = vshll.u32 %v1664, 16
        %v2123 = vrot.slane %v2121, 5
        %v2124 = vor.u32 %v2120, %v2123
        %v2126 = vshrl.u32 %v2028, 16
        %v2128 = vrot.slane %v2126, 4
        %v2129 = vshll.u32 %v2028, 16
        %v2131 = vrot.slane %v2129, 5
        %v2132 = vor.u32 %v2128, %v2131
        %v2133 = vsel %vm2031, %v2124, %v2132
        %v2135 = vshrl.u32 %v1665, 16
        %v2137 = vrot.slane %v2135, 4
        %v2138 = vshll.u32 %v1665, 16
        %v2140 = vrot.slane %v2138, 5
        %v2141 = vor.u32 %v2137, %v2140
        %v2143 = vshrl.u32 %v2029, 16
        %v2145 = vrot.slane %v2143, 4
        %v2146 = vshll.u32 %v2029, 16
        %v2148 = vrot.slane %v2146, 5
        %v2149 = vor.u32 %v2145, %v2148
        %v2150 = vsel %vm2031, %v2141, %v2149
        %v2152 = vshrl.u32 %v1666, 16
        %v2154 = vrot.slane %v2152, 4
        %v2155 = vshll.u32 %v1666, 16
        %v2157 = vrot.slane %v2155, 5
        %v2158 = vor.u32 %v2154, %v2157
        %v2160 = vshrl.u32 %v2030, 16
        %v2162 = vrot.slane %v2160, 4
        %v2163 = vshll.u32 %v2030, 16
        %v2165 = vrot.slane %v2163, 5
        %v2166 = vor.u32 %v2162, %v2165
        %v2167 = vsel %vm2031, %v2158, %v2166
        %s2176 = scalar_lea.vmem [#allocation11], 128
        %v2177 = vld [vmem:[%s2176] sm:$0xf]
        %v2178 = vld [vmem:[%s2176 + $0x4] sm:$0xf]
        %v2179 = vld [vmem:[%s2176 + $0x8] sm:$0xf]
        %v2180 = vld [vmem:[%s2176 + $0xc] sm:$0xf]
        %v2181 = vld [vmem:[%s2176 + $0x10] sm:$0xf]
        %v2182 = vld [vmem:[%s2176 + $0x14] sm:$0xf]
        %v2183 = vld [vmem:[%s2176 + $0x18] sm:$0xf]
        %v2184 = vld [vmem:[%s2176 + $0x1c] sm:$0xf]
        %v2185 = vld [vmem:[%s2176 + $0x20] sm:$0xf]
        %v2186 = vld [vmem:[%s2176 + $0x24] sm:$0xf]
        %v2187 = vld [vmem:[%s2176 + $0x28] sm:$0xf]
        %v2188 = vld [vmem:[%s2176 + $0x2c] sm:$0xf]
        %v2189 = vld [vmem:[%s2176 + $0x30] sm:$0xf]
        %v2190 = vld [vmem:[%s2176 + $0x34] sm:$0xf]
        %v2191 = vld [vmem:[%s2176 + $0x38] sm:$0xf]
        %v2192 = vld [vmem:[%s2176 + $0x3c] sm:$0xf]
        %v2209 = vunpack.c.l.b16 %v2177
        %v2210 = vunpack.c.l.b16 %v2178
        %v2211 = vunpack.c.l.b16 %v2179
        %v2212 = vunpack.c.l.b16 %v2180
        %v2213 = vunpack.c.l.b16 %v2181
        %v2214 = vunpack.c.l.b16 %v2182
        %v2215 = vunpack.c.l.b16 %v2183
        %v2216 = vunpack.c.l.b16 %v2184
        %v2217 = vunpack.c.l.b16 %v2185
        %v2218 = vunpack.c.l.b16 %v2186
        %v2219 = vunpack.c.l.b16 %v2187
        %v2220 = vunpack.c.l.b16 %v2188
        %v2221 = vunpack.c.l.b16 %v2189
        %v2222 = vunpack.c.l.b16 %v2190
        %v2223 = vunpack.c.l.b16 %v2191
        %v2224 = vunpack.c.l.b16 %v2192
        %v2225 = vpack.c.b16 %v2210, %v2209
        %v2226 = vpack.c.b16 %v2212, %v2211
        %v2227 = vpack.c.b16 %v2214, %v2213
        %v2228 = vpack.c.b16 %v2216, %v2215
        %v2229 = vpack.c.b16 %v2218, %v2217
        %v2230 = vpack.c.b16 %v2220, %v2219
        %v2231 = vpack.c.b16 %v2222, %v2221
        %v2232 = vpack.c.b16 %v2224, %v2223
        %2241 = vmatprep.subr.bf16.mxu0 0
        %2242 = vmatpush1.bf16.msra.mxu0 %v2225
        %2243 = vmatprep.subr.bf16.mxu0 0
        %2244 = vmatpush1.bf16.msra.mxu0 %v2226
        %2245 = vmatprep.subr.bf16.mxu0 0
        %2246 = vmatpush1.bf16.msra.mxu0 %v2227
        %2247 = vmatprep.subr.bf16.mxu0 0
        %2248 = vmatpush1.bf16.msra.mxu0 %v2228
        %2249 = vmatprep.subr.bf16.mxu0 0
        %2250 = vmatpush1.bf16.msra.mxu0 %v2229
        %2251 = vmatprep.subr.bf16.mxu0 0
        %2252 = vmatpush1.bf16.msra.mxu0 %v2230
        %2253 = vmatprep.subr.bf16.mxu0 0
        %2254 = vmatpush1.bf16.msra.mxu0 %v2231
        %2255 = vmatprep.subr.bf16.mxu0 0
        %2256 = vmatpush1.bf16.msra.mxu0 %v2232
        %2257 = vmatprep.subr.bf16.mxu0 0
        %2258 = vmatpush1.bf16.msra.mxu0 0
        %2259 = vmatprep.subr.bf16.mxu0 0
        %2260 = vmatpush1.bf16.msra.mxu0 0
        %2261 = vmatprep.subr.bf16.mxu0 0
        %2262 = vmatpush1.bf16.msra.mxu0 0
        %2263 = vmatprep.subr.bf16.mxu0 0
        %2264 = vmatpush1.bf16.msra.mxu0 0
        %2265 = vmatprep.subr.bf16.mxu0 0
        %2266 = vmatpush1.bf16.msra.mxu0 0
        %2267 = vmatprep.subr.bf16.mxu0 0
        %2268 = vmatpush1.bf16.msra.mxu0 0
        %2269 = vmatprep.subr.bf16.mxu0 0
        %2270 = vmatpush1.bf16.msra.mxu0 0
        %2271 = vmatprep.subr.bf16.mxu0 0
        %2272 = vmatpush1.bf16.msra.mxu0 0
        %2273 = vmatprep.mubr.bf16.mxu0 0
        %2274 = vmatmul.mubr.bf16.gmra.mrb[0].mxu0 %v2048
        %v2275 = vpop.f32.mrb[0].mxu0
        %v2276 = vadd.f32 0.0, %v2275
        %v2277 = vpop.f32.mrb[0].mxu0
        %v2278 = vpop.f32.mrb[0].mxu0
        %v2279 = vadd.f32 0.0, %v2278
        %v2280 = vpop.f32.mrb[0].mxu0
        %2281 = vmatprep.mubr.bf16.mxu0 0
        %2282 = vmatmul.mubr.bf16.gmra.mrb[0].mxu0 %v2065
        %v2283 = vpop.f32.mrb[0].mxu0
        %v2284 = vadd.f32 0.0, %v2283
        %v2285 = vpop.f32.mrb[0].mxu0
        %v2286 = vpop.f32.mrb[0].mxu0
        %v2287 = vadd.f32 0.0, %v2286
        %v2288 = vpop.f32.mrb[0].mxu0
        %2289 = vmatprep.mubr.bf16.mxu0 0
        %2290 = vmatmul.mubr.bf16.gmra.mrb[0].mxu0 %v2082
        %v2291 = vpop.f32.mrb[0].mxu0
        %v2292 = vadd.f32 0.0, %v2291
        %v2293 = vpop.f32.mrb[0].mxu0
        %v2294 = vpop.f32.mrb[0].mxu0
        %v2295 = vadd.f32 0.0, %v2294
        %v2296 = vpop.f32.mrb[0].mxu0
        %2297 = vmatprep.mubr.bf16.mxu0 0
        %2298 = vmatmul.mubr.bf16.gmra.mrb[0].mxu0 %v2099
        %v2299 = vpop.f32.mrb[0].mxu0
        %v2300 = vadd.f32 0.0, %v2299
        %v2301 = vpop.f32.mrb[0].mxu0
        %v2302 = vpop.f32.mrb[0].mxu0
        %v2303 = vadd.f32 0.0, %v2302
        %v2304 = vpop.f32.mrb[0].mxu0
        %2305 = vmatprep.mubr.bf16.mxu0 0
        %2306 = vmatmul.mubr.bf16.gmra.mrb[0].mxu0 %v2116
        %v2307 = vpop.f32.mrb[0].mxu0
        %v2308 = vadd.f32 0.0, %v2307
        %v2309 = vpop.f32.mrb[0].mxu0
        %v2310 = vpop.f32.mrb[0].mxu0
        %v2311 = vadd.f32 0.0, %v2310
        %v2312 = vpop.f32.mrb[0].mxu0
        %2313 = vmatprep.mubr.bf16.mxu0 0
        %2314 = vmatmul.mubr.bf16.gmra.mrb[0].mxu0 %v2133
        %v2315 = vpop.f32.mrb[0].mxu0
        %v2316 = vadd.f32 0.0, %v2315
        %v2317 = vpop.f32.mrb[0].mxu0
        %v2318 = vpop.f32.mrb[0].mxu0
        %v2319 = vadd.f32 0.0, %v2318
        %v2320 = vpop.f32.mrb[0].mxu0
        %2321 = vmatprep.mubr.bf16.mxu0 0
        %2322 = vmatmul.mubr.bf16.gmra.mrb[0].mxu0 %v2150
        %v2323 = vpop.f32.mrb[0].mxu0
        %v2324 = vadd.f32 0.0, %v2323
        %v2325 = vpop.f32.mrb[0].mxu0
        %v2326 = vpop.f32.mrb[0].mxu0
        %v2327 = vadd.f32 0.0, %v2326
        %v2328 = vpop.f32.mrb[0].mxu0
        %2329 = vmatprep.mubr.bf16.mxu0 0
        %2330 = vmatmul.mubr.bf16.gmra.mrb[0].mxu0 %v2167
        %v2331 = vpop.f32.mrb[0].mxu0
        %v2332 = vadd.f32 0.0, %v2331
        %v2333 = vpop.f32.mrb[0].mxu0
        %v2334 = vpop.f32.mrb[0].mxu0
        %v2335 = vadd.f32 0.0, %v2334
        %v2336 = vpop.f32.mrb[0].mxu0
        %2337 = vdwg.mxu0
        %v2338 = vadd.f32 %v1961, %v2276
        %v2339 = vadd.f32 %v1964, %v2279
        %v2340 = vadd.f32 %v1969, %v2284
        %v2341 = vadd.f32 %v1972, %v2287
        %v2342 = vadd.f32 %v1977, %v2292
        %v2343 = vadd.f32 %v1980, %v2295
        %v2344 = vadd.f32 %v1985, %v2300
        %v2345 = vadd.f32 %v1988, %v2303
        %v2346 = vadd.f32 %v1993, %v2308
        %v2347 = vadd.f32 %v1996, %v2311
        %v2348 = vadd.f32 %v2001, %v2316
        %v2349 = vadd.f32 %v2004, %v2319
        %v2350 = vadd.f32 %v2009, %v2324
        %v2351 = vadd.f32 %v2012, %v2327
        %v2352 = vadd.f32 %v2017, %v2332
        %v2353 = vadd.f32 %v2020, %v2335
        %v2354 = vld [vmem:[%s1092] sm:$0xf8]
        %v2355 = vld [vmem:[%s1092 + $0x8] sm:$0xf]
        %v2356 = vld [vmem:[%s1092 + $0x10] sm:$0xf8]
        %v2357 = vld [vmem:[%s1092 + $0x18] sm:$0xf]
        %v2358 = vld [vmem:[%s1092 + $0x20] sm:$0xf8]
        %v2359 = vld [vmem:[%s1092 + $0x28] sm:$0xf]
        %v2360 = vld [vmem:[%s1092 + $0x30] sm:$0xf8]
        %v2361 = vld [vmem:[%s1092 + $0x38] sm:$0xf]
        %v2362 = vld [vmem:[%s1092 + $0x40] sm:$0xf8]
        %v2363 = vld [vmem:[%s1092 + $0x48] sm:$0xf]
        %v2364 = vld [vmem:[%s1092 + $0x50] sm:$0xf8]
        %v2365 = vld [vmem:[%s1092 + $0x58] sm:$0xf]
        %v2366 = vld [vmem:[%s1092 + $0x60] sm:$0xf8]
        %v2367 = vld [vmem:[%s1092 + $0x68] sm:$0xf]
        %v2368 = vld [vmem:[%s1092 + $0x70] sm:$0xf8]
        %v2369 = vld [vmem:[%s1092 + $0x78] sm:$0xf]
        %v2371 = vshrl.u32 %v2354, 16
        %v2373 = vrot.slane %v2371, 3
        %v2374 = vshll.u32 %v2354, 16
        %v2376 = vrot.slane %v2374, 4
        %v2377 = vor.u32 %v2373, %v2376
        %v2379 = vshrl.u32 %v2355, 16
        %v2381 = vrot.slane %v2379, 3
        %v2382 = vshll.u32 %v2355, 16
        %v2384 = vrot.slane %v2382, 4
        %v2385 = vor.u32 %v2381, %v2384
        %v2386 = vsel %vm471, %v2377, %v2385
        %v2388 = vshrl.u32 %v2356, 16
        %v2390 = vrot.slane %v2388, 3
        %v2391 = vshll.u32 %v2356, 16
        %v2393 = vrot.slane %v2391, 4
        %v2394 = vor.u32 %v2390, %v2393
        %v2396 = vshrl.u32 %v2357, 16
        %v2398 = vrot.slane %v2396, 3
        %v2399 = vshll.u32 %v2357, 16
        %v2401 = vrot.slane %v2399, 4
        %v2402 = vor.u32 %v2398, %v2401
        %v2403 = vsel %vm471, %v2394, %v2402
        %v2405 = vshrl.u32 %v2358, 16
        %v2407 = vrot.slane %v2405, 3
        %v2408 = vshll.u32 %v2358, 16
        %v2410 = vrot.slane %v2408, 4
        %v2411 = vor.u32 %v2407, %v2410
        %v2413 = vshrl.u32 %v2359, 16
        %v2415 = vrot.slane %v2413, 3
        %v2416 = vshll.u32 %v2359, 16
        %v2418 = vrot.slane %v2416, 4
        %v2419 = vor.u32 %v2415, %v2418
        %v2420 = vsel %vm471, %v2411, %v2419
        %v2422 = vshrl.u32 %v2360, 16
        %v2424 = vrot.slane %v2422, 3
        %v2425 = vshll.u32 %v2360, 16
        %v2427 = vrot.slane %v2425, 4
        %v2428 = vor.u32 %v2424, %v2427
        %v2430 = vshrl.u32 %v2361, 16
        %v2432 = vrot.slane %v2430, 3
        %v2433 = vshll.u32 %v2361, 16
        %v2435 = vrot.slane %v2433, 4
        %v2436 = vor.u32 %v2432, %v2435
        %v2437 = vsel %vm471, %v2428, %v2436
        %v2439 = vshrl.u32 %v2362, 16
        %v2441 = vrot.slane %v2439, 3
        %v2442 = vshll.u32 %v2362, 16
        %v2444 = vrot.slane %v2442, 4
        %v2445 = vor.u32 %v2441, %v2444
        %v2447 = vshrl.u32 %v2363, 16
        %v2449 = vrot.slane %v2447, 3
        %v2450 = vshll.u32 %v2363, 16
        %v2452 = vrot.slane %v2450, 4
        %v2453 = vor.u32 %v2449, %v2452
        %v2454 = vsel %vm471, %v2445, %v2453
        %v2456 = vshrl.u32 %v2364, 16
        %v2458 = vrot.slane %v2456, 3
        %v2459 = vshll.u32 %v2364, 16
        %v2461 = vrot.slane %v2459, 4
        %v2462 = vor.u32 %v2458, %v2461
        %v2464 = vshrl.u32 %v2365, 16
        %v2466 = vrot.slane %v2464, 3
        %v2467 = vshll.u32 %v2365, 16
        %v2469 = vrot.slane %v2467, 4
        %v2470 = vor.u32 %v2466, %v2469
        %v2471 = vsel %vm471, %v2462, %v2470
        %v2473 = vshrl.u32 %v2366, 16
        %v2475 = vrot.slane %v2473, 3
        %v2476 = vshll.u32 %v2366, 16
        %v2478 = vrot.slane %v2476, 4
        %v2479 = vor.u32 %v2475, %v2478
        %v2481 = vshrl.u32 %v2367, 16
        %v2483 = vrot.slane %v2481, 3
        %v2484 = vshll.u32 %v2367, 16
        %v2486 = vrot.slane %v2484, 4
        %v2487 = vor.u32 %v2483, %v2486
        %v2488 = vsel %vm471, %v2479, %v2487
        %v2490 = vshrl.u32 %v2368, 16
        %v2492 = vrot.slane %v2490, 3
        %v2493 = vshll.u32 %v2368, 16
        %v2495 = vrot.slane %v2493, 4
        %v2496 = vor.u32 %v2492, %v2495
        %v2498 = vshrl.u32 %v2369, 16
        %v2500 = vrot.slane %v2498, 3
        %v2501 = vshll.u32 %v2369, 16
        %v2503 = vrot.slane %v2501, 4
        %v2504 = vor.u32 %v2500, %v2503
        %v2505 = vsel %vm471, %v2496, %v2504
        %s2514 = scalar_lea.vmem [#allocation11], 192
        %v2515 = vld [vmem:[%s2514] sm:$0xf]
        %v2516 = vld [vmem:[%s2514 + $0x4] sm:$0xf]
        %v2517 = vld [vmem:[%s2514 + $0x8] sm:$0xf]
        %v2518 = vld [vmem:[%s2514 + $0xc] sm:$0xf]
        %v2519 = vld [vmem:[%s2514 + $0x10] sm:$0xf]
        %v2520 = vld [vmem:[%s2514 + $0x14] sm:$0xf]
        %v2521 = vld [vmem:[%s2514 + $0x18] sm:$0xf]
        %v2522 = vld [vmem:[%s2514 + $0x1c] sm:$0xf]
        %v2523 = vld [vmem:[%s2514 + $0x20] sm:$0xf]
        %v2524 = vld [vmem:[%s2514 + $0x24] sm:$0xf]
        %v2525 = vld [vmem:[%s2514 + $0x28] sm:$0xf]
        %v2526 = vld [vmem:[%s2514 + $0x2c] sm:$0xf]
        %v2527 = vld [vmem:[%s2514 + $0x30] sm:$0xf]
        %v2528 = vld [vmem:[%s2514 + $0x34] sm:$0xf]
        %v2529 = vld [vmem:[%s2514 + $0x38] sm:$0xf]
        %v2530 = vld [vmem:[%s2514 + $0x3c] sm:$0xf]
        %v2547 = vunpack.c.l.b16 %v2515
        %v2548 = vunpack.c.l.b16 %v2516
        %v2549 = vunpack.c.l.b16 %v2517
        %v2550 = vunpack.c.l.b16 %v2518
        %v2551 = vunpack.c.l.b16 %v2519
        %v2552 = vunpack.c.l.b16 %v2520
        %v2553 = vunpack.c.l.b16 %v2521
        %v2554 = vunpack.c.l.b16 %v2522
        %v2555 = vunpack.c.l.b16 %v2523
        %v2556 = vunpack.c.l.b16 %v2524
        %v2557 = vunpack.c.l.b16 %v2525
        %v2558 = vunpack.c.l.b16 %v2526
        %v2559 = vunpack.c.l.b16 %v2527
        %v2560 = vunpack.c.l.b16 %v2528
        %v2561 = vunpack.c.l.b16 %v2529
        %v2562 = vunpack.c.l.b16 %v2530
        %v2563 = vpack.c.b16 %v2548, %v2547
        %v2564 = vpack.c.b16 %v2550, %v2549
        %v2565 = vpack.c.b16 %v2552, %v2551
        %v2566 = vpack.c.b16 %v2554, %v2553
        %v2567 = vpack.c.b16 %v2556, %v2555
        %v2568 = vpack.c.b16 %v2558, %v2557
        %v2569 = vpack.c.b16 %v2560, %v2559
        %v2570 = vpack.c.b16 %v2562, %v2561
        %2579 = vmatprep.subr.bf16.mxu0 0
        %2580 = vmatpush1.bf16.msra.mxu0 %v2563
        %2581 = vmatprep.subr.bf16.mxu0 0
        %2582 = vmatpush1.bf16.msra.mxu0 %v2564
        %2583 = vmatprep.subr.bf16.mxu0 0
        %2584 = vmatpush1.bf16.msra.mxu0 %v2565
        %2585 = vmatprep.subr.bf16.mxu0 0
        %2586 = vmatpush1.bf16.msra.mxu0 %v2566
        %2587 = vmatprep.subr.bf16.mxu0 0
        %2588 = vmatpush1.bf16.msra.mxu0 %v2567
        %2589 = vmatprep.subr.bf16.mxu0 0
        %2590 = vmatpush1.bf16.msra.mxu0 %v2568
        %2591 = vmatprep.subr.bf16.mxu0 0
        %2592 = vmatpush1.bf16.msra.mxu0 %v2569
        %2593 = vmatprep.subr.bf16.mxu0 0
        %2594 = vmatpush1.bf16.msra.mxu0 %v2570
        %2595 = vmatprep.subr.bf16.mxu0 0
        %2596 = vmatpush1.bf16.msra.mxu0 0
        %2597 = vmatprep.subr.bf16.mxu0 0
        %2598 = vmatpush1.bf16.msra.mxu0 0
        %2599 = vmatprep.subr.bf16.mxu0 0
        %2600 = vmatpush1.bf16.msra.mxu0 0
        %2601 = vmatprep.subr.bf16.mxu0 0
        %2602 = vmatpush1.bf16.msra.mxu0 0
        %2603 = vmatprep.subr.bf16.mxu0 0
        %2604 = vmatpush1.bf16.msra.mxu0 0
        %2605 = vmatprep.subr.bf16.mxu0 0
        %2606 = vmatpush1.bf16.msra.mxu0 0
        %2607 = vmatprep.subr.bf16.mxu0 0
        %2608 = vmatpush1.bf16.msra.mxu0 0
        %2609 = vmatprep.subr.bf16.mxu0 0
        %2610 = vmatpush1.bf16.msra.mxu0 0
        %2611 = vmatprep.mubr.bf16.mxu0 0
        %2612 = vmatmul.mubr.bf16.gmra.mrb[0].mxu0 %v2386
        %v2613 = vpop.f32.mrb[0].mxu0
        %v2614 = vadd.f32 0.0, %v2613
        %v2615 = vpop.f32.mrb[0].mxu0
        %v2616 = vpop.f32.mrb[0].mxu0
        %v2617 = vadd.f32 0.0, %v2616
        %v2618 = vpop.f32.mrb[0].mxu0
        %2619 = vmatprep.mubr.bf16.mxu0 0
        %2620 = vmatmul.mubr.bf16.gmra.mrb[0].mxu0 %v2403
        %v2621 = vpop.f32.mrb[0].mxu0
        %v2622 = vadd.f32 0.0, %v2621
        %v2623 = vpop.f32.mrb[0].mxu0
        %v2624 = vpop.f32.mrb[0].mxu0
        %v2625 = vadd.f32 0.0, %v2624
        %v2626 = vpop.f32.mrb[0].mxu0
        %2627 = vmatprep.mubr.bf16.mxu0 0
        %2628 = vmatmul.mubr.bf16.gmra.mrb[0].mxu0 %v2420
        %v2629 = vpop.f32.mrb[0].mxu0
        %v2630 = vadd.f32 0.0, %v2629
        %v2631 = vpop.f32.mrb[0].mxu0
        %v2632 = vpop.f32.mrb[0].mxu0
        %v2633 = vadd.f32 0.0, %v2632
        %v2634 = vpop.f32.mrb[0].mxu0
        %2635 = vmatprep.mubr.bf16.mxu0 0
        %2636 = vmatmul.mubr.bf16.gmra.mrb[0].mxu0 %v2437
        %v2637 = vpop.f32.mrb[0].mxu0
        %v2638 = vadd.f32 0.0, %v2637
        %v2639 = vpop.f32.mrb[0].mxu0
        %v2640 = vpop.f32.mrb[0].mxu0
        %v2641 = vadd.f32 0.0, %v2640
        %v2642 = vpop.f32.mrb[0].mxu0
        %2643 = vmatprep.mubr.bf16.mxu0 0
        %2644 = vmatmul.mubr.bf16.gmra.mrb[0].mxu0 %v2454
        %v2645 = vpop.f32.mrb[0].mxu0
        %v2646 = vadd.f32 0.0, %v2645
        %v2647 = vpop.f32.mrb[0].mxu0
        %v2648 = vpop.f32.mrb[0].mxu0
        %v2649 = vadd.f32 0.0, %v2648
        %v2650 = vpop.f32.mrb[0].mxu0
        %2651 = vmatprep.mubr.bf16.mxu0 0
        %2652 = vmatmul.mubr.bf16.gmra.mrb[0].mxu0 %v2471
        %v2653 = vpop.f32.mrb[0].mxu0
        %v2654 = vadd.f32 0.0, %v2653
        %v2655 = vpop.f32.mrb[0].mxu0
        %v2656 = vpop.f32.mrb[0].mxu0
        %v2657 = vadd.f32 0.0, %v2656
        %v2658 = vpop.f32.mrb[0].mxu0
        %2659 = vmatprep.mubr.bf16.mxu0 0
        %2660 = vmatmul.mubr.bf16.gmra.mrb[0].mxu0 %v2488
        %v2661 = vpop.f32.mrb[0].mxu0
        %v2662 = vadd.f32 0.0, %v2661
        %v2663 = vpop.f32.mrb[0].mxu0
        %v2664 = vpop.f32.mrb[0].mxu0
        %v2665 = vadd.f32 0.0, %v2664
        %v2666 = vpop.f32.mrb[0].mxu0
        %2667 = vmatprep.mubr.bf16.mxu0 0
        %2668 = vmatmul.mubr.bf16.gmra.mrb[0].mxu0 %v2505
        %v2669 = vpop.f32.mrb[0].mxu0
        %v2670 = vadd.f32 0.0, %v2669
        %v2671 = vpop.f32.mrb[0].mxu0
        %v2672 = vpop.f32.mrb[0].mxu0
        %v2673 = vadd.f32 0.0, %v2672
        %v2674 = vpop.f32.mrb[0].mxu0
        %2675 = vdwg.mxu0
        %v2676 = vadd.f32 %v2338, %v2614
        %v2677 = vadd.f32 %v2339, %v2617
        %v2678 = vadd.f32 %v2340, %v2622
        %v2679 = vadd.f32 %v2341, %v2625
        %v2680 = vadd.f32 %v2342, %v2630
        %v2681 = vadd.f32 %v2343, %v2633
        %v2682 = vadd.f32 %v2344, %v2638
        %v2683 = vadd.f32 %v2345, %v2641
        %v2684 = vadd.f32 %v2346, %v2646
        %v2685 = vadd.f32 %v2347, %v2649
        %v2686 = vadd.f32 %v2348, %v2654
        %v2687 = vadd.f32 %v2349, %v2657
        %v2688 = vadd.f32 %v2350, %v2662
        %v2689 = vadd.f32 %v2351, %v2665
        %v2690 = vadd.f32 %v2352, %v2670
        %v2691 = vadd.f32 %v2353, %v2673
        %v2692 = vld [vmem:[%s1092] sm:$0xf0]
        %v2693 = vld [vmem:[%s1092 + $0x10] sm:$0xf0]
        %v2694 = vld [vmem:[%s1092 + $0x20] sm:$0xf0]
        %v2695 = vld [vmem:[%s1092 + $0x30] sm:$0xf0]
        %v2696 = vld [vmem:[%s1092 + $0x40] sm:$0xf0]
        %v2697 = vld [vmem:[%s1092 + $0x50] sm:$0xf0]
        %v2698 = vld [vmem:[%s1092 + $0x60] sm:$0xf0]
        %v2699 = vld [vmem:[%s1092 + $0x70] sm:$0xf0]
        %v2716 = vrot.slane %v2692, 4
        %v2717 = vrot.slane %v2355, 4
        %v2718 = vsel %vm1683, %v2716, %v2717
        %v2719 = vrot.slane %v2693, 4
        %v2720 = vrot.slane %v2357, 4
        %v2721 = vsel %vm1683, %v2719, %v2720
        %v2722 = vrot.slane %v2694, 4
        %v2723 = vrot.slane %v2359, 4
        %v2724 = vsel %vm1683, %v2722, %v2723
        %v2725 = vrot.slane %v2695, 4
        %v2726 = vrot.slane %v2361, 4
        %v2727 = vsel %vm1683, %v2725, %v2726
        %v2728 = vrot.slane %v2696, 4
        %v2729 = vrot.slane %v2363, 4
        %v2730 = vsel %vm1683, %v2728, %v2729
        %v2731 = vrot.slane %v2697, 4
        %v2732 = vrot.slane %v2365, 4
        %v2733 = vsel %vm1683, %v2731, %v2732
        %v2734 = vrot.slane %v2698, 4
        %v2735 = vrot.slane %v2367, 4
        %v2736 = vsel %vm1683, %v2734, %v2735
        %v2737 = vrot.slane %v2699, 4
        %v2738 = vrot.slane %v2369, 4
        %v2739 = vsel %vm1683, %v2737, %v2738
        %s2748 = scalar_lea.vmem [#allocation11], 256
        %v2749 = vld [vmem:[%s2748] sm:$0xf]
        %v2750 = vld [vmem:[%s2748 + $0x4] sm:$0xf]
        %v2751 = vld [vmem:[%s2748 + $0x8] sm:$0xf]
        %v2752 = vld [vmem:[%s2748 + $0xc] sm:$0xf]
        %v2753 = vld [vmem:[%s2748 + $0x10] sm:$0xf]
        %v2754 = vld [vmem:[%s2748 + $0x14] sm:$0xf]
        %v2755 = vld [vmem:[%s2748 + $0x18] sm:$0xf]
        %v2756 = vld [vmem:[%s2748 + $0x1c] sm:$0xf]
        %v2757 = vld [vmem:[%s2748 + $0x20] sm:$0xf]
        %v2758 = vld [vmem:[%s2748 + $0x24] sm:$0xf]
        %v2759 = vld [vmem:[%s2748 + $0x28] sm:$0xf]
        %v2760 = vld [vmem:[%s2748 + $0x2c] sm:$0xf]
        %v2761 = vld [vmem:[%s2748 + $0x30] sm:$0xf]
        %v2762 = vld [vmem:[%s2748 + $0x34] sm:$0xf]
        %v2763 = vld [vmem:[%s2748 + $0x38] sm:$0xf]
        %v2764 = vld [vmem:[%s2748 + $0x3c] sm:$0xf]
        %v2781 = vunpack.c.l.b16 %v2749
        %v2782 = vunpack.c.l.b16 %v2750
        %v2783 = vunpack.c.l.b16 %v2751
        %v2784 = vunpack.c.l.b16 %v2752
        %v2785 = vunpack.c.l.b16 %v2753
        %v2786 = vunpack.c.l.b16 %v2754
        %v2787 = vunpack.c.l.b16 %v2755
        %v2788 = vunpack.c.l.b16 %v2756
        %v2789 = vunpack.c.l.b16 %v2757
        %v2790 = vunpack.c.l.b16 %v2758
        %v2791 = vunpack.c.l.b16 %v2759
        %v2792 = vunpack.c.l.b16 %v2760
        %v2793 = vunpack.c.l.b16 %v2761
        %v2794 = vunpack.c.l.b16 %v2762
        %v2795 = vunpack.c.l.b16 %v2763
        %v2796 = vunpack.c.l.b16 %v2764
        %v2797 = vpack.c.b16 %v2782, %v2781
        %v2798 = vpack.c.b16 %v2784, %v2783
        %v2799 = vpack.c.b16 %v2786, %v2785
        %v2800 = vpack.c.b16 %v2788, %v2787
        %v2801 = vpack.c.b16 %v2790, %v2789
        %v2802 = vpack.c.b16 %v2792, %v2791
        %v2803 = vpack.c.b16 %v2794, %v2793
        %v2804 = vpack.c.b16 %v2796, %v2795
        %2813 = vmatprep.subr.bf16.mxu0 0
        %2814 = vmatpush1.bf16.msra.mxu0 %v2797
        %2815 = vmatprep.subr.bf16.mxu0 0
        %2816 = vmatpush1.bf16.msra.mxu0 %v2798
        %2817 = vmatprep.subr.bf16.mxu0 0
        %2818 = vmatpush1.bf16.msra.mxu0 %v2799
        %2819 = vmatprep.subr.bf16.mxu0 0
        %2820 = vmatpush1.bf16.msra.mxu0 %v2800
        %2821 = vmatprep.subr.bf16.mxu0 0
        %2822 = vmatpush1.bf16.msra.mxu0 %v2801
        %2823 = vmatprep.subr.bf16.mxu0 0
        %2824 = vmatpush1.bf16.msra.mxu0 %v2802
        %2825 = vmatprep.subr.bf16.mxu0 0
        %2826 = vmatpush1.bf16.msra.mxu0 %v2803
        %2827 = vmatprep.subr.bf16.mxu0 0
        %2828 = vmatpush1.bf16.msra.mxu0 %v2804
        %2829 = vmatprep.subr.bf16.mxu0 0
        %2830 = vmatpush1.bf16.msra.mxu0 0
        %2831 = vmatprep.subr.bf16.mxu0 0
        %2832 = vmatpush1.bf16.msra.mxu0 0
        %2833 = vmatprep.subr.bf16.mxu0 0
        %2834 = vmatpush1.bf16.msra.mxu0 0
        %2835 = vmatprep.subr.bf16.mxu0 0
        %2836 = vmatpush1.bf16.msra.mxu0 0
        %2837 = vmatprep.subr.bf16.mxu0 0
        %2838 = vmatpush1.bf16.msra.mxu0 0
        %2839 = vmatprep.subr.bf16.mxu0 0
        %2840 = vmatpush1.bf16.msra.mxu0 0
        %2841 = vmatprep.subr.bf16.mxu0 0
        %2842 = vmatpush1.bf16.msra.mxu0 0
        %2843 = vmatprep.subr.bf16.mxu0 0
        %2844 = vmatpush1.bf16.msra.mxu0 0
        %2845 = vmatprep.mubr.bf16.mxu0 0
        %2846 = vmatmul.mubr.bf16.gmra.mrb[0].mxu0 %v2718
        %v2847 = vpop.f32.mrb[0].mxu0
        %v2848 = vadd.f32 0.0, %v2847
        %v2849 = vpop.f32.mrb[0].mxu0
        %v2850 = vpop.f32.mrb[0].mxu0
        %v2851 = vadd.f32 0.0, %v2850
        %v2852 = vpop.f32.mrb[0].mxu0
        %2853 = vmatprep.mubr.bf16.mxu0 0
        %2854 = vmatmul.mubr.bf16.gmra.mrb[0].mxu0 %v2721
        %v2855 = vpop.f32.mrb[0].mxu0
        %v2856 = vadd.f32 0.0, %v2855
        %v2857 = vpop.f32.mrb[0].mxu0
        %v2858 = vpop.f32.mrb[0].mxu0
        %v2859 = vadd.f32 0.0, %v2858
        %v2860 = vpop.f32.mrb[0].mxu0
        %2861 = vmatprep.mubr.bf16.mxu0 0
        %2862 = vmatmul.mubr.bf16.gmra.mrb[0].mxu0 %v2724
        %v2863 = vpop.f32.mrb[0].mxu0
        %v2864 = vadd.f32 0.0, %v2863
        %v2865 = vpop.f32.mrb[0].mxu0
        %v2866 = vpop.f32.mrb[0].mxu0
        %v2867 = vadd.f32 0.0, %v2866
        %v2868 = vpop.f32.mrb[0].mxu0
        %2869 = vmatprep.mubr.bf16.mxu0 0
        %2870 = vmatmul.mubr.bf16.gmra.mrb[0].mxu0 %v2727
        %v2871 = vpop.f32.mrb[0].mxu0
        %v2872 = vadd.f32 0.0, %v2871
        %v2873 = vpop.f32.mrb[0].mxu0
        %v2874 = vpop.f32.mrb[0].mxu0
        %v2875 = vadd.f32 0.0, %v2874
        %v2876 = vpop.f32.mrb[0].mxu0
        %2877 = vmatprep.mubr.bf16.mxu0 0
        %2878 = vmatmul.mubr.bf16.gmra.mrb[0].mxu0 %v2730
        %v2879 = vpop.f32.mrb[0].mxu0
        %v2880 = vadd.f32 0.0, %v2879
        %v2881 = vpop.f32.mrb[0].mxu0
        %v2882 = vpop.f32.mrb[0].mxu0
        %v2883 = vadd.f32 0.0, %v2882
        %v2884 = vpop.f32.mrb[0].mxu0
        %2885 = vmatprep.mubr.bf16.mxu0 0
        %2886 = vmatmul.mubr.bf16.gmra.mrb[0].mxu0 %v2733
        %v2887 = vpop.f32.mrb[0].mxu0
        %v2888 = vadd.f32 0.0, %v2887
        %v2889 = vpop.f32.mrb[0].mxu0
        %v2890 = vpop.f32.mrb[0].mxu0
        %v2891 = vadd.f32 0.0, %v2890
        %v2892 = vpop.f32.mrb[0].mxu0
        %2893 = vmatprep.mubr.bf16.mxu0 0
        %2894 = vmatmul.mubr.bf16.gmra.mrb[0].mxu0 %v2736
        %v2895 = vpop.f32.mrb[0].mxu0
        %v2896 = vadd.f32 0.0, %v2895
        %v2897 = vpop.f32.mrb[0].mxu0
        %v2898 = vpop.f32.mrb[0].mxu0
        %v2899 = vadd.f32 0.0, %v2898
        %v2900 = vpop.f32.mrb[0].mxu0
        %2901 = vmatprep.mubr.bf16.mxu0 0
        %2902 = vmatmul.mubr.bf16.gmra.mrb[0].mxu0 %v2739
        %v2903 = vpop.f32.mrb[0].mxu0
        %v2904 = vadd.f32 0.0, %v2903
        %v2905 = vpop.f32.mrb[0].mxu0
        %v2906 = vpop.f32.mrb[0].mxu0
        %v2907 = vadd.f32 0.0, %v2906
        %v2908 = vpop.f32.mrb[0].mxu0
        %2909 = vdwg.mxu0
        %v2910 = vadd.f32 %v2676, %v2848
        %v2911 = vadd.f32 %v2677, %v2851
        %v2912 = vadd.f32 %v2678, %v2856
        %v2913 = vadd.f32 %v2679, %v2859
        %v2914 = vadd.f32 %v2680, %v2864
        %v2915 = vadd.f32 %v2681, %v2867
        %v2916 = vadd.f32 %v2682, %v2872
        %v2917 = vadd.f32 %v2683, %v2875
        %v2918 = vadd.f32 %v2684, %v2880
        %v2919 = vadd.f32 %v2685, %v2883
        %v2920 = vadd.f32 %v2686, %v2888
        %v2921 = vadd.f32 %v2687, %v2891
        %v2922 = vadd.f32 %v2688, %v2896
        %v2923 = vadd.f32 %v2689, %v2899
        %v2924 = vadd.f32 %v2690, %v2904
        %v2925 = vadd.f32 %v2691, %v2907
        %v2926 = vld [vmem:[%s1092 + $0x8] sm:$0x1f]
        %v2927 = vld [vmem:[%s1092 + $0x18] sm:$0x1f]
        %v2928 = vld [vmem:[%s1092 + $0x28] sm:$0x1f]
        %v2929 = vld [vmem:[%s1092 + $0x38] sm:$0x1f]
        %v2930 = vld [vmem:[%s1092 + $0x48] sm:$0x1f]
        %v2931 = vld [vmem:[%s1092 + $0x58] sm:$0x1f]
        %v2932 = vld [vmem:[%s1092 + $0x68] sm:$0x1f]
        %v2933 = vld [vmem:[%s1092 + $0x78] sm:$0x1f]
        %v2935 = vshrl.u32 %v2692, 16
        %v2937 = vrot.slane %v2935, 4
        %v2938 = vshll.u32 %v2692, 16
        %v2940 = vrot.slane %v2938, 5
        %v2941 = vor.u32 %v2937, %v2940
        %v2943 = vshrl.u32 %v2926, 16
        %v2945 = vrot.slane %v2943, 4
        %v2946 = vshll.u32 %v2926, 16
        %v2948 = vrot.slane %v2946, 5
        %v2949 = vor.u32 %v2945, %v2948
        %v2950 = vsel %vm2031, %v2941, %v2949
        %v2952 = vshrl.u32 %v2693, 16
        %v2954 = vrot.slane %v2952, 4
        %v2955 = vshll.u32 %v2693, 16
        %v2957 = vrot.slane %v2955, 5
        %v2958 = vor.u32 %v2954, %v2957
        %v2960 = vshrl.u32 %v2927, 16
        %v2962 = vrot.slane %v2960, 4
        %v2963 = vshll.u32 %v2927, 16
        %v2965 = vrot.slane %v2963, 5
        %v2966 = vor.u32 %v2962, %v2965
        %v2967 = vsel %vm2031, %v2958, %v2966
        %v2969 = vshrl.u32 %v2694, 16
        %v2971 = vrot.slane %v2969, 4
        %v2972 = vshll.u32 %v2694, 16
        %v2974 = vrot.slane %v2972, 5
        %v2975 = vor.u32 %v2971, %v2974
        %v2977 = vshrl.u32 %v2928, 16
        %v2979 = vrot.slane %v2977, 4
        %v2980 = vshll.u32 %v2928, 16
        %v2982 = vrot.slane %v2980, 5
        %v2983 = vor.u32 %v2979, %v2982
        %v2984 = vsel %vm2031, %v2975, %v2983
        %v2986 = vshrl.u32 %v2695, 16
        %v2988 = vrot.slane %v2986, 4
        %v2989 = vshll.u32 %v2695, 16
        %v2991 = vrot.slane %v2989, 5
        %v2992 = vor.u32 %v2988, %v2991
        %v2994 = vshrl.u32 %v2929, 16
        %v2996 = vrot.slane %v2994, 4
        %v2997 = vshll.u32 %v2929, 16
        %v2999 = vrot.slane %v2997, 5
        %v3000 = vor.u32 %v2996, %v2999
        %v3001 = vsel %vm2031, %v2992, %v3000
        %v3003 = vshrl.u32 %v2696, 16
        %v3005 = vrot.slane %v3003, 4
        %v3006 = vshll.u32 %v2696, 16
        %v3008 = vrot.slane %v3006, 5
        %v3009 = vor.u32 %v3005, %v3008
        %v3011 = vshrl.u32 %v2930, 16
        %v3013 = vrot.slane %v3011, 4
        %v3014 = vshll.u32 %v2930, 16
        %v3016 = vrot.slane %v3014, 5
        %v3017 = vor.u32 %v3013, %v3016
        %v3018 = vsel %vm2031, %v3009, %v3017
        %v3020 = vshrl.u32 %v2697, 16
        %v3022 = vrot.slane %v3020, 4
        %v3023 = vshll.u32 %v2697, 16
        %v3025 = vrot.slane %v3023, 5
        %v3026 = vor.u32 %v3022, %v3025
        %v3028 = vshrl.u32 %v2931, 16
        %v3030 = vrot.slane %v3028, 4
        %v3031 = vshll.u32 %v2931, 16
        %v3033 = vrot.slane %v3031, 5
        %v3034 = vor.u32 %v3030, %v3033
        %v3035 = vsel %vm2031, %v3026, %v3034
        %v3037 = vshrl.u32 %v2698, 16
        %v3039 = vrot.slane %v3037, 4
        %v3040 = vshll.u32 %v2698, 16
        %v3042 = vrot.slane %v3040, 5
        %v3043 = vor.u32 %v3039, %v3042
        %v3045 = vshrl.u32 %v2932, 16
        %v3047 = vrot.slane %v3045, 4
        %v3048 = vshll.u32 %v2932, 16
        %v3050 = vrot.slane %v3048, 5
        %v3051 = vor.u32 %v3047, %v3050
        %v3052 = vsel %vm2031, %v3043, %v3051
        %v3054 = vshrl.u32 %v2699, 16
        %v3056 = vrot.slane %v3054, 4
        %v3057 = vshll.u32 %v2699, 16
        %v3059 = vrot.slane %v3057, 5
        %v3060 = vor.u32 %v3056, %v3059
        %v3062 = vshrl.u32 %v2933, 16
        %v3064 = vrot.slane %v3062, 4
        %v3065 = vshll.u32 %v2933, 16
        %v3067 = vrot.slane %v3065, 5
        %v3068 = vor.u32 %v3064, %v3067
        %v3069 = vsel %vm2031, %v3060, %v3068
        %s3078 = scalar_lea.vmem [#allocation11], 320
        %v3079 = vld [vmem:[%s3078] sm:$0xf]
        %v3080 = vld [vmem:[%s3078 + $0x4] sm:$0xf]
        %v3081 = vld [vmem:[%s3078 + $0x8] sm:$0xf]
        %v3082 = vld [vmem:[%s3078 + $0xc] sm:$0xf]
        %v3083 = vld [vmem:[%s3078 + $0x10] sm:$0xf]
        %v3084 = vld [vmem:[%s3078 + $0x14] sm:$0xf]
        %v3085 = vld [vmem:[%s3078 + $0x18] sm:$0xf]
        %v3086 = vld [vmem:[%s3078 + $0x1c] sm:$0xf]
        %v3087 = vld [vmem:[%s3078 + $0x20] sm:$0xf]
        %v3088 = vld [vmem:[%s3078 + $0x24] sm:$0xf]
        %v3089 = vld [vmem:[%s3078 + $0x28] sm:$0xf]
        %v3090 = vld [vmem:[%s3078 + $0x2c] sm:$0xf]
        %v3091 = vld [vmem:[%s3078 + $0x30] sm:$0xf]
        %v3092 = vld [vmem:[%s3078 + $0x34] sm:$0xf]
        %v3093 = vld [vmem:[%s3078 + $0x38] sm:$0xf]
        %v3094 = vld [vmem:[%s3078 + $0x3c] sm:$0xf]
        %v3111 = vunpack.c.l.b16 %v3079
        %v3112 = vunpack.c.l.b16 %v3080
        %v3113 = vunpack.c.l.b16 %v3081
        %v3114 = vunpack.c.l.b16 %v3082
        %v3115 = vunpack.c.l.b16 %v3083
        %v3116 = vunpack.c.l.b16 %v3084
        %v3117 = vunpack.c.l.b16 %v3085
        %v3118 = vunpack.c.l.b16 %v3086
        %v3119 = vunpack.c.l.b16 %v3087
        %v3120 = vunpack.c.l.b16 %v3088
        %v3121 = vunpack.c.l.b16 %v3089
        %v3122 = vunpack.c.l.b16 %v3090
        %v3123 = vunpack.c.l.b16 %v3091
        %v3124 = vunpack.c.l.b16 %v3092
        %v3125 = vunpack.c.l.b16 %v3093
        %v3126 = vunpack.c.l.b16 %v3094
        %v3127 = vpack.c.b16 %v3112, %v3111
        %v3128 = vpack.c.b16 %v3114, %v3113
        %v3129 = vpack.c.b16 %v3116, %v3115
        %v3130 = vpack.c.b16 %v3118, %v3117
        %v3131 = vpack.c.b16 %v3120, %v3119
        %v3132 = vpack.c.b16 %v3122, %v3121
        %v3133 = vpack.c.b16 %v3124, %v3123
        %v3134 = vpack.c.b16 %v3126, %v3125
        %3143 = vmatprep.subr.bf16.mxu0 0
        %3144 = vmatpush1.bf16.msra.mxu0 %v3127
        %3145 = vmatprep.subr.bf16.mxu0 0
        %3146 = vmatpush1.bf16.msra.mxu0 %v3128
        %3147 = vmatprep.subr.bf16.mxu0 0
        %3148 = vmatpush1.bf16.msra.mxu0 %v3129
        %3149 = vmatprep.subr.bf16.mxu0 0
        %3150 = vmatpush1.bf16.msra.mxu0 %v3130
        %3151 = vmatprep.subr.bf16.mxu0 0
        %3152 = vmatpush1.bf16.msra.mxu0 %v3131
        %3153 = vmatprep.subr.bf16.mxu0 0
        %3154 = vmatpush1.bf16.msra.mxu0 %v3132
        %3155 = vmatprep.subr.bf16.mxu0 0
        %3156 = vmatpush1.bf16.msra.mxu0 %v3133
        %3157 = vmatprep.subr.bf16.mxu0 0
        %3158 = vmatpush1.bf16.msra.mxu0 %v3134
        %3159 = vmatprep.subr.bf16.mxu0 0
        %3160 = vmatpush1.bf16.msra.mxu0 0
        %3161 = vmatprep.subr.bf16.mxu0 0
        %3162 = vmatpush1.bf16.msra.mxu0 0
        %3163 = vmatprep.subr.bf16.mxu0 0
        %3164 = vmatpush1.bf16.msra.mxu0 0
        %3165 = vmatprep.subr.bf16.mxu0 0
        %3166 = vmatpush1.bf16.msra.mxu0 0
        %3167 = vmatprep.subr.bf16.mxu0 0
        %3168 = vmatpush1.bf16.msra.mxu0 0
        %3169 = vmatprep.subr.bf16.mxu0 0
        %3170 = vmatpush1.bf16.msra.mxu0 0
        %3171 = vmatprep.subr.bf16.mxu0 0
        %3172 = vmatpush1.bf16.msra.mxu0 0
        %3173 = vmatprep.subr.bf16.mxu0 0
        %3174 = vmatpush1.bf16.msra.mxu0 0
        %3175 = vmatprep.mubr.bf16.mxu0 0
        %3176 = vmatmul.mubr.bf16.gmra.mrb[0].mxu0 %v2950
        %v3177 = vpop.f32.mrb[0].mxu0
        %v3178 = vadd.f32 0.0, %v3177
        %v3179 = vpop.f32.mrb[0].mxu0
        %v3180 = vpop.f32.mrb[0].mxu0
        %v3181 = vadd.f32 0.0, %v3180
        %v3182 = vpop.f32.mrb[0].mxu0
        %3183 = vmatprep.mubr.bf16.mxu0 0
        %3184 = vmatmul.mubr.bf16.gmra.mrb[0].mxu0 %v2967
        %v3185 = vpop.f32.mrb[0].mxu0
        %v3186 = vadd.f32 0.0, %v3185
        %v3187 = vpop.f32.mrb[0].mxu0
        %v3188 = vpop.f32.mrb[0].mxu0
        %v3189 = vadd.f32 0.0, %v3188
        %v3190 = vpop.f32.mrb[0].mxu0
        %3191 = vmatprep.mubr.bf16.mxu0 0
        %3192 = vmatmul.mubr.bf16.gmra.mrb[0].mxu0 %v2984
        %v3193 = vpop.f32.mrb[0].mxu0
        %v3194 = vadd.f32 0.0, %v3193
        %v3195 = vpop.f32.mrb[0].mxu0
        %v3196 = vpop.f32.mrb[0].mxu0
        %v3197 = vadd.f32 0.0, %v3196
        %v3198 = vpop.f32.mrb[0].mxu0
        %3199 = vmatprep.mubr.bf16.mxu0 0
        %3200 = vmatmul.mubr.bf16.gmra.mrb[0].mxu0 %v3001
        %v3201 = vpop.f32.mrb[0].mxu0
        %v3202 = vadd.f32 0.0, %v3201
        %v3203 = vpop.f32.mrb[0].mxu0
        %v3204 = vpop.f32.mrb[0].mxu0
        %v3205 = vadd.f32 0.0, %v3204
        %v3206 = vpop.f32.mrb[0].mxu0
        %3207 = vmatprep.mubr.bf16.mxu0 0
        %3208 = vmatmul.mubr.bf16.gmra.mrb[0].mxu0 %v3018
        %v3209 = vpop.f32.mrb[0].mxu0
        %v3210 = vadd.f32 0.0, %v3209
        %v3211 = vpop.f32.mrb[0].mxu0
        %v3212 = vpop.f32.mrb[0].mxu0
        %v3213 = vadd.f32 0.0, %v3212
        %v3214 = vpop.f32.mrb[0].mxu0
        %3215 = vmatprep.mubr.bf16.mxu0 0
        %3216 = vmatmul.mubr.bf16.gmra.mrb[0].mxu0 %v3035
        %v3217 = vpop.f32.mrb[0].mxu0
        %v3218 = vadd.f32 0.0, %v3217
        %v3219 = vpop.f32.mrb[0].mxu0
        %v3220 = vpop.f32.mrb[0].mxu0
        %v3221 = vadd.f32 0.0, %v3220
        %v3222 = vpop.f32.mrb[0].mxu0
        %3223 = vmatprep.mubr.bf16.mxu0 0
        %3224 = vmatmul.mubr.bf16.gmra.mrb[0].mxu0 %v3052
        %v3225 = vpop.f32.mrb[0].mxu0
        %v3226 = vadd.f32 0.0, %v3225
        %v3227 = vpop.f32.mrb[0].mxu0
        %v3228 = vpop.f32.mrb[0].mxu0
        %v3229 = vadd.f32 0.0, %v3228
        %v3230 = vpop.f32.mrb[0].mxu0
        %3231 = vmatprep.mubr.bf16.mxu0 0
        %3232 = vmatmul.mubr.bf16.gmra.mrb[0].mxu0 %v3069
        %v3233 = vpop.f32.mrb[0].mxu0
        %v3234 = vadd.f32 0.0, %v3233
        %v3235 = vpop.f32.mrb[0].mxu0
        %v3236 = vpop.f32.mrb[0].mxu0
        %v3237 = vadd.f32 0.0, %v3236
        %v3238 = vpop.f32.mrb[0].mxu0
        %3239 = vdwg.mxu0
        %v3240 = vadd.f32 %v2910, %v3178
        %v3241 = vadd.f32 %v2911, %v3181
        %v3242 = vadd.f32 %v2912, %v3186
        %v3243 = vadd.f32 %v2913, %v3189
        %v3244 = vadd.f32 %v2914, %v3194
        %v3245 = vadd.f32 %v2915, %v3197
        %v3246 = vadd.f32 %v2916, %v3202
        %v3247 = vadd.f32 %v2917, %v3205
        %v3248 = vadd.f32 %v2918, %v3210
        %v3249 = vadd.f32 %v2919, %v3213
        %v3250 = vadd.f32 %v2920, %v3218
        %v3251 = vadd.f32 %v2921, %v3221
        %v3252 = vadd.f32 %v2922, %v3226
        %v3253 = vadd.f32 %v2923, %v3229
        %v3254 = vadd.f32 %v2924, %v3234
        %v3255 = vadd.f32 %v2925, %v3237
        %s3256 = scalar_lea.vmem [#allocation2], 32
        %v3257 = vld [vmem:[%s3256] sm:$0xf8]
        %v3258 = vld [vmem:[%s3256 + $0x8] sm:$0xf]
        %v3259 = vld [vmem:[%s3256 + $0x10] sm:$0xf8]
        %v3260 = vld [vmem:[%s3256 + $0x18] sm:$0xf]
        %v3261 = vld [vmem:[%s3256 + $0x20] sm:$0xf8]
        %v3262 = vld [vmem:[%s3256 + $0x28] sm:$0xf]
        %v3263 = vld [vmem:[%s3256 + $0x30] sm:$0xf8]
        %v3264 = vld [vmem:[%s3256 + $0x38] sm:$0xf]
        %v3265 = vld [vmem:[%s3256 + $0x40] sm:$0xf8]
        %v3266 = vld [vmem:[%s3256 + $0x48] sm:$0xf]
        %v3267 = vld [vmem:[%s3256 + $0x50] sm:$0xf8]
        %v3268 = vld [vmem:[%s3256 + $0x58] sm:$0xf]
        %v3269 = vld [vmem:[%s3256 + $0x60] sm:$0xf8]
        %v3270 = vld [vmem:[%s3256 + $0x68] sm:$0xf]
        %v3271 = vld [vmem:[%s3256 + $0x70] sm:$0xf8]
        %v3272 = vld [vmem:[%s3256 + $0x78] sm:$0xf]
        %v3274 = vshrl.u32 %v3257, 16
        %v3276 = vrot.slane %v3274, 3
        %v3277 = vshll.u32 %v3257, 16
        %v3279 = vrot.slane %v3277, 4
        %v3280 = vor.u32 %v3276, %v3279
        %v3282 = vshrl.u32 %v3258, 16
        %v3284 = vrot.slane %v3282, 3
        %v3285 = vshll.u32 %v3258, 16
        %v3287 = vrot.slane %v3285, 4
        %v3288 = vor.u32 %v3284, %v3287
        %v3289 = vsel %vm471, %v3280, %v3288
        %v3291 = vshrl.u32 %v3259, 16
        %v3293 = vrot.slane %v3291, 3
        %v3294 = vshll.u32 %v3259, 16
        %v3296 = vrot.slane %v3294, 4
        %v3297 = vor.u32 %v3293, %v3296
        %v3299 = vshrl.u32 %v3260, 16
        %v3301 = vrot.slane %v3299, 3
        %v3302 = vshll.u32 %v3260, 16
        %v3304 = vrot.slane %v3302, 4
        %v3305 = vor.u32 %v3301, %v3304
        %v3306 = vsel %vm471, %v3297, %v3305
        %v3308 = vshrl.u32 %v3261, 16
        %v3310 = vrot.slane %v3308, 3
        %v3311 = vshll.u32 %v3261, 16
        %v3313 = vrot.slane %v3311, 4
        %v3314 = vor.u32 %v3310, %v3313
        %v3316 = vshrl.u32 %v3262, 16
        %v3318 = vrot.slane %v3316, 3
        %v3319 = vshll.u32 %v3262, 16
        %v3321 = vrot.slane %v3319, 4
        %v3322 = vor.u32 %v3318, %v3321
        %v3323 = vsel %vm471, %v3314, %v3322
        %v3325 = vshrl.u32 %v3263, 16
        %v3327 = vrot.slane %v3325, 3
        %v3328 = vshll.u32 %v3263, 16
        %v3330 = vrot.slane %v3328, 4
        %v3331 = vor.u32 %v3327, %v3330
        %v3333 = vshrl.u32 %v3264, 16
        %v3335 = vrot.slane %v3333, 3
        %v3336 = vshll.u32 %v3264, 16
        %v3338 = vrot.slane %v3336, 4
        %v3339 = vor.u32 %v3335, %v3338
        %v3340 = vsel %vm471, %v3331, %v3339
        %v3342 = vshrl.u32 %v3265, 16
        %v3344 = vrot.slane %v3342, 3
        %v3345 = vshll.u32 %v3265, 16
        %v3347 = vrot.slane %v3345, 4
        %v3348 = vor.u32 %v3344, %v3347
        %v3350 = vshrl.u32 %v3266, 16
        %v3352 = vrot.slane %v3350, 3
        %v3353 = vshll.u32 %v3266, 16
        %v3355 = vrot.slane %v3353, 4
        %v3356 = vor.u32 %v3352, %v3355
        %v3357 = vsel %vm471, %v3348, %v3356
        %v3359 = vshrl.u32 %v3267, 16
        %v3361 = vrot.slane %v3359, 3
        %v3362 = vshll.u32 %v3267, 16
        %v3364 = vrot.slane %v3362, 4
        %v3365 = vor.u32 %v3361, %v3364
        %v3367 = vshrl.u32 %v3268, 16
        %v3369 = vrot.slane %v3367, 3
        %v3370 = vshll.u32 %v3268, 16
        %v3372 = vrot.slane %v3370, 4
        %v3373 = vor.u32 %v3369, %v3372
        %v3374 = vsel %vm471, %v3365, %v3373
        %v3376 = vshrl.u32 %v3269, 16
        %v3378 = vrot.slane %v3376, 3
        %v3379 = vshll.u32 %v3269, 16
        %v3381 = vrot.slane %v3379, 4
        %v3382 = vor.u32 %v3378, %v3381
        %v3384 = vshrl.u32 %v3270, 16
        %v3386 = vrot.slane %v3384, 3
        %v3387 = vshll.u32 %v3270, 16
        %v3389 = vrot.slane %v3387, 4
        %v3390 = vor.u32 %v3386, %v3389
        %v3391 = vsel %vm471, %v3382, %v3390
        %v3393 = vshrl.u32 %v3271, 16
        %v3395 = vrot.slane %v3393, 3
        %v3396 = vshll.u32 %v3271, 16
        %v3398 = vrot.slane %v3396, 4
        %v3399 = vor.u32 %v3395, %v3398
        %v3401 = vshrl.u32 %v3272, 16
        %v3403 = vrot.slane %v3401, 3
        %v3404 = vshll.u32 %v3272, 16
        %v3406 = vrot.slane %v3404, 4
        %v3407 = vor.u32 %v3403, %v3406
        %v3408 = vsel %vm471, %v3399, %v3407
        %s3417 = scalar_lea.vmem [#allocation11], 384
        %v3418 = vld [vmem:[%s3417] sm:$0xf]
        %v3419 = vld [vmem:[%s3417 + $0x4] sm:$0xf]
        %v3420 = vld [vmem:[%s3417 + $0x8] sm:$0xf]
        %v3421 = vld [vmem:[%s3417 + $0xc] sm:$0xf]
        %v3422 = vld [vmem:[%s3417 + $0x10] sm:$0xf]
        %v3423 = vld [vmem:[%s3417 + $0x14] sm:$0xf]
        %v3424 = vld [vmem:[%s3417 + $0x18] sm:$0xf]
        %v3425 = vld [vmem:[%s3417 + $0x1c] sm:$0xf]
        %v3426 = vld [vmem:[%s3417 + $0x20] sm:$0xf]
        %v3427 = vld [vmem:[%s3417 + $0x24] sm:$0xf]
        %v3428 = vld [vmem:[%s3417 + $0x28] sm:$0xf]
        %v3429 = vld [vmem:[%s3417 + $0x2c] sm:$0xf]
        %v3430 = vld [vmem:[%s3417 + $0x30] sm:$0xf]
        %v3431 = vld [vmem:[%s3417 + $0x34] sm:$0xf]
        %v3432 = vld [vmem:[%s3417 + $0x38] sm:$0xf]
        %v3433 = vld [vmem:[%s3417 + $0x3c] sm:$0xf]
        %v3450 = vunpack.c.l.b16 %v3418
        %v3451 = vunpack.c.l.b16 %v3419
        %v3452 = vunpack.c.l.b16 %v3420
        %v3453 = vunpack.c.l.b16 %v3421
        %v3454 = vunpack.c.l.b16 %v3422
        %v3455 = vunpack.c.l.b16 %v3423
        %v3456 = vunpack.c.l.b16 %v3424
        %v3457 = vunpack.c.l.b16 %v3425
        %v3458 = vunpack.c.l.b16 %v3426
        %v3459 = vunpack.c.l.b16 %v3427
        %v3460 = vunpack.c.l.b16 %v3428
        %v3461 = vunpack.c.l.b16 %v3429
        %v3462 = vunpack.c.l.b16 %v3430
        %v3463 = vunpack.c.l.b16 %v3431
        %v3464 = vunpack.c.l.b16 %v3432
        %v3465 = vunpack.c.l.b16 %v3433
        %v3466 = vpack.c.b16 %v3451, %v3450
        %v3467 = vpack.c.b16 %v3453, %v3452
        %v3468 = vpack.c.b16 %v3455, %v3454
        %v3469 = vpack.c.b16 %v3457, %v3456
        %v3470 = vpack.c.b16 %v3459, %v3458
        %v3471 = vpack.c.b16 %v3461, %v3460
        %v3472 = vpack.c.b16 %v3463, %v3462
        %v3473 = vpack.c.b16 %v3465, %v3464
        %3482 = vmatprep.subr.bf16.mxu0 0
        %3483 = vmatpush1.bf16.msra.mxu0 %v3466
        %3484 = vmatprep.subr.bf16.mxu0 0
        %3485 = vmatpush1.bf16.msra.mxu0 %v3467
        %3486 = vmatprep.subr.bf16.mxu0 0
        %3487 = vmatpush1.bf16.msra.mxu0 %v3468
        %3488 = vmatprep.subr.bf16.mxu0 0
        %3489 = vmatpush1.bf16.msra.mxu0 %v3469
        %3490 = vmatprep.subr.bf16.mxu0 0
        %3491 = vmatpush1.bf16.msra.mxu0 %v3470
        %3492 = vmatprep.subr.bf16.mxu0 0
        %3493 = vmatpush1.bf16.msra.mxu0 %v3471
        %3494 = vmatprep.subr.bf16.mxu0 0
        %3495 = vmatpush1.bf16.msra.mxu0 %v3472
        %3496 = vmatprep.subr.bf16.mxu0 0
        %3497 = vmatpush1.bf16.msra.mxu0 %v3473
        %3498 = vmatprep.subr.bf16.mxu0 0
        %3499 = vmatpush1.bf16.msra.mxu0 0
        %3500 = vmatprep.subr.bf16.mxu0 0
        %3501 = vmatpush1.bf16.msra.mxu0 0
        %3502 = vmatprep.subr.bf16.mxu0 0
        %3503 = vmatpush1.bf16.msra.mxu0 0
        %3504 = vmatprep.subr.bf16.mxu0 0
        %3505 = vmatpush1.bf16.msra.mxu0 0
        %3506 = vmatprep.subr.bf16.mxu0 0
        %3507 = vmatpush1.bf16.msra.mxu0 0
        %3508 = vmatprep.subr.bf16.mxu0 0
        %3509 = vmatpush1.bf16.msra.mxu0 0
        %3510 = vmatprep.subr.bf16.mxu0 0
        %3511 = vmatpush1.bf16.msra.mxu0 0
        %3512 = vmatprep.subr.bf16.mxu0 0
        %3513 = vmatpush1.bf16.msra.mxu0 0
        %3514 = vmatprep.mubr.bf16.mxu0 0
        %3515 = vmatmul.mubr.bf16.gmra.mrb[0].mxu0 %v3289
        %v3516 = vpop.f32.mrb[0].mxu0
        %v3517 = vadd.f32 0.0, %v3516
        %v3518 = vpop.f32.mrb[0].mxu0
        %v3519 = vpop.f32.mrb[0].mxu0
        %v3520 = vadd.f32 0.0, %v3519
        %v3521 = vpop.f32.mrb[0].mxu0
        %3522 = vmatprep.mubr.bf16.mxu0 0
        %3523 = vmatmul.mubr.bf16.gmra.mrb[0].mxu0 %v3306
        %v3524 = vpop.f32.mrb[0].mxu0
        %v3525 = vadd.f32 0.0, %v3524
        %v3526 = vpop.f32.mrb[0].mxu0
        %v3527 = vpop.f32.mrb[0].mxu0
        %v3528 = vadd.f32 0.0, %v3527
        %v3529 = vpop.f32.mrb[0].mxu0
        %3530 = vmatprep.mubr.bf16.mxu0 0
        %3531 = vmatmul.mubr.bf16.gmra.mrb[0].mxu0 %v3323
        %v3532 = vpop.f32.mrb[0].mxu0
        %v3533 = vadd.f32 0.0, %v3532
        %v3534 = vpop.f32.mrb[0].mxu0
        %v3535 = vpop.f32.mrb[0].mxu0
        %v3536 = vadd.f32 0.0, %v3535
        %v3537 = vpop.f32.mrb[0].mxu0
        %3538 = vmatprep.mubr.bf16.mxu0 0
        %3539 = vmatmul.mubr.bf16.gmra.mrb[0].mxu0 %v3340
        %v3540 = vpop.f32.mrb[0].mxu0
        %v3541 = vadd.f32 0.0, %v3540
        %v3542 = vpop.f32.mrb[0].mxu0
        %v3543 = vpop.f32.mrb[0].mxu0
        %v3544 = vadd.f32 0.0, %v3543
        %v3545 = vpop.f32.mrb[0].mxu0
        %3546 = vmatprep.mubr.bf16.mxu0 0
        %3547 = vmatmul.mubr.bf16.gmra.mrb[0].mxu0 %v3357
        %v3548 = vpop.f32.mrb[0].mxu0
        %v3549 = vadd.f32 0.0, %v3548
        %v3550 = vpop.f32.mrb[0].mxu0
        %v3551 = vpop.f32.mrb[0].mxu0
        %v3552 = vadd.f32 0.0, %v3551
        %v3553 = vpop.f32.mrb[0].mxu0
        %3554 = vmatprep.mubr.bf16.mxu0 0
        %3555 = vmatmul.mubr.bf16.gmra.mrb[0].mxu0 %v3374
        %v3556 = vpop.f32.mrb[0].mxu0
        %v3557 = vadd.f32 0.0, %v3556
        %v3558 = vpop.f32.mrb[0].mxu0
        %v3559 = vpop.f32.mrb[0].mxu0
        %v3560 = vadd.f32 0.0, %v3559
        %v3561 = vpop.f32.mrb[0].mxu0
        %3562 = vmatprep.mubr.bf16.mxu0 0
        %3563 = vmatmul.mubr.bf16.gmra.mrb[0].mxu0 %v3391
        %v3564 = vpop.f32.mrb[0].mxu0
        %v3565 = vadd.f32 0.0, %v3564
        %v3566 = vpop.f32.mrb[0].mxu0
        %v3567 = vpop.f32.mrb[0].mxu0
        %v3568 = vadd.f32 0.0, %v3567
        %v3569 = vpop.f32.mrb[0].mxu0
        %3570 = vmatprep.mubr.bf16.mxu0 0
        %3571 = vmatmul.mubr.bf16.gmra.mrb[0].mxu0 %v3408
        %v3572 = vpop.f32.mrb[0].mxu0
        %v3573 = vadd.f32 0.0, %v3572
        %v3574 = vpop.f32.mrb[0].mxu0
        %v3575 = vpop.f32.mrb[0].mxu0
        %v3576 = vadd.f32 0.0, %v3575
        %v3577 = vpop.f32.mrb[0].mxu0
        %3578 = vdwg.mxu0
        %v3579 = vadd.f32 %v3240, %v3517
        %v3580 = vadd.f32 %v3241, %v3520
        %v3581 = vadd.f32 %v3242, %v3525
        %v3582 = vadd.f32 %v3243, %v3528
        %v3583 = vadd.f32 %v3244, %v3533
        %v3584 = vadd.f32 %v3245, %v3536
        %v3585 = vadd.f32 %v3246, %v3541
        %v3586 = vadd.f32 %v3247, %v3544
        %v3587 = vadd.f32 %v3248, %v3549
        %v3588 = vadd.f32 %v3249, %v3552
        %v3589 = vadd.f32 %v3250, %v3557
        %v3590 = vadd.f32 %v3251, %v3560
        %v3591 = vadd.f32 %v3252, %v3565
        %v3592 = vadd.f32 %v3253, %v3568
        %v3593 = vadd.f32 %v3254, %v3573
        %v3594 = vadd.f32 %v3255, %v3576
        %v3595 = vld [vmem:[%s3256] sm:$0xf0]
        %v3596 = vld [vmem:[%s3256 + $0x10] sm:$0xf0]
        %v3597 = vld [vmem:[%s3256 + $0x20] sm:$0xf0]
        %v3598 = vld [vmem:[%s3256 + $0x30] sm:$0xf0]
        %v3599 = vld [vmem:[%s3256 + $0x40] sm:$0xf0]
        %v3600 = vld [vmem:[%s3256 + $0x50] sm:$0xf0]
        %v3601 = vld [vmem:[%s3256 + $0x60] sm:$0xf0]
        %v3602 = vld [vmem:[%s3256 + $0x70] sm:$0xf0]
        %v3619 = vrot.slane %v3595, 4
        %v3620 = vrot.slane %v3258, 4
        %v3621 = vsel %vm1683, %v3619, %v3620
        %v3622 = vrot.slane %v3596, 4
        %v3623 = vrot.slane %v3260, 4
        %v3624 = vsel %vm1683, %v3622, %v3623
        %v3625 = vrot.slane %v3597, 4
        %v3626 = vrot.slane %v3262, 4
        %v3627 = vsel %vm1683, %v3625, %v3626
        %v3628 = vrot.slane %v3598, 4
        %v3629 = vrot.slane %v3264, 4
        %v3630 = vsel %vm1683, %v3628, %v3629
        %v3631 = vrot.slane %v3599, 4
        %v3632 = vrot.slane %v3266, 4
        %v3633 = vsel %vm1683, %v3631, %v3632
        %v3634 = vrot.slane %v3600, 4
        %v3635 = vrot.slane %v3268, 4
        %v3636 = vsel %vm1683, %v3634, %v3635
        %v3637 = vrot.slane %v3601, 4
        %v3638 = vrot.slane %v3270, 4
        %v3639 = vsel %vm1683, %v3637, %v3638
        %v3640 = vrot.slane %v3602, 4
        %v3641 = vrot.slane %v3272, 4
        %v3642 = vsel %vm1683, %v3640, %v3641
        %s3651 = scalar_lea.vmem [#allocation11], 448
        %v3652 = vld [vmem:[%s3651] sm:$0xf]
        %v3653 = vld [vmem:[%s3651 + $0x4] sm:$0xf]
        %v3654 = vld [vmem:[%s3651 + $0x8] sm:$0xf]
        %v3655 = vld [vmem:[%s3651 + $0xc] sm:$0xf]
        %v3656 = vld [vmem:[%s3651 + $0x10] sm:$0xf]
        %v3657 = vld [vmem:[%s3651 + $0x14] sm:$0xf]
        %v3658 = vld [vmem:[%s3651 + $0x18] sm:$0xf]
        %v3659 = vld [vmem:[%s3651 + $0x1c] sm:$0xf]
        %v3660 = vld [vmem:[%s3651 + $0x20] sm:$0xf]
        %v3661 = vld [vmem:[%s3651 + $0x24] sm:$0xf]
        %v3662 = vld [vmem:[%s3651 + $0x28] sm:$0xf]
        %v3663 = vld [vmem:[%s3651 + $0x2c] sm:$0xf]
        %v3664 = vld [vmem:[%s3651 + $0x30] sm:$0xf]
        %v3665 = vld [vmem:[%s3651 + $0x34] sm:$0xf]
        %v3666 = vld [vmem:[%s3651 + $0x38] sm:$0xf]
        %v3667 = vld [vmem:[%s3651 + $0x3c] sm:$0xf]
        %v3684 = vunpack.c.l.b16 %v3652
        %v3685 = vunpack.c.l.b16 %v3653
        %v3686 = vunpack.c.l.b16 %v3654
        %v3687 = vunpack.c.l.b16 %v3655
        %v3688 = vunpack.c.l.b16 %v3656
        %v3689 = vunpack.c.l.b16 %v3657
        %v3690 = vunpack.c.l.b16 %v3658
        %v3691 = vunpack.c.l.b16 %v3659
        %v3692 = vunpack.c.l.b16 %v3660
        %v3693 = vunpack.c.l.b16 %v3661
        %v3694 = vunpack.c.l.b16 %v3662
        %v3695 = vunpack.c.l.b16 %v3663
        %v3696 = vunpack.c.l.b16 %v3664
        %v3697 = vunpack.c.l.b16 %v3665
        %v3698 = vunpack.c.l.b16 %v3666
        %v3699 = vunpack.c.l.b16 %v3667
        %v3700 = vpack.c.b16 %v3685, %v3684
        %v3701 = vpack.c.b16 %v3687, %v3686
        %v3702 = vpack.c.b16 %v3689, %v3688
        %v3703 = vpack.c.b16 %v3691, %v3690
        %v3704 = vpack.c.b16 %v3693, %v3692
        %v3705 = vpack.c.b16 %v3695, %v3694
        %v3706 = vpack.c.b16 %v3697, %v3696
        %v3707 = vpack.c.b16 %v3699, %v3698
        %3716 = vmatprep.subr.bf16.mxu0 0
        %3717 = vmatpush1.bf16.msra.mxu0 %v3700
        %3718 = vmatprep.subr.bf16.mxu0 0
        %3719 = vmatpush1.bf16.msra.mxu0 %v3701
        %3720 = vmatprep.subr.bf16.mxu0 0
        %3721 = vmatpush1.bf16.msra.mxu0 %v3702
        %3722 = vmatprep.subr.bf16.mxu0 0
        %3723 = vmatpush1.bf16.msra.mxu0 %v3703
        %3724 = vmatprep.subr.bf16.mxu0 0
        %3725 = vmatpush1.bf16.msra.mxu0 %v3704
        %3726 = vmatprep.subr.bf16.mxu0 0
        %3727 = vmatpush1.bf16.msra.mxu0 %v3705
        %3728 = vmatprep.subr.bf16.mxu0 0
        %3729 = vmatpush1.bf16.msra.mxu0 %v3706
        %3730 = vmatprep.subr.bf16.mxu0 0
        %3731 = vmatpush1.bf16.msra.mxu0 %v3707
        %3732 = vmatprep.subr.bf16.mxu0 0
        %3733 = vmatpush1.bf16.msra.mxu0 0
        %3734 = vmatprep.subr.bf16.mxu0 0
        %3735 = vmatpush1.bf16.msra.mxu0 0
        %3736 = vmatprep.subr.bf16.mxu0 0
        %3737 = vmatpush1.bf16.msra.mxu0 0
        %3738 = vmatprep.subr.bf16.mxu0 0
        %3739 = vmatpush1.bf16.msra.mxu0 0
        %3740 = vmatprep.subr.bf16.mxu0 0
        %3741 = vmatpush1.bf16.msra.mxu0 0
        %3742 = vmatprep.subr.bf16.mxu0 0
        %3743 = vmatpush1.bf16.msra.mxu0 0
        %3744 = vmatprep.subr.bf16.mxu0 0
        %3745 = vmatpush1.bf16.msra.mxu0 0
        %3746 = vmatprep.subr.bf16.mxu0 0
        %3747 = vmatpush1.bf16.msra.mxu0 0
        %3748 = vmatprep.mubr.bf16.mxu0 0
        %3749 = vmatmul.mubr.bf16.gmra.mrb[0].mxu0 %v3621
        %v3750 = vpop.f32.mrb[0].mxu0
        %v3751 = vadd.f32 0.0, %v3750
        %v3752 = vpop.f32.mrb[0].mxu0
        %v3753 = vpop.f32.mrb[0].mxu0
        %v3754 = vadd.f32 0.0, %v3753
        %v3755 = vpop.f32.mrb[0].mxu0
        %3756 = vmatprep.mubr.bf16.mxu0 0
        %3757 = vmatmul.mubr.bf16.gmra.mrb[0].mxu0 %v3624
        %v3758 = vpop.f32.mrb[0].mxu0
        %v3759 = vadd.f32 0.0, %v3758
        %v3760 = vpop.f32.mrb[0].mxu0
        %v3761 = vpop.f32.mrb[0].mxu0
        %v3762 = vadd.f32 0.0, %v3761
        %v3763 = vpop.f32.mrb[0].mxu0
        %3764 = vmatprep.mubr.bf16.mxu0 0
        %3765 = vmatmul.mubr.bf16.gmra.mrb[0].mxu0 %v3627
        %v3766 = vpop.f32.mrb[0].mxu0
        %v3767 = vadd.f32 0.0, %v3766
        %v3768 = vpop.f32.mrb[0].mxu0
        %v3769 = vpop.f32.mrb[0].mxu0
        %v3770 = vadd.f32 0.0, %v3769
        %v3771 = vpop.f32.mrb[0].mxu0
        %3772 = vmatprep.mubr.bf16.mxu0 0
        %3773 = vmatmul.mubr.bf16.gmra.mrb[0].mxu0 %v3630
        %v3774 = vpop.f32.mrb[0].mxu0
        %v3775 = vadd.f32 0.0, %v3774
        %v3776 = vpop.f32.mrb[0].mxu0
        %v3777 = vpop.f32.mrb[0].mxu0
        %v3778 = vadd.f32 0.0, %v3777
        %v3779 = vpop.f32.mrb[0].mxu0
        %3780 = vmatprep.mubr.bf16.mxu0 0
        %3781 = vmatmul.mubr.bf16.gmra.mrb[0].mxu0 %v3633
        %v3782 = vpop.f32.mrb[0].mxu0
        %v3783 = vadd.f32 0.0, %v3782
        %v3784 = vpop.f32.mrb[0].mxu0
        %v3785 = vpop.f32.mrb[0].mxu0
        %v3786 = vadd.f32 0.0, %v3785
        %v3787 = vpop.f32.mrb[0].mxu0
        %3788 = vmatprep.mubr.bf16.mxu0 0
        %3789 = vmatmul.mubr.bf16.gmra.mrb[0].mxu0 %v3636
        %v3790 = vpop.f32.mrb[0].mxu0
        %v3791 = vadd.f32 0.0, %v3790
        %v3792 = vpop.f32.mrb[0].mxu0
        %v3793 = vpop.f32.mrb[0].mxu0
        %v3794 = vadd.f32 0.0, %v3793
        %v3795 = vpop.f32.mrb[0].mxu0
        %3796 = vmatprep.mubr.bf16.mxu0 0
        %3797 = vmatmul.mubr.bf16.gmra.mrb[0].mxu0 %v3639
        %v3798 = vpop.f32.mrb[0].mxu0
        %v3799 = vadd.f32 0.0, %v3798
        %v3800 = vpop.f32.mrb[0].mxu0
        %v3801 = vpop.f32.mrb[0].mxu0
        %v3802 = vadd.f32 0.0, %v3801
        %v3803 = vpop.f32.mrb[0].mxu0
        %3804 = vmatprep.mubr.bf16.mxu0 0
        %3805 = vmatmul.mubr.bf16.gmra.mrb[0].mxu0 %v3642
        %v3806 = vpop.f32.mrb[0].mxu0
        %v3807 = vadd.f32 0.0, %v3806
        %v3808 = vpop.f32.mrb[0].mxu0
        %v3809 = vpop.f32.mrb[0].mxu0
        %v3810 = vadd.f32 0.0, %v3809
        %v3811 = vpop.f32.mrb[0].mxu0
        %3812 = vdwg.mxu0
        %v3813 = vadd.f32 %v3579, %v3751
        %v3814 = vadd.f32 %v3580, %v3754
        %v3815 = vadd.f32 %v3581, %v3759
        %v3816 = vadd.f32 %v3582, %v3762
        %v3817 = vadd.f32 %v3583, %v3767
        %v3818 = vadd.f32 %v3584, %v3770
        %v3819 = vadd.f32 %v3585, %v3775
        %v3820 = vadd.f32 %v3586, %v3778
        %v3821 = vadd.f32 %v3587, %v3783
        %v3822 = vadd.f32 %v3588, %v3786
        %v3823 = vadd.f32 %v3589, %v3791
        %v3824 = vadd.f32 %v3590, %v3794
        %v3825 = vadd.f32 %v3591, %v3799
        %v3826 = vadd.f32 %v3592, %v3802
        %v3827 = vadd.f32 %v3593, %v3807
        %v3828 = vadd.f32 %v3594, %v3810
        %v3829 = vld [vmem:[%s3256 + $0x8] sm:$0x1f]
        %v3830 = vld [vmem:[%s3256 + $0x18] sm:$0x1f]
        %v3831 = vld [vmem:[%s3256 + $0x28] sm:$0x1f]
        %v3832 = vld [vmem:[%s3256 + $0x38] sm:$0x1f]
        %v3833 = vld [vmem:[%s3256 + $0x48] sm:$0x1f]
        %v3834 = vld [vmem:[%s3256 + $0x58] sm:$0x1f]
        %v3835 = vld [vmem:[%s3256 + $0x68] sm:$0x1f]
        %v3836 = vld [vmem:[%s3256 + $0x78] sm:$0x1f]
        %v3838 = vshrl.u32 %v3595, 16
        %v3840 = vrot.slane %v3838, 4
        %v3841 = vshll.u32 %v3595, 16
        %v3843 = vrot.slane %v3841, 5
        %v3844 = vor.u32 %v3840, %v3843
        %v3846 = vshrl.u32 %v3829, 16
        %v3848 = vrot.slane %v3846, 4
        %v3849 = vshll.u32 %v3829, 16
        %v3851 = vrot.slane %v3849, 5
        %v3852 = vor.u32 %v3848, %v3851
        %v3853 = vsel %vm2031, %v3844, %v3852
        %v3855 = vshrl.u32 %v3596, 16
        %v3857 = vrot.slane %v3855, 4
        %v3858 = vshll.u32 %v3596, 16
        %v3860 = vrot.slane %v3858, 5
        %v3861 = vor.u32 %v3857, %v3860
        %v3863 = vshrl.u32 %v3830, 16
        %v3865 = vrot.slane %v3863, 4
        %v3866 = vshll.u32 %v3830, 16
        %v3868 = vrot.slane %v3866, 5
        %v3869 = vor.u32 %v3865, %v3868
        %v3870 = vsel %vm2031, %v3861, %v3869
        %v3872 = vshrl.u32 %v3597, 16
        %v3874 = vrot.slane %v3872, 4
        %v3875 = vshll.u32 %v3597, 16
        %v3877 = vrot.slane %v3875, 5
        %v3878 = vor.u32 %v3874, %v3877
        %v3880 = vshrl.u32 %v3831, 16
        %v3882 = vrot.slane %v3880, 4
        %v3883 = vshll.u32 %v3831, 16
        %v3885 = vrot.slane %v3883, 5
        %v3886 = vor.u32 %v3882, %v3885
        %v3887 = vsel %vm2031, %v3878, %v3886
        %v3889 = vshrl.u32 %v3598, 16
        %v3891 = vrot.slane %v3889, 4
        %v3892 = vshll.u32 %v3598, 16
        %v3894 = vrot.slane %v3892, 5
        %v3895 = vor.u32 %v3891, %v3894
        %v3897 = vshrl.u32 %v3832, 16
        %v3899 = vrot.slane %v3897, 4
        %v3900 = vshll.u32 %v3832, 16
        %v3902 = vrot.slane %v3900, 5
        %v3903 = vor.u32 %v3899, %v3902
        %v3904 = vsel %vm2031, %v3895, %v3903
        %v3906 = vshrl.u32 %v3599, 16
        %v3908 = vrot.slane %v3906, 4
        %v3909 = vshll.u32 %v3599, 16
        %v3911 = vrot.slane %v3909, 5
        %v3912 = vor.u32 %v3908, %v3911
        %v3914 = vshrl.u32 %v3833, 16
        %v3916 = vrot.slane %v3914, 4
        %v3917 = vshll.u32 %v3833, 16
        %v3919 = vrot.slane %v3917, 5
        %v3920 = vor.u32 %v3916, %v3919
        %v3921 = vsel %vm2031, %v3912, %v3920
        %v3923 = vshrl.u32 %v3600, 16
        %v3925 = vrot.slane %v3923, 4
        %v3926 = vshll.u32 %v3600, 16
        %v3928 = vrot.slane %v3926, 5
        %v3929 = vor.u32 %v3925, %v3928
        %v3931 = vshrl.u32 %v3834, 16
        %v3933 = vrot.slane %v3931, 4
        %v3934 = vshll.u32 %v3834, 16
        %v3936 = vrot.slane %v3934, 5
        %v3937 = vor.u32 %v3933, %v3936
        %v3938 = vsel %vm2031, %v3929, %v3937
        %v3940 = vshrl.u32 %v3601, 16
        %v3942 = vrot.slane %v3940, 4
        %v3943 = vshll.u32 %v3601, 16
        %v3945 = vrot.slane %v3943, 5
        %v3946 = vor.u32 %v3942, %v3945
        %v3948 = vshrl.u32 %v3835, 16
        %v3950 = vrot.slane %v3948, 4
        %v3951 = vshll.u32 %v3835, 16
        %v3953 = vrot.slane %v3951, 5
        %v3954 = vor.u32 %v3950, %v3953
        %v3955 = vsel %vm2031, %v3946, %v3954
        %v3957 = vshrl.u32 %v3602, 16
        %v3959 = vrot.slane %v3957, 4
        %v3960 = vshll.u32 %v3602, 16
        %v3962 = vrot.slane %v3960, 5
        %v3963 = vor.u32 %v3959, %v3962
        %v3965 = vshrl.u32 %v3836, 16
        %v3967 = vrot.slane %v3965, 4
        %v3968 = vshll.u32 %v3836, 16
        %v3970 = vrot.slane %v3968, 5
        %v3971 = vor.u32 %v3967, %v3970
        %v3972 = vsel %vm2031, %v3963, %v3971
        %s3981 = scalar_lea.vmem [#allocation11], 512
        %v3982 = vld [vmem:[%s3981] sm:$0xf]
        %v3983 = vld [vmem:[%s3981 + $0x4] sm:$0xf]
        %v3984 = vld [vmem:[%s3981 + $0x8] sm:$0xf]
        %v3985 = vld [vmem:[%s3981 + $0xc] sm:$0xf]
        %v3986 = vld [vmem:[%s3981 + $0x10] sm:$0xf]
        %v3987 = vld [vmem:[%s3981 + $0x14] sm:$0xf]
        %v3988 = vld [vmem:[%s3981 + $0x18] sm:$0xf]
        %v3989 = vld [vmem:[%s3981 + $0x1c] sm:$0xf]
        %v3990 = vld [vmem:[%s3981 + $0x20] sm:$0xf]
        %v3991 = vld [vmem:[%s3981 + $0x24] sm:$0xf]
        %v3992 = vld [vmem:[%s3981 + $0x28] sm:$0xf]
        %v3993 = vld [vmem:[%s3981 + $0x2c] sm:$0xf]
        %v3994 = vld [vmem:[%s3981 + $0x30] sm:$0xf]
        %v3995 = vld [vmem:[%s3981 + $0x34] sm:$0xf]
        %v3996 = vld [vmem:[%s3981 + $0x38] sm:$0xf]
        %v3997 = vld [vmem:[%s3981 + $0x3c] sm:$0xf]
        %v4014 = vunpack.c.l.b16 %v3982
        %v4015 = vunpack.c.l.b16 %v3983
        %v4016 = vunpack.c.l.b16 %v3984
        %v4017 = vunpack.c.l.b16 %v3985
        %v4018 = vunpack.c.l.b16 %v3986
        %v4019 = vunpack.c.l.b16 %v3987
        %v4020 = vunpack.c.l.b16 %v3988
        %v4021 = vunpack.c.l.b16 %v3989
        %v4022 = vunpack.c.l.b16 %v3990
        %v4023 = vunpack.c.l.b16 %v3991
        %v4024 = vunpack.c.l.b16 %v3992
        %v4025 = vunpack.c.l.b16 %v3993
        %v4026 = vunpack.c.l.b16 %v3994
        %v4027 = vunpack.c.l.b16 %v3995
        %v4028 = vunpack.c.l.b16 %v3996
        %v4029 = vunpack.c.l.b16 %v3997
        %v4030 = vpack.c.b16 %v4015, %v4014
        %v4031 = vpack.c.b16 %v4017, %v4016
        %v4032 = vpack.c.b16 %v4019, %v4018
        %v4033 = vpack.c.b16 %v4021, %v4020
        %v4034 = vpack.c.b16 %v4023, %v4022
        %v4035 = vpack.c.b16 %v4025, %v4024
        %v4036 = vpack.c.b16 %v4027, %v4026
        %v4037 = vpack.c.b16 %v4029, %v4028
        %4046 = vmatprep.subr.bf16.mxu0 0
        %4047 = vmatpush1.bf16.msra.mxu0 %v4030
        %4048 = vmatprep.subr.bf16.mxu0 0
        %4049 = vmatpush1.bf16.msra.mxu0 %v4031
        %4050 = vmatprep.subr.bf16.mxu0 0
        %4051 = vmatpush1.bf16.msra.mxu0 %v4032
        %4052 = vmatprep.subr.bf16.mxu0 0
        %4053 = vmatpush1.bf16.msra.mxu0 %v4033
        %4054 = vmatprep.subr.bf16.mxu0 0
        %4055 = vmatpush1.bf16.msra.mxu0 %v4034
        %4056 = vmatprep.subr.bf16.mxu0 0
        %4057 = vmatpush1.bf16.msra.mxu0 %v4035
        %4058 = vmatprep.subr.bf16.mxu0 0
        %4059 = vmatpush1.bf16.msra.mxu0 %v4036
        %4060 = vmatprep.subr.bf16.mxu0 0
        %4061 = vmatpush1.bf16.msra.mxu0 %v4037
        %4062 = vmatprep.subr.bf16.mxu0 0
        %4063 = vmatpush1.bf16.msra.mxu0 0
        %4064 = vmatprep.subr.bf16.mxu0 0
        %4065 = vmatpush1.bf16.msra.mxu0 0
        %4066 = vmatprep.subr.bf16.mxu0 0
        %4067 = vmatpush1.bf16.msra.mxu0 0
        %4068 = vmatprep.subr.bf16.mxu0 0
        %4069 = vmatpush1.bf16.msra.mxu0 0
        %4070 = vmatprep.subr.bf16.mxu0 0
        %4071 = vmatpush1.bf16.msra.mxu0 0
        %4072 = vmatprep.subr.bf16.mxu0 0
        %4073 = vmatpush1.bf16.msra.mxu0 0
        %4074 = vmatprep.subr.bf16.mxu0 0
        %4075 = vmatpush1.bf16.msra.mxu0 0
        %4076 = vmatprep.subr.bf16.mxu0 0
        %4077 = vmatpush1.bf16.msra.mxu0 0
        %4078 = vmatprep.mubr.bf16.mxu0 0
        %4079 = vmatmul.mubr.bf16.gmra.mrb[0].mxu0 %v3853
        %v4080 = vpop.f32.mrb[0].mxu0
        %v4081 = vadd.f32 0.0, %v4080
        %v4082 = vpop.f32.mrb[0].mxu0
        %v4083 = vpop.f32.mrb[0].mxu0
        %v4084 = vadd.f32 0.0, %v4083
        %v4085 = vpop.f32.mrb[0].mxu0
        %4086 = vmatprep.mubr.bf16.mxu0 0
        %4087 = vmatmul.mubr.bf16.gmra.mrb[0].mxu0 %v3870
        %v4088 = vpop.f32.mrb[0].mxu0
        %v4089 = vadd.f32 0.0, %v4088
        %v4090 = vpop.f32.mrb[0].mxu0
        %v4091 = vpop.f32.mrb[0].mxu0
        %v4092 = vadd.f32 0.0, %v4091
        %v4093 = vpop.f32.mrb[0].mxu0
        %4094 = vmatprep.mubr.bf16.mxu0 0
        %4095 = vmatmul.mubr.bf16.gmra.mrb[0].mxu0 %v3887
        %v4096 = vpop.f32.mrb[0].mxu0
        %v4097 = vadd.f32 0.0, %v4096
        %v4098 = vpop.f32.mrb[0].mxu0
        %v4099 = vpop.f32.mrb[0].mxu0
        %v4100 = vadd.f32 0.0, %v4099
        %v4101 = vpop.f32.mrb[0].mxu0
        %4102 = vmatprep.mubr.bf16.mxu0 0
        %4103 = vmatmul.mubr.bf16.gmra.mrb[0].mxu0 %v3904
        %v4104 = vpop.f32.mrb[0].mxu0
        %v4105 = vadd.f32 0.0, %v4104
        %v4106 = vpop.f32.mrb[0].mxu0
        %v4107 = vpop.f32.mrb[0].mxu0
        %v4108 = vadd.f32 0.0, %v4107
        %v4109 = vpop.f32.mrb[0].mxu0
        %4110 = vmatprep.mubr.bf16.mxu0 0
        %4111 = vmatmul.mubr.bf16.gmra.mrb[0].mxu0 %v3921
        %v4112 = vpop.f32.mrb[0].mxu0
        %v4113 = vadd.f32 0.0, %v4112
        %v4114 = vpop.f32.mrb[0].mxu0
        %v4115 = vpop.f32.mrb[0].mxu0
        %v4116 = vadd.f32 0.0, %v4115
        %v4117 = vpop.f32.mrb[0].mxu0
        %4118 = vmatprep.mubr.bf16.mxu0 0
        %4119 = vmatmul.mubr.bf16.gmra.mrb[0].mxu0 %v3938
        %v4120 = vpop.f32.mrb[0].mxu0
        %v4121 = vadd.f32 0.0, %v4120
        %v4122 = vpop.f32.mrb[0].mxu0
        %v4123 = vpop.f32.mrb[0].mxu0
        %v4124 = vadd.f32 0.0, %v4123
        %v4125 = vpop.f32.mrb[0].mxu0
        %4126 = vmatprep.mubr.bf16.mxu0 0
        %4127 = vmatmul.mubr.bf16.gmra.mrb[0].mxu0 %v3955
        %v4128 = vpop.f32.mrb[0].mxu0
        %v4129 = vadd.f32 0.0, %v4128
        %v4130 = vpop.f32.mrb[0].mxu0
        %v4131 = vpop.f32.mrb[0].mxu0
        %v4132 = vadd.f32 0.0, %v4131
        %v4133 = vpop.f32.mrb[0].mxu0
        %4134 = vmatprep.mubr.bf16.mxu0 0
        %4135 = vmatmul.mubr.bf16.gmra.mrb[0].mxu0 %v3972
        %v4136 = vpop.f32.mrb[0].mxu0
        %v4137 = vadd.f32 0.0, %v4136
        %v4138 = vpop.f32.mrb[0].mxu0
        %v4139 = vpop.f32.mrb[0].mxu0
        %v4140 = vadd.f32 0.0, %v4139
        %v4141 = vpop.f32.mrb[0].mxu0
        %4142 = vdwg.mxu0
        %v4143 = vadd.f32 %v3813, %v4081
        %v4144 = vadd.f32 %v3814, %v4084
        %v4145 = vadd.f32 %v3815, %v4089
        %v4146 = vadd.f32 %v3816, %v4092
        %v4147 = vadd.f32 %v3817, %v4097
        %v4148 = vadd.f32 %v3818, %v4100
        %v4149 = vadd.f32 %v3819, %v4105
        %v4150 = vadd.f32 %v3820, %v4108
        %v4151 = vadd.f32 %v3821, %v4113
        %v4152 = vadd.f32 %v3822, %v4116
        %v4153 = vadd.f32 %v3823, %v4121
        %v4154 = vadd.f32 %v3824, %v4124
        %v4155 = vadd.f32 %v3825, %v4129
        %v4156 = vadd.f32 %v3826, %v4132
        %v4157 = vadd.f32 %v3827, %v4137
        %v4158 = vadd.f32 %v3828, %v4140
        %v4159 = vld [vmem:[%s7] sm:$0x1]
        %v4161 = vlaneseq
        %v4162 = vshrl.u32 %v4161, 7
        %v4163 = vsub.s32 0, %v4162
        %v4164 = vrot.slane %v4159, %v4163
        %v4166 = vadd.f32 %v4143, %v4164
        %v4167 = vadd.f32 %v4144, %v4164
        %v4168 = vadd.f32 %v4145, %v4164
        %v4169 = vadd.f32 %v4146, %v4164
        %v4170 = vadd.f32 %v4147, %v4164
        %v4171 = vadd.f32 %v4148, %v4164
        %v4172 = vadd.f32 %v4149, %v4164
        %v4173 = vadd.f32 %v4150, %v4164
        %v4174 = vadd.f32 %v4151, %v4164
        %v4175 = vadd.f32 %v4152, %v4164
        %v4176 = vadd.f32 %v4153, %v4164
        %v4177 = vadd.f32 %v4154, %v4164
        %v4178 = vadd.f32 %v4155, %v4164
        %v4179 = vadd.f32 %v4156, %v4164
        %v4180 = vadd.f32 %v4157, %v4164
        %v4181 = vadd.f32 %v4158, %v4164
        %vm4182 = vcmp.gt.f32.partialorder %v4166, 0.0
        %vm4183 = vcmp.gt.f32.partialorder %v4167, 0.0
        %vm4184 = vcmp.gt.f32.partialorder %v4168, 0.0
        %vm4185 = vcmp.gt.f32.partialorder %v4169, 0.0
        %vm4186 = vcmp.gt.f32.partialorder %v4170, 0.0
        %vm4187 = vcmp.gt.f32.partialorder %v4171, 0.0
        %vm4188 = vcmp.gt.f32.partialorder %v4172, 0.0
        %vm4189 = vcmp.gt.f32.partialorder %v4173, 0.0
        %vm4190 = vcmp.gt.f32.partialorder %v4174, 0.0
        %vm4191 = vcmp.gt.f32.partialorder %v4175, 0.0
        %vm4192 = vcmp.gt.f32.partialorder %v4176, 0.0
        %vm4193 = vcmp.gt.f32.partialorder %v4177, 0.0
        %vm4194 = vcmp.gt.f32.partialorder %v4178, 0.0
        %vm4195 = vcmp.gt.f32.partialorder %v4179, 0.0
        %vm4196 = vcmp.gt.f32.partialorder %v4180, 0.0
        %vm4197 = vcmp.gt.f32.partialorder %v4181, 0.0
        %v4198 = vmul.f32 %v4166, 0.1
        %v4199 = vmul.f32 %v4167, 0.1
        %v4200 = vmul.f32 %v4168, 0.1
        %v4201 = vmul.f32 %v4169, 0.1
        %v4202 = vmul.f32 %v4170, 0.1
        %v4203 = vmul.f32 %v4171, 0.1
        %v4204 = vmul.f32 %v4172, 0.1
        %v4205 = vmul.f32 %v4173, 0.1
        %v4206 = vmul.f32 %v4174, 0.1
        %v4207 = vmul.f32 %v4175, 0.1
        %v4208 = vmul.f32 %v4176, 0.1
        %v4209 = vmul.f32 %v4177, 0.1
        %v4210 = vmul.f32 %v4178, 0.1
        %v4211 = vmul.f32 %v4179, 0.1
        %v4212 = vmul.f32 %v4180, 0.1
        %v4213 = vmul.f32 %v4181, 0.1
        %v4214 = vsel %vm4182, %v4166, %v4198
        %v4215 = vsel %vm4183, %v4167, %v4199
        %v4216 = vsel %vm4184, %v4168, %v4200
        %v4217 = vsel %vm4185, %v4169, %v4201
        %v4218 = vsel %vm4186, %v4170, %v4202
        %v4219 = vsel %vm4187, %v4171, %v4203
        %v4220 = vsel %vm4188, %v4172, %v4204
        %v4221 = vsel %vm4189, %v4173, %v4205
        %v4222 = vsel %vm4190, %v4174, %v4206
        %v4223 = vsel %vm4191, %v4175, %v4207
        %v4224 = vsel %vm4192, %v4176, %v4208
        %v4225 = vsel %vm4193, %v4177, %v4209
        %v4226 = vsel %vm4194, %v4178, %v4210
        %v4227 = vsel %vm4195, %v4179, %v4211
        %v4228 = vsel %vm4196, %v4180, %v4212
        %v4229 = vsel %vm4197, %v4181, %v4213
        %v4230 = vadd.f32 %v4214, %v712
        %v4231 = vadd.f32 %v4215, %v716
        %v4232 = vadd.f32 %v4216, %v722
        %v4233 = vadd.f32 %v4217, %v726
        %v4234 = vadd.f32 %v4218, %v732
        %v4235 = vadd.f32 %v4219, %v736
        %v4236 = vadd.f32 %v4220, %v742
        %v4237 = vadd.f32 %v4221, %v746
        %v4238 = vadd.f32 %v4222, %v752
        %v4239 = vadd.f32 %v4223, %v756
        %v4240 = vadd.f32 %v4224, %v762
        %v4241 = vadd.f32 %v4225, %v766
        %v4242 = vadd.f32 %v4226, %v772
        %v4243 = vadd.f32 %v4227, %v776
        %v4244 = vadd.f32 %v4228, %v782
        %v4245 = vadd.f32 %v4229, %v786
        %4246 = vst [vmem:[%s431] sm:$0xff] %v4230
        %4247 = vst [vmem:[%s431 + $0x8] sm:$0xff] %v4231
        %4248 = vst [vmem:[%s431 + $0x10] sm:$0xff] %v4232
        %4249 = vst [vmem:[%s431 + $0x18] sm:$0xff] %v4233
        %4250 = vst [vmem:[%s431 + $0x20] sm:$0xff] %v4234
        %4251 = vst [vmem:[%s431 + $0x28] sm:$0xff] %v4235
        %4252 = vst [vmem:[%s431 + $0x30] sm:$0xff] %v4236
        %4253 = vst [vmem:[%s431 + $0x38] sm:$0xff] %v4237
        %4254 = vst [vmem:[%s431 + $0x40] sm:$0xff] %v4238
        %4255 = vst [vmem:[%s431 + $0x48] sm:$0xff] %v4239
        %4256 = vst [vmem:[%s431 + $0x50] sm:$0xff] %v4240
        %4257 = vst [vmem:[%s431 + $0x58] sm:$0xff] %v4241
        %4258 = vst [vmem:[%s431 + $0x60] sm:$0xff] %v4242
        %4259 = vst [vmem:[%s431 + $0x68] sm:$0xff] %v4243
        %4260 = vst [vmem:[%s431 + $0x70] sm:$0xff] %v4244
        %4261 = vst [vmem:[%s431 + $0x78] sm:$0xff] %v4245
        %s4262 = sand.u32 %s235, 1
        %s4263 = scalar_lea.sflag [#allocation5], %s4262
        %s4264 = sand.u32 %s235, 1
        %s4265 = smul.addr %s4264, 128
        %s4266 = scalar_lea.vmem [#allocation12], %s4265
        // Predicated region
        $region73: #{tpu_custom_call.1} parent=51 // pred_check
          %p4267 = pneg %p245
        $region74: #{tpu_custom_call.1} parent=51 // pred_check_branch
          %4269 = sbr.rel (%p4267) target = $region76
        $region75: #{tpu_custom_call.1} parent=51 // pred_region
          %s4270 = smul.u32 8, %s34
          %s4272 = ssub.s32 2048, 2048
          %4273 = vsyncadd %s4263, %s4272
          %s4274 = smul.addr %s4270, 2
          %s4275 = smul.addr %s33, 32
          %s4276 = sadd.s32 %s4274, %s4275
          %s4277 = smul.addr %s4276, 128
          %s4278 = scalar_lea.hbm %s8, %s4277
          %s4279 = sshll.u32 %s4266, 4
          %s4280 = int_to_ptr.vmem [resolvable:$true] %s4279
          %4285 = dma.vmem_to_hbm [thread:$0]  %s4280, 2048, %s4278, %s4263, 128, 128, 8
        $region76: #{tpu_custom_call.1} parent=51 // pred_fallthru
          _
      $region52: #{tpu_custom_call.1} parent=5 // pred_fallthru
        _
      %p4286 = scmp.le.s32.totalorder 2, %s24
      // Predicated region
      $region77: #{tpu_custom_call.1} parent=5 // pred_check
        %p4287 = pneg %p4286
      $region78: #{tpu_custom_call.1} parent=5 // pred_check_branch
        %4289 = sbr.rel (%p4287) target = $region80
      $region79: #{tpu_custom_call.1} parent=5 // pred_region
        %s4290 = ssub.s32 %s24, 2
        // Predicated region
        $region81: #{tpu_custom_call.1} parent=79 // pred_check
          %p4291 = pneg %p251
        $region82: #{tpu_custom_call.1} parent=79 // pred_check_branch
          %4293 = sbr.rel (%p4291) target = $region84
        $region83: #{tpu_custom_call.1} parent=79 // pred_region
          %s4294 = sand.u32 %s236, 1
          %s4295 = scalar_lea.sflag [#allocation5], %s4294
          %s4296 = sand.u32 %s236, 1
          %s4297 = smul.addr %s4296, 128
          %s4298 = scalar_lea.vmem [#allocation12], %s4297
          %4299 = dma.done %s4295, 2048
        $region84: #{tpu_custom_call.1} parent=79 // pred_fallthru
          _
      $region80: #{tpu_custom_call.1} parent=5 // pred_fallthru
        _
    $region6: #{tpu_custom_call.1} parent=1 // loop_footer
      %s28 = sadd.s32 1, %s24
    $region7: #{tpu_custom_call.1} parent=1 // loop_footer_branch
      %23 = sbr.rel target = $region3
    $region8: #{tpu_custom_call.1} parent=1 // loop_exit
      _
    %4300 = vsyncpa [#allocation4], 1
    %s4301 = scalar_lea.sflag [#allocation4], 1
    %4302 = vsyncpa %s4301, 1
    %4303 = vsyncpa [#allocation7], 1
    %s4304 = scalar_lea.sflag [#allocation7], 1
    %4305 = vsyncpa %s4304, 1
    %4306 = vsyncpa [#allocation10], 1
    %4307 = vsyncpa [#allocation5], 1
    %s4308 = scalar_lea.sflag [#allocation5], 1
    %4309 = vsyncpa %s4308, 1

</llo_original>
